<compile_context>
chip_gen: v7x
topology: tpu7x:2x2x1
jax: 0.10.0
libtpu: 0.0.40
codegen_flags: <defaults>
</compile_context>

<pallas_src>
import functools

import jax
import jax.numpy as jnp
import numpy as np
from jax.experimental import pallas as pl
from jax.experimental.pallas import tpu as pltpu


def _resblock_kernel(x_ref, w1_ref, b1_ref, w2_ref, b2_ref, out_ref,
                     xs_ref, ys_ref, *, res_scale):
    """One batch block:  out = conv2(relu(conv1(x))) * res_scale + x.

    x_ref  : (NB, H, WC)       f32 input rows (un-padded)                (VMEM)
    w*_ref : (KH, WC, WC)      block-Toeplitz conv weights (bf16/f32)    (VMEM)
    b*_ref : (1, WC)           f32 biases tiled along W                  (VMEM)
    out_ref: (NB, H, WC)       f32                                       (VMEM)
    xs_ref : (NB*(H+2p), WC)   MXU-dtype scratch: stacked, H-haloed, cast input
    ys_ref : (NB*(H+2p), WC)   MXU-dtype scratch: stacked, H-haloed ReLU output
    """
    NB, H, WC = x_ref.shape
    KH = w1_ref.shape[0]
    p = KH // 2
    slot = H + 2 * p              # rows per sample incl. its share of the halo
    rtot = NB * slot              # scratch rows
    ht = rtot - 2 * p             # rows fed to / produced by each conv
    mxu_dtype = xs_ref.dtype

    def zero_halo_rows(ref):
        # Top/bottom image padding plus the 2p-row zero separators between the
        # stacked samples.  Rewritten every grid step (cheap: 2p*NB rows of WC)
        # so the kernel stays correct when the "parallel" axis is core-split.
        z_edge = jnp.zeros((p, WC), ref.dtype)
        ref[0:p, :] = z_edge
        ref[rtot - p:rtot, :] = z_edge
        if NB > 1:
            z_sep = jnp.zeros((2 * p, WC), ref.dtype)
            for n in range(NB - 1):
                s = p + n * slot + H
                ref[s:s + 2 * p, :] = z_sep

    # ---- stage input: stacked + H-haloed + cast to MXU dtype exactly once ----
    zero_halo_rows(xs_ref)
    for n in range(NB):
        r = p + n * slot
        xs_ref[r:r + H, :] = x_ref[n, :, :].astype(mxu_dtype)

    # ---- conv1: KH deep-K matmuls over the whole stacked block ---------------
    # The W-direction "same" padding lives inside the zero blocks of the
    # Toeplitz weights; the accumulator is seeded by the first tap (no zeros
    # init).  The 2p*(NB-1) separator rows are wasted MXU rows (~11% at H=16),
    # the price of a single contiguous big-M dot per tap.
    acc = jnp.dot(xs_ref[0:ht, :], w1_ref[0], preferred_element_type=jnp.float32)
    for kh in range(1, KH):
        acc = acc + jnp.dot(xs_ref[kh:kh + ht, :], w1_ref[kh],
                            preferred_element_type=jnp.float32)
    # TODO(synk): on v7x, fuse the KH taps into one deep-K dot (lane-concat the
    # shifted slices, K = KH*WC) so the accumulation stays in the MXU MRB.

    # ---- bias + ReLU, restage into the second haloed scratch (real rows only)
    b1 = b1_ref[...]
    zero_halo_rows(ys_ref)
    for n in range(NB):
        r = n * slot
        y_n = jnp.maximum(acc[r:r + H, :] + b1, 0.0)           # f32 VPU math
        ys_ref[p + r:p + r + H, :] = y_n.astype(mxu_dtype)     # lane-dense store

    # ---- conv2 ----------------------------------------------------------------
    acc2 = jnp.dot(ys_ref[0:ht, :], w2_ref[0], preferred_element_type=jnp.float32)
    for kh in range(1, KH):
        acc2 = acc2 + jnp.dot(ys_ref[kh:kh + ht, :], w2_ref[kh],
                              preferred_element_type=jnp.float32)

    # ---- bias, static res_scale, residual add; lane-dense per-sample stores ---
    b2 = b2_ref[...]
    for n in range(NB):
        r = n * slot
        res_n = acc2[r:r + H, :] + b2
        if res_scale != 1.0:                                   # static skip
            res_n = res_n * res_scale
        out_ref[n, :, :] = res_n + x_ref[n, :, :]


def _toeplitz_conv_weights(w_oihw, width):
    """Expand OIHW conv weights into per-H-tap block-Toeplitz matrices.

    Returns T of shape (KH, W*Cin, W*Cout) so that for a flattened activation
    row x of shape (W*Cin,),  x @ T[kh]  equals the "same"-padded 1-D conv
    along W with taps w[:, :, kh, :] (the W zero padding is encoded by the
    zero blocks of T).
    """
    Cout, Cin, KH, KW = w_oihw.shape
    p = KW // 2
    w_hwio = jnp.transpose(w_oihw, (2, 3, 1, 0))              # (KH, KW, Cin, Cout)
    wi = jnp.arange(width)[:, None]                           # input column
    wo = jnp.arange(width)[None, :]                           # output column
    kw = wi - wo + p                                          # (W, W) tap index
    valid = (kw >= 0) & (kw < KW)
    blocks = w_hwio[:, jnp.clip(kw, 0, KW - 1)]               # (KH, W, W, Cin, Cout)
    blocks = jnp.where(valid[None, :, :, None, None], blocks, 0.0)
    T = jnp.transpose(blocks, (0, 1, 3, 2, 4))                # (KH, W, Cin, W, Cout)
    return T.reshape(KH, width * Cin, width * Cout)


def _pick_batch_block(n, h, target_rows=128):
    """Largest divisor of the batch that raises the stacked MXU M-dim to ~128.

    More samples per grid step amortize each WC-deep RHS push over more LHS
    rows; it trades away grid/pipeline depth, which only matters once the
    batch (and therefore the number of grid steps) is large anyway.
    """
    cap = max(1, -(-target_rows // h))          # ceil(target / H)
    nb = 1
    for d in range(1, min(n, cap) + 1):
        if n % d == 0:
            nb = d
    return nb


def resblock_forward_nhwc(x_nhwc, w1_oihw, b1, w2_oihw, b2, res_scale=1.0,
                          mxu_dtype=jnp.bfloat16, batch_block=None):
    """ResBlock forward on NHWC input (preferred entry for chained blocks)."""
    N, H, W, C = x_nhwc.shape
    KH = int(w1_oihw.shape[2])
    p = KH // 2
    WC = W * C
    # res_scale must be a static Python number; float() rejects traced values
    # loudly instead of silently concretizing them.
    res_scale = float(res_scale)

    NB = int(batch_block) if batch_block is not None else _pick_batch_block(N, H)
    if N % NB != 0:
        raise ValueError(f"batch_block={NB} must divide batch size {N}")
    G = N // NB
    slot = H + 2 * p
    rtot = NB * slot
    ht = rtot - 2 * p

    # Lane-dense (N, H, W*C) rows.  The reshape is free; the H zero-padding is
    # done inside the kernel, so there is no jnp.pad HBM round trip here.
    x_rows = x_nhwc.reshape(N, H, WC).astype(jnp.float32)

    # Block-Toeplitz weights: VMEM-resident across the whole grid.  Footprint
    # is 2*KH*(W*C)^2*itemsize per buffer; with bf16 this caps W*C at roughly
    # ~1.5-1.7K on v7x's 64 MiB/TC (128 MiB on v5e/v6e).
    # TODO(synk): for larger images, tile W with a halo (W-tiled Toeplitz with
    # Wtile*C ~= 256-512) and tile H with a halo instead of whole-image blocks.
    w1t = _toeplitz_conv_weights(w1_oihw.astype(jnp.float32), W).astype(mxu_dtype)
    w2t = _toeplitz_conv_weights(w2_oihw.astype(jnp.float32), W).astype(mxu_dtype)
    b1r = jnp.tile(b1.astype(jnp.float32), W).reshape(1, WC)
    b2r = jnp.tile(b2.astype(jnp.float32), W).reshape(1, WC)

    kernel = functools.partial(_resblock_kernel, res_scale=res_scale)
    wbytes = jnp.dtype(mxu_dtype).itemsize
    cost = pl.CostEstimate(
        flops=int(4 * KH * G * ht * WC * WC),          # 2 convs, 2 flops/MAC
        transcendentals=0,
        bytes_accessed=int(2 * N * H * WC * 4          # activations in + out
                           + 2 * KH * WC * WC * wbytes  # both Toeplitz weights
                           + 2 * WC * 4),               # biases
    )

    def run(single_buffer_weights):
        def w_spec():
            if single_buffer_weights:
                # Constant block index: single-buffer to halve resident VMEM.
                return pl.BlockSpec((KH, WC, WC), lambda g: (0, 0, 0),
                                    pipeline_mode=pl.Buffered(1))
            return pl.BlockSpec((KH, WC, WC), lambda g: (0, 0, 0))

        return pl.pallas_call(
            kernel,
            out_shape=jax.ShapeDtypeStruct((N, H, WC), jnp.float32),
            grid=(G,),
            in_specs=[
                pl.BlockSpec((NB, H, WC), lambda g: (g, 0, 0)),   # x rows
                w_spec(),                                          # w1 (resident)
                pl.BlockSpec((1, WC), lambda g: (0, 0)),           # b1
                w_spec(),                                          # w2 (resident)
                pl.BlockSpec((1, WC), lambda g: (0, 0)),           # b2
            ],
            out_specs=pl.BlockSpec((NB, H, WC), lambda g: (g, 0, 0)),
            scratch_shapes=[pltpu.VMEM((rtot, WC), mxu_dtype),     # staged x
                            pltpu.VMEM((rtot, WC), mxu_dtype)],    # staged ReLU
            compiler_params=pltpu.CompilerParams(
                dimension_semantics=("parallel",)),
            cost_estimate=cost,
        )(x_rows, w1t, b1r, w2t, b2r)

    if hasattr(pl, "Buffered"):
        try:
            out_rows = run(True)
        except Exception:  # JAX without BlockSpec pipeline_mode / 1-buffering
            out_rows = run(False)
    else:
        out_rows = run(False)

    return out_rows.reshape(N, H, W, C)


def resblock_forward(x_nchw, w1_oihw, b1, w2_oihw, b2, res_scale=1.0,
                     mxu_dtype=jnp.bfloat16, batch_block=None):
    """PyTorch-convention (NCHW / OIHW) adapter around the NHWC kernel entry.

    Chained ResBlocks should call resblock_forward_nhwc directly and keep the
    activations in NHWC so these two transposes happen only at the ends.
    TODO(synk): fold the NCHW<->NHWC transpose into the kernel via a strided /
    gathered DMA layout for fully transpose-free NCHW operation.
    """
    x_nhwc = jnp.transpose(x_nchw, (0, 2, 3, 1))
    out = resblock_forward_nhwc(x_nhwc, w1_oihw, b1, w2_oihw, b2,
                                res_scale, mxu_dtype, batch_block)
    return jnp.transpose(out, (0, 3, 1, 2))


def resblock_reference(x, w1, b1, w2, b2, res_scale=1.0):
    """Pure-JAX reference (NCHW/OIHW, identical to the PyTorch forward)."""
    dn = ('NCHW', 'OIHW', 'NCHW')
    y = jax.lax.conv_general_dilated(x, w1, (1, 1), 'SAME', dimension_numbers=dn)
    y = jnp.maximum(y + b1[None, :, None, None], 0.0)
    z = jax.lax.conv_general_dilated(y, w2, (1, 1), 'SAME', dimension_numbers=dn)
    z = z + b2[None, :, None, None]
    return z * res_scale + x


if __name__ == "__main__":
    # Small shapes consistent with the module: batch=2, n_feats=16, 16x16 spatial.
    N, C, H, W = 2, 16, 16, 16
    K = 3                      # kernel_size

    key = jax.random.PRNGKey(0)
    kx, kw1, kb1, kw2, kb2 = jax.random.split(key, 5)
    x = jax.random.normal(kx, (N, C, H, W), dtype=jnp.float32)
    w1 = jax.random.normal(kw1, (C, C, K, K), dtype=jnp.float32) * 0.1   # OIHW
    b1 = jax.random.normal(kb1, (C,), dtype=jnp.float32) * 0.1
    w2 = jax.random.normal(kw2, (C, C, K, K), dtype=jnp.float32) * 0.1
    b2 = jax.random.normal(kb2, (C,), dtype=jnp.float32) * 0.1

    # Exact-math path: f32 MXU operands, res_scale = 1 (PyTorch defaults).
    out_f32 = jax.block_until_ready(
        resblock_forward(x, w1, b1, w2, b2, 1.0, mxu_dtype=jnp.float32))
    ref = jax.block_until_ready(resblock_reference(x, w1, b1, w2, b2, 1.0))
    np.testing.assert_allclose(np.asarray(out_f32), np.asarray(ref),
                               rtol=1e-4, atol=1e-4)

    # Default fast path: bf16 MXU weights + activations (f32 accumulate /
    # elementwise), res_scale = 0.1.  Looser tolerance: both operands are
    # bf16-quantized, not just the weights.
    out_bf = jax.block_until_ready(resblock_forward(x, w1, b1, w2, b2, 0.1))
    ref_bf = jax.block_until_ready(resblock_reference(x, w1, b1, w2, b2, 0.1))
    np.testing.assert_allclose(np.asarray(out_bf), np.asarray(ref_bf),
                               rtol=5e-2, atol=5e-2)

    print("KERNEL_OK")
</pallas_src>

<mosaic_0001>
module attributes {stable_mosaic.version = 11 : i64} {
  func.func @_resblock_kernel(%arg0: i32, %arg1: memref<2x16x256xf32, #tpu.memory_space<vmem>>, %arg2: memref<3x256x256xf32, #tpu.memory_space<vmem>>, %arg3: memref<1x256xf32, #tpu.memory_space<vmem>>, %arg4: memref<3x256x256xf32, #tpu.memory_space<vmem>>, %arg5: memref<1x256xf32, #tpu.memory_space<vmem>>, %arg6: memref<2x16x256xf32, #tpu.memory_space<vmem>>, %arg7: memref<36x256xf32, #tpu.memory_space<vmem>>, %arg8: memref<36x256xf32, #tpu.memory_space<vmem>>) attributes {dimension_semantics = [#tpu.dimension_semantics<parallel>], iteration_bounds = array<i64: 1>, scalar_prefetch = 0 : i64, scratch_operands = 2 : i64, tpu.core_type = #tpu.core_type<tc>, window_params = [{transform_indices = @transform_0, window_bounds = array<i64: 2, 16, 256>}, {pipeline_mode = #tpu.pipeline_mode<synchronous>, transform_indices = @transform_1, window_bounds = array<i64: 3, 256, 256>}, {pipeline_mode = #tpu.pipeline_mode<synchronous>, transform_indices = @transform_2, window_bounds = array<i64: 1, 256>}, {pipeline_mode = #tpu.pipeline_mode<synchronous>, transform_indices = @transform_3, window_bounds = array<i64: 3, 256, 256>}, {pipeline_mode = #tpu.pipeline_mode<synchronous>, transform_indices = @transform_4, window_bounds = array<i64: 1, 256>}, {transform_indices = @transform_5, window_bounds = array<i64: 2, 16, 256>}]} {
    %cst = arith.constant 0.000000e+00 : f32
    %0 = vector.broadcast %cst : f32 to vector<1x256xf32>
    %c0 = arith.constant 0 : index
    %c0_0 = arith.constant 0 : index
    %1 = vector.load %arg7[%c0, %c0_0] : memref<36x256xf32, #tpu.memory_space<vmem>>, vector<1x256xf32>
    tpu.vector_store %arg7[%c0, %c0_0], %0 {strides = array<i32>} : memref<36x256xf32, #tpu.memory_space<vmem>>, vector<1x256xf32>,
    %c35 = arith.constant 35 : index
    %c0_1 = arith.constant 0 : index
    %2 = vector.load %arg7[%c35, %c0_1] : memref<36x256xf32, #tpu.memory_space<vmem>>, vector<1x256xf32>
    tpu.vector_store %arg7[%c35, %c0_1], %0 {strides = array<i32>} : memref<36x256xf32, #tpu.memory_space<vmem>>, vector<1x256xf32>,
    %cst_2 = arith.constant 0.000000e+00 : f32
    %3 = vector.broadcast %cst_2 : f32 to vector<2x256xf32>
    %c17 = arith.constant 17 : index
    %c0_3 = arith.constant 0 : index
    %4 = vector.load %arg7[%c17, %c0_3] : memref<36x256xf32, #tpu.memory_space<vmem>>, vector<2x256xf32>
    tpu.vector_store %arg7[%c17, %c0_3], %3 {strides = array<i32>} : memref<36x256xf32, #tpu.memory_space<vmem>>, vector<2x256xf32>,
    %c0_4 = arith.constant 0 : index
    %c0_5 = arith.constant 0 : index
    %c0_6 = arith.constant 0 : index
    %5 = vector.load %arg1[%c0_4, %c0_5, %c0_6] : memref<2x16x256xf32, #tpu.memory_space<vmem>>, vector<1x16x256xf32>
    %6 = vector.shape_cast %5 : vector<1x16x256xf32> to vector<16x256xf32>
    %c1 = arith.constant 1 : index
    %c0_7 = arith.constant 0 : index
    %7 = vector.load %arg7[%c1, %c0_7] : memref<36x256xf32, #tpu.memory_space<vmem>>, vector<16x256xf32>
    tpu.vector_store %arg7[%c1, %c0_7], %6 {strides = array<i32>} : memref<36x256xf32, #tpu.memory_space<vmem>>, vector<16x256xf32>,
    %c1_8 = arith.constant 1 : index
    %c0_9 = arith.constant 0 : index
    %c0_10 = arith.constant 0 : index
    %8 = vector.load %arg1[%c1_8, %c0_9, %c0_10] : memref<2x16x256xf32, #tpu.memory_space<vmem>>, vector<1x16x256xf32>
    %9 = vector.shape_cast %8 : vector<1x16x256xf32> to vector<16x256xf32>
    %c19 = arith.constant 19 : index
    %c0_11 = arith.constant 0 : index
    %10 = vector.load %arg7[%c19, %c0_11] : memref<36x256xf32, #tpu.memory_space<vmem>>, vector<16x256xf32>
    tpu.vector_store %arg7[%c19, %c0_11], %9 {strides = array<i32>} : memref<36x256xf32, #tpu.memory_space<vmem>>, vector<16x256xf32>,
    %c0_12 = arith.constant 0 : index
    %c0_13 = arith.constant 0 : index
    %11 = vector.load %arg7[%c0_12, %c0_13] : memref<36x256xf32, #tpu.memory_space<vmem>>, vector<34x256xf32>
    %c0_14 = arith.constant 0 : index
    %c0_15 = arith.constant 0 : index
    %c0_16 = arith.constant 0 : index
    %12 = vector.load %arg2[%c0_14, %c0_15, %c0_16] : memref<3x256x256xf32, #tpu.memory_space<vmem>>, vector<1x256x256xf32>
    %13 = vector.shape_cast %12 : vector<1x256x256xf32> to vector<256x256xf32>
    %cst_17 = arith.constant dense<0.000000e+00> : vector<34x256xf32>
    %14 = tpu.matmul %11, %13, %cst_17 {dimension_numbers = #tpu.dot_dimension_numbers<[1], [0], [0], [1], [0, 0, 1, 1], [], []>} : vector<34x256xf32>, vector<256x256xf32>, vector<34x256xf32> -> vector<34x256xf32>
    %c1_18 = arith.constant 1 : index
    %c0_19 = arith.constant 0 : index
    %15 = vector.load %arg7[%c1_18, %c0_19] : memref<36x256xf32, #tpu.memory_space<vmem>>, vector<34x256xf32>
    %c1_20 = arith.constant 1 : index
    %c0_21 = arith.constant 0 : index
    %c0_22 = arith.constant 0 : index
    %16 = vector.load %arg2[%c1_20, %c0_21, %c0_22] : memref<3x256x256xf32, #tpu.memory_space<vmem>>, vector<1x256x256xf32>
    %17 = vector.shape_cast %16 : vector<1x256x256xf32> to vector<256x256xf32>
    %cst_23 = arith.constant dense<0.000000e+00> : vector<34x256xf32>
    %18 = tpu.matmul %15, %17, %cst_23 {dimension_numbers = #tpu.dot_dimension_numbers<[1], [0], [0], [1], [0, 0, 1, 1], [], []>} : vector<34x256xf32>, vector<256x256xf32>, vector<34x256xf32> -> vector<34x256xf32>
    %19 = arith.addf %14, %18 : vector<34x256xf32>
    %c2 = arith.constant 2 : index
    %c0_24 = arith.constant 0 : index
    %20 = vector.load %arg7[%c2, %c0_24] : memref<36x256xf32, #tpu.memory_space<vmem>>, vector<34x256xf32>
    %c2_25 = arith.constant 2 : index
    %c0_26 = arith.constant 0 : index
    %c0_27 = arith.constant 0 : index
    %21 = vector.load %arg2[%c2_25, %c0_26, %c0_27] : memref<3x256x256xf32, #tpu.memory_space<vmem>>, vector<1x256x256xf32>
    %22 = vector.shape_cast %21 : vector<1x256x256xf32> to vector<256x256xf32>
    %cst_28 = arith.constant dense<0.000000e+00> : vector<34x256xf32>
    %23 = tpu.matmul %20, %22, %cst_28 {dimension_numbers = #tpu.dot_dimension_numbers<[1], [0], [0], [1], [0, 0, 1, 1], [], []>} : vector<34x256xf32>, vector<256x256xf32>, vector<34x256xf32> -> vector<34x256xf32>
    %24 = arith.addf %19, %23 : vector<34x256xf32>
    %c0_29 = arith.constant 0 : index
    %c0_30 = arith.constant 0 : index
    %25 = vector.load %arg3[%c0_29, %c0_30] : memref<1x256xf32, #tpu.memory_space<vmem>>, vector<1x256xf32>
    %cst_31 = arith.constant 0.000000e+00 : f32
    %26 = vector.broadcast %cst_31 : f32 to vector<1x256xf32>
    %c0_32 = arith.constant 0 : index
    %c0_33 = arith.constant 0 : index
    %27 = vector.load %arg8[%c0_32, %c0_33] : memref<36x256xf32, #tpu.memory_space<vmem>>, vector<1x256xf32>
    tpu.vector_store %arg8[%c0_32, %c0_33], %26 {strides = array<i32>} : memref<36x256xf32, #tpu.memory_space<vmem>>, vector<1x256xf32>,
    %c35_34 = arith.constant 35 : index
    %c0_35 = arith.constant 0 : index
    %28 = vector.load %arg8[%c35_34, %c0_35] : memref<36x256xf32, #tpu.memory_space<vmem>>, vector<1x256xf32>
    tpu.vector_store %arg8[%c35_34, %c0_35], %26 {strides = array<i32>} : memref<36x256xf32, #tpu.memory_space<vmem>>, vector<1x256xf32>,
    %cst_36 = arith.constant 0.000000e+00 : f32
    %29 = vector.broadcast %cst_36 : f32 to vector<2x256xf32>
    %c17_37 = arith.constant 17 : index
    %c0_38 = arith.constant 0 : index
    %30 = vector.load %arg8[%c17_37, %c0_38] : memref<36x256xf32, #tpu.memory_space<vmem>>, vector<2x256xf32>
    tpu.vector_store %arg8[%c17_37, %c0_38], %29 {strides = array<i32>} : memref<36x256xf32, #tpu.memory_space<vmem>>, vector<2x256xf32>,
    %31 = vector.extract_strided_slice %24 {offsets = [0, 0], sizes = [16, 256], strides = [1, 1]} : vector<34x256xf32> to vector<16x256xf32>
    %32 = vector.broadcast %25 : vector<1x256xf32> to vector<16x256xf32>
    %33 = arith.addf %31, %32 : vector<16x256xf32>
    %cst_39 = arith.constant 0.000000e+00 : f32
    %34 = vector.broadcast %cst_39 : f32 to vector<16x256xf32>
    %35 = arith.maximumf %33, %34 : vector<16x256xf32>
    %c1_40 = arith.constant 1 : index
    %c0_41 = arith.constant 0 : index
    %36 = vector.load %arg8[%c1_40, %c0_41] : memref<36x256xf32, #tpu.memory_space<vmem>>, vector<16x256xf32>
    tpu.vector_store %arg8[%c1_40, %c0_41], %35 {strides = array<i32>} : memref<36x256xf32, #tpu.memory_space<vmem>>, vector<16x256xf32>,
    %37 = vector.extract_strided_slice %24 {offsets = [18, 0], sizes = [16, 256], strides = [1, 1]} : vector<34x256xf32> to vector<16x256xf32>
    %38 = vector.broadcast %25 : vector<1x256xf32> to vector<16x256xf32>
    %39 = arith.addf %37, %38 : vector<16x256xf32>
    %cst_42 = arith.constant 0.000000e+00 : f32
    %40 = vector.broadcast %cst_42 : f32 to vector<16x256xf32>
    %41 = arith.maximumf %39, %40 : vector<16x256xf32>
    %c19_43 = arith.constant 19 : index
    %c0_44 = arith.constant 0 : index
    %42 = vector.load %arg8[%c19_43, %c0_44] : memref<36x256xf32, #tpu.memory_space<vmem>>, vector<16x256xf32>
    tpu.vector_store %arg8[%c19_43, %c0_44], %41 {strides = array<i32>} : memref<36x256xf32, #tpu.memory_space<vmem>>, vector<16x256xf32>,
    %c0_45 = arith.constant 0 : index
    %c0_46 = arith.constant 0 : index
    %43 = vector.load %arg8[%c0_45, %c0_46] : memref<36x256xf32, #tpu.memory_space<vmem>>, vector<34x256xf32>
    %c0_47 = arith.constant 0 : index
    %c0_48 = arith.constant 0 : index
    %c0_49 = arith.constant 0 : index
    %44 = vector.load %arg4[%c0_47, %c0_48, %c0_49] : memref<3x256x256xf32, #tpu.memory_space<vmem>>, vector<1x256x256xf32>
    %45 = vector.shape_cast %44 : vector<1x256x256xf32> to vector<256x256xf32>
    %cst_50 = arith.constant dense<0.000000e+00> : vector<34x256xf32>
    %46 = tpu.matmul %43, %45, %cst_50 {dimension_numbers = #tpu.dot_dimension_numbers<[1], [0], [0], [1], [0, 0, 1, 1], [], []>} : vector<34x256xf32>, vector<256x256xf32>, vector<34x256xf32> -> vector<34x256xf32>
    %c1_51 = arith.constant 1 : index
    %c0_52 = arith.constant 0 : index
    %47 = vector.load %arg8[%c1_51, %c0_52] : memref<36x256xf32, #tpu.memory_space<vmem>>, vector<34x256xf32>
    %c1_53 = arith.constant 1 : index
    %c0_54 = arith.constant 0 : index
    %c0_55 = arith.constant 0 : index
    %48 = vector.load %arg4[%c1_53, %c0_54, %c0_55] : memref<3x256x256xf32, #tpu.memory_space<vmem>>, vector<1x256x256xf32>
    %49 = vector.shape_cast %48 : vector<1x256x256xf32> to vector<256x256xf32>
    %cst_56 = arith.constant dense<0.000000e+00> : vector<34x256xf32>
    %50 = tpu.matmul %47, %49, %cst_56 {dimension_numbers = #tpu.dot_dimension_numbers<[1], [0], [0], [1], [0, 0, 1, 1], [], []>} : vector<34x256xf32>, vector<256x256xf32>, vector<34x256xf32> -> vector<34x256xf32>
    %51 = arith.addf %46, %50 : vector<34x256xf32>
    %c2_57 = arith.constant 2 : index
    %c0_58 = arith.constant 0 : index
    %52 = vector.load %arg8[%c2_57, %c0_58] : memref<36x256xf32, #tpu.memory_space<vmem>>, vector<34x256xf32>
    %c2_59 = arith.constant 2 : index
    %c0_60 = arith.constant 0 : index
    %c0_61 = arith.constant 0 : index
    %53 = vector.load %arg4[%c2_59, %c0_60, %c0_61] : memref<3x256x256xf32, #tpu.memory_space<vmem>>, vector<1x256x256xf32>
    %54 = vector.shape_cast %53 : vector<1x256x256xf32> to vector<256x256xf32>
    %cst_62 = arith.constant dense<0.000000e+00> : vector<34x256xf32>
    %55 = tpu.matmul %52, %54, %cst_62 {dimension_numbers = #tpu.dot_dimension_numbers<[1], [0], [0], [1], [0, 0, 1, 1], [], []>} : vector<34x256xf32>, vector<256x256xf32>, vector<34x256xf32> -> vector<34x256xf32>
    %56 = arith.addf %51, %55 : vector<34x256xf32>
    %c0_63 = arith.constant 0 : index
    %c0_64 = arith.constant 0 : index
    %57 = vector.load %arg5[%c0_63, %c0_64] : memref<1x256xf32, #tpu.memory_space<vmem>>, vector<1x256xf32>
    %58 = vector.extract_strided_slice %56 {offsets = [0, 0], sizes = [16, 256], strides = [1, 1]} : vector<34x256xf32> to vector<16x256xf32>
    %59 = vector.broadcast %57 : vector<1x256xf32> to vector<16x256xf32>
    %60 = arith.addf %58, %59 : vector<16x256xf32>
    %c0_65 = arith.constant 0 : index
    %c0_66 = arith.constant 0 : index
    %c0_67 = arith.constant 0 : index
    %61 = vector.load %arg1[%c0_65, %c0_66, %c0_67] : memref<2x16x256xf32, #tpu.memory_space<vmem>>, vector<1x16x256xf32>
    %62 = vector.shape_cast %61 : vector<1x16x256xf32> to vector<16x256xf32>
    %63 = arith.addf %60, %62 : vector<16x256xf32>
    %c0_68 = arith.constant 0 : index
    %c0_69 = arith.constant 0 : index
    %c0_70 = arith.constant 0 : index
    %64 = vector.load %arg6[%c0_68, %c0_69, %c0_70] : memref<2x16x256xf32, #tpu.memory_space<vmem>>, vector<1x16x256xf32>
    %65 = vector.shape_cast %64 : vector<1x16x256xf32> to vector<16x256xf32>
    %66 = vector.shape_cast %63 : vector<16x256xf32> to vector<1x16x256xf32>
    tpu.vector_store %arg6[%c0_68, %c0_69, %c0_70], %66 {strides = array<i32>} : memref<2x16x256xf32, #tpu.memory_space<vmem>>, vector<1x16x256xf32>,
    %67 = vector.extract_strided_slice %56 {offsets = [18, 0], sizes = [16, 256], strides = [1, 1]} : vector<34x256xf32> to vector<16x256xf32>
    %68 = vector.broadcast %57 : vector<1x256xf32> to vector<16x256xf32>
    %69 = arith.addf %67, %68 : vector<16x256xf32>
    %c1_71 = arith.constant 1 : index
    %c0_72 = arith.constant 0 : index
    %c0_73 = arith.constant 0 : index
    %70 = vector.load %arg1[%c1_71, %c0_72, %c0_73] : memref<2x16x256xf32, #tpu.memory_space<vmem>>, vector<1x16x256xf32>
    %71 = vector.shape_cast %70 : vector<1x16x256xf32> to vector<16x256xf32>
    %72 = arith.addf %69, %71 : vector<16x256xf32>
    %c1_74 = arith.constant 1 : index
    %c0_75 = arith.constant 0 : index
    %c0_76 = arith.constant 0 : index
    %73 = vector.load %arg6[%c1_74, %c0_75, %c0_76] : memref<2x16x256xf32, #tpu.memory_space<vmem>>, vector<1x16x256xf32>
    %74 = vector.shape_cast %73 : vector<1x16x256xf32> to vector<16x256xf32>
    %75 = vector.shape_cast %72 : vector<16x256xf32> to vector<1x16x256xf32>
    tpu.vector_store %arg6[%c1_74, %c0_75, %c0_76], %75 {strides = array<i32>} : memref<2x16x256xf32, #tpu.memory_space<vmem>>, vector<1x16x256xf32>,
    return
  }
  func.func @transform_0(%arg0: i32) -> (i32, i32, i32) {
    %c0_i32 = arith.constant 0 : i32
    %c0_i32_0 = arith.constant 0 : i32
    %c0_i32_1 = arith.constant 0 : i32
    return %arg0, %c0_i32, %c0_i32_0 : i32, i32, i32
  }
  func.func @transform_1(%arg0: i32) -> (i32, i32, i32) {
    %c0_i32 = arith.constant 0 : i32
    %c0_i32_0 = arith.constant 0 : i32
    %c0_i32_1 = arith.constant 0 : i32
    %c0_i32_2 = arith.constant 0 : i32
    return %c0_i32, %c0_i32_0, %c0_i32_1 : i32, i32, i32
  }
  func.func @transform_2(%arg0: i32) -> (i32, i32) {
    %c0_i32 = arith.constant 0 : i32
    %c0_i32_0 = arith.constant 0 : i32
    %c0_i32_1 = arith.constant 0 : i32
    return %c0_i32, %c0_i32_0 : i32, i32
  }
  func.func @transform_3(%arg0: i32) -> (i32, i32, i32) {
    %c0_i32 = arith.constant 0 : i32
    %c0_i32_0 = arith.constant 0 : i32
    %c0_i32_1 = arith.constant 0 : i32
    %c0_i32_2 = arith.constant 0 : i32
    return %c0_i32, %c0_i32_0, %c0_i32_1 : i32, i32, i32
  }
  func.func @transform_4(%arg0: i32) -> (i32, i32) {
    %c0_i32 = arith.constant 0 : i32
    %c0_i32_0 = arith.constant 0 : i32
    %c0_i32_1 = arith.constant 0 : i32
    return %c0_i32, %c0_i32_0 : i32, i32
  }
  func.func @transform_5(%arg0: i32) -> (i32, i32, i32) {
    %c0_i32 = arith.constant 0 : i32
    %c0_i32_0 = arith.constant 0 : i32
    %c0_i32_1 = arith.constant 0 : i32
    return %arg0, %c0_i32, %c0_i32_0 : i32, i32, i32
  }
}

module attributes {stable_mosaic.version = 11 : i64} {
  func.func @_resblock_kernel(%arg0: i32, %arg1: memref<2x16x256xf32, #tpu.memory_space<vmem>>, %arg2: memref<3x256x256xf32, #tpu.memory_space<vmem>>, %arg3: memref<1x256xf32, #tpu.memory_space<vmem>>, %arg4: memref<3x256x256xf32, #tpu.memory_space<vmem>>, %arg5: memref<1x256xf32, #tpu.memory_space<vmem>>, %arg6: memref<2x16x256xf32, #tpu.memory_space<vmem>>, %arg7: memref<36x256xf32, #tpu.memory_space<vmem>>, %arg8: memref<36x256xf32, #tpu.memory_space<vmem>>) attributes {dimension_semantics = [#tpu.dimension_semantics<parallel>], iteration_bounds = array<i64: 1>, scalar_prefetch = 0 : i64, scratch_operands = 2 : i64, tpu.core_type = #tpu.core_type<tc>, window_params = [{transform_indices = @transform_0, window_bounds = array<i64: 2, 16, 256>}, {pipeline_mode = #tpu.pipeline_mode<synchronous>, transform_indices = @transform_1, window_bounds = array<i64: 3, 256, 256>}, {pipeline_mode = #tpu.pipeline_mode<synchronous>, transform_indices = @transform_2, window_bounds = array<i64: 1, 256>}, {pipeline_mode = #tpu.pipeline_mode<synchronous>, transform_indices = @transform_3, window_bounds = array<i64: 3, 256, 256>}, {pipeline_mode = #tpu.pipeline_mode<synchronous>, transform_indices = @transform_4, window_bounds = array<i64: 1, 256>}, {transform_indices = @transform_5, window_bounds = array<i64: 2, 16, 256>}]} {
    %cst = arith.constant 0.000000e+00 : f32
    %0 = vector.broadcast %cst : f32 to vector<1x256xf32>
    %c0 = arith.constant 0 : index
    %c0_0 = arith.constant 0 : index
    %1 = vector.load %arg7[%c0, %c0_0] : memref<36x256xf32, #tpu.memory_space<vmem>>, vector<1x256xf32>
    tpu.vector_store %arg7[%c0, %c0_0], %0 {strides = array<i32>} : memref<36x256xf32, #tpu.memory_space<vmem>>, vector<1x256xf32>,
    %c35 = arith.constant 35 : index
    %c0_1 = arith.constant 0 : index
    %2 = vector.load %arg7[%c35, %c0_1] : memref<36x256xf32, #tpu.memory_space<vmem>>, vector<1x256xf32>
    tpu.vector_store %arg7[%c35, %c0_1], %0 {strides = array<i32>} : memref<36x256xf32, #tpu.memory_space<vmem>>, vector<1x256xf32>,
    %cst_2 = arith.constant 0.000000e+00 : f32
    %3 = vector.broadcast %cst_2 : f32 to vector<2x256xf32>
    %c17 = arith.constant 17 : index
    %c0_3 = arith.constant 0 : index
    %4 = vector.load %arg7[%c17, %c0_3] : memref<36x256xf32, #tpu.memory_space<vmem>>, vector<2x256xf32>
    tpu.vector_store %arg7[%c17, %c0_3], %3 {strides = array<i32>} : memref<36x256xf32, #tpu.memory_space<vmem>>, vector<2x256xf32>,
    %c0_4 = arith.constant 0 : index
    %c0_5 = arith.constant 0 : index
    %c0_6 = arith.constant 0 : index
    %5 = vector.load %arg1[%c0_4, %c0_5, %c0_6] : memref<2x16x256xf32, #tpu.memory_space<vmem>>, vector<1x16x256xf32>
    %6 = vector.shape_cast %5 : vector<1x16x256xf32> to vector<16x256xf32>
    %c1 = arith.constant 1 : index
    %c0_7 = arith.constant 0 : index
    %7 = vector.load %arg7[%c1, %c0_7] : memref<36x256xf32, #tpu.memory_space<vmem>>, vector<16x256xf32>
    tpu.vector_store %arg7[%c1, %c0_7], %6 {strides = array<i32>} : memref<36x256xf32, #tpu.memory_space<vmem>>, vector<16x256xf32>,
    %c1_8 = arith.constant 1 : index
    %c0_9 = arith.constant 0 : index
    %c0_10 = arith.constant 0 : index
    %8 = vector.load %arg1[%c1_8, %c0_9, %c0_10] : memref<2x16x256xf32, #tpu.memory_space<vmem>>, vector<1x16x256xf32>
    %9 = vector.shape_cast %8 : vector<1x16x256xf32> to vector<16x256xf32>
    %c19 = arith.constant 19 : index
    %c0_11 = arith.constant 0 : index
    %10 = vector.load %arg7[%c19, %c0_11] : memref<36x256xf32, #tpu.memory_space<vmem>>, vector<16x256xf32>
    tpu.vector_store %arg7[%c19, %c0_11], %9 {strides = array<i32>} : memref<36x256xf32, #tpu.memory_space<vmem>>, vector<16x256xf32>,
    %c0_12 = arith.constant 0 : index
    %c0_13 = arith.constant 0 : index
    %11 = vector.load %arg7[%c0_12, %c0_13] : memref<36x256xf32, #tpu.memory_space<vmem>>, vector<34x256xf32>
    %c0_14 = arith.constant 0 : index
    %c0_15 = arith.constant 0 : index
    %c0_16 = arith.constant 0 : index
    %12 = vector.load %arg2[%c0_14, %c0_15, %c0_16] : memref<3x256x256xf32, #tpu.memory_space<vmem>>, vector<1x256x256xf32>
    %13 = vector.shape_cast %12 : vector<1x256x256xf32> to vector<256x256xf32>
    %cst_17 = arith.constant dense<0.000000e+00> : vector<34x256xf32>
    %14 = tpu.matmul %11, %13, %cst_17 {dimension_numbers = #tpu.dot_dimension_numbers<[1], [0], [0], [1], [0, 0, 1, 1], [], []>} : vector<34x256xf32>, vector<256x256xf32>, vector<34x256xf32> -> vector<34x256xf32>
    %c1_18 = arith.constant 1 : index
    %c0_19 = arith.constant 0 : index
    %15 = vector.load %arg7[%c1_18, %c0_19] : memref<36x256xf32, #tpu.memory_space<vmem>>, vector<34x256xf32>
    %c1_20 = arith.constant 1 : index
    %c0_21 = arith.constant 0 : index
    %c0_22 = arith.constant 0 : index
    %16 = vector.load %arg2[%c1_20, %c0_21, %c0_22] : memref<3x256x256xf32, #tpu.memory_space<vmem>>, vector<1x256x256xf32>
    %17 = vector.shape_cast %16 : vector<1x256x256xf32> to vector<256x256xf32>
    %cst_23 = arith.constant dense<0.000000e+00> : vector<34x256xf32>
    %18 = tpu.matmul %15, %17, %cst_23 {dimension_numbers = #tpu.dot_dimension_numbers<[1], [0], [0], [1], [0, 0, 1, 1], [], []>} : vector<34x256xf32>, vector<256x256xf32>, vector<34x256xf32> -> vector<34x256xf32>
    %19 = arith.addf %14, %18 : vector<34x256xf32>
    %c2 = arith.constant 2 : index
    %c0_24 = arith.constant 0 : index
    %20 = vector.load %arg7[%c2, %c0_24] : memref<36x256xf32, #tpu.memory_space<vmem>>, vector<34x256xf32>
    %c2_25 = arith.constant 2 : index
    %c0_26 = arith.constant 0 : index
    %c0_27 = arith.constant 0 : index
    %21 = vector.load %arg2[%c2_25, %c0_26, %c0_27] : memref<3x256x256xf32, #tpu.memory_space<vmem>>, vector<1x256x256xf32>
    %22 = vector.shape_cast %21 : vector<1x256x256xf32> to vector<256x256xf32>
    %cst_28 = arith.constant dense<0.000000e+00> : vector<34x256xf32>
    %23 = tpu.matmul %20, %22, %cst_28 {dimension_numbers = #tpu.dot_dimension_numbers<[1], [0], [0], [1], [0, 0, 1, 1], [], []>} : vector<34x256xf32>, vector<256x256xf32>, vector<34x256xf32> -> vector<34x256xf32>
    %24 = arith.addf %19, %23 : vector<34x256xf32>
    %c0_29 = arith.constant 0 : index
    %c0_30 = arith.constant 0 : index
    %25 = vector.load %arg3[%c0_29, %c0_30] : memref<1x256xf32, #tpu.memory_space<vmem>>, vector<1x256xf32>
    %cst_31 = arith.constant 0.000000e+00 : f32
    %26 = vector.broadcast %cst_31 : f32 to vector<1x256xf32>
    %c0_32 = arith.constant 0 : index
    %c0_33 = arith.constant 0 : index
    %27 = vector.load %arg8[%c0_32, %c0_33] : memref<36x256xf32, #tpu.memory_space<vmem>>, vector<1x256xf32>
    tpu.vector_store %arg8[%c0_32, %c0_33], %26 {strides = array<i32>} : memref<36x256xf32, #tpu.memory_space<vmem>>, vector<1x256xf32>,
    %c35_34 = arith.constant 35 : index
    %c0_35 = arith.constant 0 : index
    %28 = vector.load %arg8[%c35_34, %c0_35] : memref<36x256xf32, #tpu.memory_space<vmem>>, vector<1x256xf32>
    tpu.vector_store %arg8[%c35_34, %c0_35], %26 {strides = array<i32>} : memref<36x256xf32, #tpu.memory_space<vmem>>, vector<1x256xf32>,
    %cst_36 = arith.constant 0.000000e+00 : f32
    %29 = vector.broadcast %cst_36 : f32 to vector<2x256xf32>
    %c17_37 = arith.constant 17 : index
    %c0_38 = arith.constant 0 : index
    %30 = vector.load %arg8[%c17_37, %c0_38] : memref<36x256xf32, #tpu.memory_space<vmem>>, vector<2x256xf32>
    tpu.vector_store %arg8[%c17_37, %c0_38], %29 {strides = array<i32>} : memref<36x256xf32, #tpu.memory_space<vmem>>, vector<2x256xf32>,
    %31 = vector.extract_strided_slice %24 {offsets = [0, 0], sizes = [16, 256], strides = [1, 1]} : vector<34x256xf32> to vector<16x256xf32>
    %32 = vector.broadcast %25 : vector<1x256xf32> to vector<16x256xf32>
    %33 = arith.addf %31, %32 : vector<16x256xf32>
    %cst_39 = arith.constant 0.000000e+00 : f32
    %34 = vector.broadcast %cst_39 : f32 to vector<16x256xf32>
    %35 = arith.maximumf %33, %34 : vector<16x256xf32>
    %c1_40 = arith.constant 1 : index
    %c0_41 = arith.constant 0 : index
    %36 = vector.load %arg8[%c1_40, %c0_41] : memref<36x256xf32, #tpu.memory_space<vmem>>, vector<16x256xf32>
    tpu.vector_store %arg8[%c1_40, %c0_41], %35 {strides = array<i32>} : memref<36x256xf32, #tpu.memory_space<vmem>>, vector<16x256xf32>,
    %37 = vector.extract_strided_slice %24 {offsets = [18, 0], sizes = [16, 256], strides = [1, 1]} : vector<34x256xf32> to vector<16x256xf32>
    %38 = vector.broadcast %25 : vector<1x256xf32> to vector<16x256xf32>
    %39 = arith.addf %37, %38 : vector<16x256xf32>
    %cst_42 = arith.constant 0.000000e+00 : f32
    %40 = vector.broadcast %cst_42 : f32 to vector<16x256xf32>
    %41 = arith.maximumf %39, %40 : vector<16x256xf32>
    %c19_43 = arith.constant 19 : index
    %c0_44 = arith.constant 0 : index
    %42 = vector.load %arg8[%c19_43, %c0_44] : memref<36x256xf32, #tpu.memory_space<vmem>>, vector<16x256xf32>
    tpu.vector_store %arg8[%c19_43, %c0_44], %41 {strides = array<i32>} : memref<36x256xf32, #tpu.memory_space<vmem>>, vector<16x256xf32>,
    %c0_45 = arith.constant 0 : index
    %c0_46 = arith.constant 0 : index
    %43 = vector.load %arg8[%c0_45, %c0_46] : memref<36x256xf32, #tpu.memory_space<vmem>>, vector<34x256xf32>
    %c0_47 = arith.constant 0 : index
    %c0_48 = arith.constant 0 : index
    %c0_49 = arith.constant 0 : index
    %44 = vector.load %arg4[%c0_47, %c0_48, %c0_49] : memref<3x256x256xf32, #tpu.memory_space<vmem>>, vector<1x256x256xf32>
    %45 = vector.shape_cast %44 : vector<1x256x256xf32> to vector<256x256xf32>
    %cst_50 = arith.constant dense<0.000000e+00> : vector<34x256xf32>
    %46 = tpu.matmul %43, %45, %cst_50 {dimension_numbers = #tpu.dot_dimension_numbers<[1], [0], [0], [1], [0, 0, 1, 1], [], []>} : vector<34x256xf32>, vector<256x256xf32>, vector<34x256xf32> -> vector<34x256xf32>
    %c1_51 = arith.constant 1 : index
    %c0_52 = arith.constant 0 : index
    %47 = vector.load %arg8[%c1_51, %c0_52] : memref<36x256xf32, #tpu.memory_space<vmem>>, vector<34x256xf32>
    %c1_53 = arith.constant 1 : index
    %c0_54 = arith.constant 0 : index
    %c0_55 = arith.constant 0 : index
    %48 = vector.load %arg4[%c1_53, %c0_54, %c0_55] : memref<3x256x256xf32, #tpu.memory_space<vmem>>, vector<1x256x256xf32>
    %49 = vector.shape_cast %48 : vector<1x256x256xf32> to vector<256x256xf32>
    %cst_56 = arith.constant dense<0.000000e+00> : vector<34x256xf32>
    %50 = tpu.matmul %47, %49, %cst_56 {dimension_numbers = #tpu.dot_dimension_numbers<[1], [0], [0], [1], [0, 0, 1, 1], [], []>} : vector<34x256xf32>, vector<256x256xf32>, vector<34x256xf32> -> vector<34x256xf32>
    %51 = arith.addf %46, %50 : vector<34x256xf32>
    %c2_57 = arith.constant 2 : index
    %c0_58 = arith.constant 0 : index
    %52 = vector.load %arg8[%c2_57, %c0_58] : memref<36x256xf32, #tpu.memory_space<vmem>>, vector<34x256xf32>
    %c2_59 = arith.constant 2 : index
    %c0_60 = arith.constant 0 : index
    %c0_61 = arith.constant 0 : index
    %53 = vector.load %arg4[%c2_59, %c0_60, %c0_61] : memref<3x256x256xf32, #tpu.memory_space<vmem>>, vector<1x256x256xf32>
    %54 = vector.shape_cast %53 : vector<1x256x256xf32> to vector<256x256xf32>
    %cst_62 = arith.constant dense<0.000000e+00> : vector<34x256xf32>
    %55 = tpu.matmul %52, %54, %cst_62 {dimension_numbers = #tpu.dot_dimension_numbers<[1], [0], [0], [1], [0, 0, 1, 1], [], []>} : vector<34x256xf32>, vector<256x256xf32>, vector<34x256xf32> -> vector<34x256xf32>
    %56 = arith.addf %51, %55 : vector<34x256xf32>
    %c0_63 = arith.constant 0 : index
    %c0_64 = arith.constant 0 : index
    %57 = vector.load %arg5[%c0_63, %c0_64] : memref<1x256xf32, #tpu.memory_space<vmem>>, vector<1x256xf32>
    %58 = vector.extract_strided_slice %56 {offsets = [0, 0], sizes = [16, 256], strides = [1, 1]} : vector<34x256xf32> to vector<16x256xf32>
    %59 = vector.broadcast %57 : vector<1x256xf32> to vector<16x256xf32>
    %60 = arith.addf %58, %59 : vector<16x256xf32>
    %c0_65 = arith.constant 0 : index
    %c0_66 = arith.constant 0 : index
    %c0_67 = arith.constant 0 : index
    %61 = vector.load %arg1[%c0_65, %c0_66, %c0_67] : memref<2x16x256xf32, #tpu.memory_space<vmem>>, vector<1x16x256xf32>
    %62 = vector.shape_cast %61 : vector<1x16x256xf32> to vector<16x256xf32>
    %63 = arith.addf %60, %62 : vector<16x256xf32>
    %c0_68 = arith.constant 0 : index
    %c0_69 = arith.constant 0 : index
    %c0_70 = arith.constant 0 : index
    %64 = vector.load %arg6[%c0_68, %c0_69, %c0_70] : memref<2x16x256xf32, #tpu.memory_space<vmem>>, vector<1x16x256xf32>
    %65 = vector.shape_cast %64 : vector<1x16x256xf32> to vector<16x256xf32>
    %66 = vector.shape_cast %63 : vector<16x256xf32> to vector<1x16x256xf32>
    tpu.vector_store %arg6[%c0_68, %c0_69, %c0_70], %66 {strides = array<i32>} : memref<2x16x256xf32, #tpu.memory_space<vmem>>, vector<1x16x256xf32>,
    %67 = vector.extract_strided_slice %56 {offsets = [18, 0], sizes = [16, 256], strides = [1, 1]} : vector<34x256xf32> to vector<16x256xf32>
    %68 = vector.broadcast %57 : vector<1x256xf32> to vector<16x256xf32>
    %69 = arith.addf %67, %68 : vector<16x256xf32>
    %c1_71 = arith.constant 1 : index
    %c0_72 = arith.constant 0 : index
    %c0_73 = arith.constant 0 : index
    %70 = vector.load %arg1[%c1_71, %c0_72, %c0_73] : memref<2x16x256xf32, #tpu.memory_space<vmem>>, vector<1x16x256xf32>
    %71 = vector.shape_cast %70 : vector<1x16x256xf32> to vector<16x256xf32>
    %72 = arith.addf %69, %71 : vector<16x256xf32>
    %c1_74 = arith.constant 1 : index
    %c0_75 = arith.constant 0 : index
    %c0_76 = arith.constant 0 : index
    %73 = vector.load %arg6[%c1_74, %c0_75, %c0_76] : memref<2x16x256xf32, #tpu.memory_space<vmem>>, vector<1x16x256xf32>
    %74 = vector.shape_cast %73 : vector<1x16x256xf32> to vector<16x256xf32>
    %75 = vector.shape_cast %72 : vector<16x256xf32> to vector<1x16x256xf32>
    tpu.vector_store %arg6[%c1_74, %c0_75, %c0_76], %75 {strides = array<i32>} : memref<2x16x256xf32, #tpu.memory_space<vmem>>, vector<1x16x256xf32>,
    return
  }
  func.func @transform_0(%arg0: i32) -> (i32, i32, i32) {
    %c0_i32 = arith.constant 0 : i32
    %c0_i32_0 = arith.constant 0 : i32
    %c0_i32_1 = arith.constant 0 : i32
    return %arg0, %c0_i32, %c0_i32_0 : i32, i32, i32
  }
  func.func @transform_1(%arg0: i32) -> (i32, i32, i32) {
    %c0_i32 = arith.constant 0 : i32
    %c0_i32_0 = arith.constant 0 : i32
    %c0_i32_1 = arith.constant 0 : i32
    %c0_i32_2 = arith.constant 0 : i32
    return %c0_i32, %c0_i32_0, %c0_i32_1 : i32, i32, i32
  }
  func.func @transform_2(%arg0: i32) -> (i32, i32) {
    %c0_i32 = arith.constant 0 : i32
    %c0_i32_0 = arith.constant 0 : i32
    %c0_i32_1 = arith.constant 0 : i32
    return %c0_i32, %c0_i32_0 : i32, i32
  }
  func.func @transform_3(%arg0: i32) -> (i32, i32, i32) {
    %c0_i32 = arith.constant 0 : i32
    %c0_i32_0 = arith.constant 0 : i32
    %c0_i32_1 = arith.constant 0 : i32
    %c0_i32_2 = arith.constant 0 : i32
    return %c0_i32, %c0_i32_0, %c0_i32_1 : i32, i32, i32
  }
  func.func @transform_4(%arg0: i32) -> (i32, i32) {
    %c0_i32 = arith.constant 0 : i32
    %c0_i32_0 = arith.constant 0 : i32
    %c0_i32_1 = arith.constant 0 : i32
    return %c0_i32, %c0_i32_0 : i32, i32
  }
  func.func @transform_5(%arg0: i32) -> (i32, i32, i32) {
    %c0_i32 = arith.constant 0 : i32
    %c0_i32_0 = arith.constant 0 : i32
    %c0_i32_1 = arith.constant 0 : i32
    return %arg0, %c0_i32, %c0_i32_0 : i32, i32, i32
  }
}

</mosaic_0001>

<llo_original>
// kernel: tpu_custom_call.1
$region0: #{tpu_custom_call.1}
  #allocation0 [shape = 'u32[]', space=smem, size = 0x4, offset = 0x4, fixed_abs, tag = 'smem constant byte address 0x4 - core index']
  #allocation1 [shape = 'u32[144,128]{1,0:T(1,128)}', space=vmem, size = 0x12000, scoped, tag = 'internal scratch']
  #allocation2 [shape = 'f32[36,256]{1,0:T(8,128)}', space=vmem, size = 0xa000, scoped, tag = 'scratch operand']
  #allocation3 [shape = 'f32[36,256]{1,0:T(8,128)}', space=vmem, size = 0xa000, scoped, tag = 'scratch operand']
  %s0 = inlined_call_operand.hbm [shape: f32[2,16,256], index: 0, kind: input, shape index: {}]
  %s1 = inlined_call_operand.hbm [shape: f32[3,256,256], index: 1, kind: input, shape index: {}]
  %s2 = inlined_call_operand.vmem [shape: f32[1,256], index: 2, kind: input, shape index: {}]
  %s3 = inlined_call_operand.hbm [shape: f32[3,256,256], index: 3, kind: input, shape index: {}]
  %s4 = inlined_call_operand.vmem [shape: f32[1,256], index: 4, kind: input, shape index: {}]
  %s5 = inlined_call_operand.hbm [shape: f32[2,16,256], index: 5, kind: output, shape index: {}]
  %s6 = sld [smem:[#allocation0]]
  $region42: #{tpu_custom_call.1} parent=0
    _
  %s8 = ssub.s32 1, %s6
  %s9 = scalar_select 0, %s8, %s6
  $region1: #{tpu_custom_call.1} parent=0
    #allocation4 [shape = 'u8[32768]{0}', space=vmem, size = 0x8000, scoped, tag = 'input window, operand 0, single buffered']
    #allocation5 [shape = 's32[1]{0}', space=sflag, size = 0x4, scoped, tag = 'scoped memory for tpu_custom_call.1']
    #allocation6 [shape = 's32[1]{0}', space=sflag, size = 0x4, scoped, tag = 'scoped memory for tpu_custom_call.1']
    #allocation7 [shape = 'u8[786432]{0}', space=vmem, size = 0xc0000, scoped, tag = 'input window, operand 1, single buffered']
    #allocation8 [shape = 's32[1]{0}', space=sflag, size = 0x4, scoped, tag = 'scoped memory for tpu_custom_call.1']
    #allocation9 [shape = 'u8[786432]{0}', space=vmem, size = 0xc0000, scoped, tag = 'input window, operand 3, single buffered']
    #allocation10 [shape = 'u8[32768]{0}', space=vmem, size = 0x8000, scoped, tag = 'output window, operand 0, single buffered']
    %10 = vsyncpa [#allocation5], 0
    %11 = vsyncpa [#allocation8], 0
    %12 = vsyncpa [#allocation6], 0
    // Predicated region
    $region2: #{tpu_custom_call.1} parent=1 // pred_check
      _
    $region3: #{tpu_custom_call.1} parent=1 // pred_check_branch
      %14 = sbr.rel (0) target = $region5
    $region4: #{tpu_custom_call.1} parent=1 // pred_region
      %s16 = ssub.s32 1024, 1024
      %17 = vsyncadd [#allocation5], %s16
      %s18 = sshll.u32 [#allocation4], 4
      %s19 = int_to_ptr.vmem [resolvable:$true] %s18
      %24 = dma.hbm_to_vmem [thread:$0]  %s0, 1024, %s19, [#allocation5], 256, 256, 16
    $region5: #{tpu_custom_call.1} parent=1 // pred_fallthru
      _
    // Predicated region
    $region6: #{tpu_custom_call.1} parent=1 // pred_check
      _
    $region7: #{tpu_custom_call.1} parent=1 // pred_check_branch
      %26 = sbr.rel (0) target = $region9
    $region8: #{tpu_custom_call.1} parent=1 // pred_region
      %s28 = ssub.s32 24576, 24576
      %29 = vsyncadd [#allocation8], %s28
      %s30 = sshll.u32 [#allocation7], 4
      %s31 = int_to_ptr.vmem [resolvable:$true] %s30
      %36 = dma.hbm_to_vmem [thread:$0]  %s1, 24576, %s31, [#allocation8], 256, 256, 16
    $region9: #{tpu_custom_call.1} parent=1 // pred_fallthru
      _
    // Predicated region
    $region10: #{tpu_custom_call.1} parent=1 // pred_check
      _
    $region11: #{tpu_custom_call.1} parent=1 // pred_check_branch
      %38 = sbr.rel (0) target = $region13
    $region12: #{tpu_custom_call.1} parent=1 // pred_region
      _
    $region13: #{tpu_custom_call.1} parent=1 // pred_fallthru
      _
    // Predicated region
    $region14: #{tpu_custom_call.1} parent=1 // pred_check
      _
    $region15: #{tpu_custom_call.1} parent=1 // pred_check_branch
      %40 = sbr.rel (0) target = $region17
    $region16: #{tpu_custom_call.1} parent=1 // pred_region
      %s42 = ssub.s32 24576, 24576
      %43 = vsyncadd [#allocation8], %s42
      %s44 = sshll.u32 [#allocation9], 4
      %s45 = int_to_ptr.vmem [resolvable:$true] %s44
      %50 = dma.hbm_to_vmem [thread:$0]  %s3, 24576, %s45, [#allocation8], 256, 256, 16
    $region17: #{tpu_custom_call.1} parent=1 // pred_fallthru
      _
    // Predicated region
    $region18: #{tpu_custom_call.1} parent=1 // pred_check
      _
    $region19: #{tpu_custom_call.1} parent=1 // pred_check_branch
      %52 = sbr.rel (0) target = $region21
    $region20: #{tpu_custom_call.1} parent=1 // pred_region
      _
    $region21: #{tpu_custom_call.1} parent=1 // pred_fallthru
      _
    // Predicated region
    $region22: #{tpu_custom_call.1} parent=1 // pred_check
      _
    $region23: #{tpu_custom_call.1} parent=1 // pred_check_branch
      %54 = sbr.rel (0) target = $region25
    $region24: #{tpu_custom_call.1} parent=1 // pred_region
      %55 = dma.done [#allocation5], 1024
    $region25: #{tpu_custom_call.1} parent=1 // pred_fallthru
      _
    // Predicated region
    $region26: #{tpu_custom_call.1} parent=1 // pred_check
      _
    $region27: #{tpu_custom_call.1} parent=1 // pred_check_branch
      %57 = sbr.rel (0) target = $region29
    $region28: #{tpu_custom_call.1} parent=1 // pred_region
      %58 = dma.done [#allocation8], 24576
    $region29: #{tpu_custom_call.1} parent=1 // pred_fallthru
      _
    // Predicated region
    $region30: #{tpu_custom_call.1} parent=1 // pred_check
      _
    $region31: #{tpu_custom_call.1} parent=1 // pred_check_branch
      %60 = sbr.rel (0) target = $region33
    $region32: #{tpu_custom_call.1} parent=1 // pred_region
      %61 = dma.done [#allocation8], 24576
    $region33: #{tpu_custom_call.1} parent=1 // pred_fallthru
      _
    %v62 = vlaneseq
    %vm63 = vcmp.ge.s32.totalorder %v62, 0
    %vm64 = vcmp.lt.s32.totalorder %v62, 256
    %vm65 = vmand %vm63, %vm64
    %66 = vst.msk [vmem:[#allocation2] ss:$8 sm:$0x3] %vm65, 0.0
    %67 = vst.msk [vmem:[#allocation2] ss:$8 sm:$0x0] %vm65, 0.0
    %s68 = scalar_lea.vmem [#allocation2], 67
    %69 = vst.msk [vmem:[%s68] ss:$8 sm:$0x3] %vm65, 0.0
    %70 = vst.msk [vmem:[%s68] ss:$8 sm:$0x0] %vm65, 0.0
    %71 = vst [vmem:[#allocation2 + $0x20] sm:$0x6] 0.0
    %72 = vst [vmem:[#allocation2 + $0x28] sm:$0x6] 0.0
    %v73 = vld [vmem:[#allocation4] sm:$0xff]
    %v74 = vld [vmem:[#allocation4 + $0x8] sm:$0xff]
    %v75 = vld [vmem:[#allocation4 + $0x10] sm:$0xff]
    %v76 = vld [vmem:[#allocation4 + $0x18] sm:$0xff]
    %vm81 = vcmask 1040384
    %v82 = vrot.slane %v73, 7
    %v83 = vrot.slane %v74, 7
    %v84 = vrot.slane %v75, 7
    %v85 = vsel %vm81, %v82, %v84
    %v86 = vrot.slane %v76, 7
    %v87 = vsel %vm81, %v83, %v86
    %94 = vst [vmem:[#allocation2] sm:$0xfe] %v82
    %95 = vst [vmem:[#allocation2 + $0x8] sm:$0xfe] %v83
    %96 = vst [vmem:[#allocation2 + $0x10] sm:$0xff] %v85
    %97 = vst [vmem:[#allocation2 + $0x18] sm:$0xff] %v87
    %98 = vst [vmem:[#allocation2 + $0x20] sm:$0x1] %v84
    %99 = vst [vmem:[#allocation2 + $0x28] sm:$0x1] %v86
    %s100 = scalar_lea.vmem [#allocation4], 32
    %v101 = vld [vmem:[%s100] sm:$0xff]
    %v102 = vld [vmem:[%s100 + $0x8] sm:$0xff]
    %v103 = vld [vmem:[%s100 + $0x10] sm:$0xff]
    %v104 = vld [vmem:[%s100 + $0x18] sm:$0xff]
    %vm109 = vcmask 1042432
    %v110 = vrot.slane %v101, 5
    %v111 = vrot.slane %v102, 5
    %v112 = vrot.slane %v103, 5
    %v113 = vsel %vm109, %v110, %v112
    %v114 = vrot.slane %v104, 5
    %v115 = vsel %vm109, %v111, %v114
    %122 = vst [vmem:[#allocation2 + $0x20] sm:$0xf8] %v110
    %123 = vst [vmem:[#allocation2 + $0x28] sm:$0xf8] %v111
    %124 = vst [vmem:[#allocation2 + $0x30] sm:$0xff] %v113
    %125 = vst [vmem:[#allocation2 + $0x38] sm:$0xff] %v115
    %126 = vst [vmem:[#allocation2 + $0x40] sm:$0x7] %v112
    %127 = vst [vmem:[#allocation2 + $0x48] sm:$0x7] %v114
    %v128 = vld [vmem:[#allocation2] sm:$0xff]
    %v129 = vld [vmem:[#allocation2 + $0x8] sm:$0xff]
    %v130 = vld [vmem:[#allocation2 + $0x10] sm:$0xff]
    %v131 = vld [vmem:[#allocation2 + $0x18] sm:$0xff]
    %v132 = vld [vmem:[#allocation2 + $0x20] sm:$0xff]
    %v133 = vld [vmem:[#allocation2 + $0x28] sm:$0xff]
    %v134 = vld [vmem:[#allocation2 + $0x30] sm:$0xff]
    %v135 = vld [vmem:[#allocation2 + $0x38] sm:$0xff]
    %v136 = vld [vmem:[#allocation2 + $0x40] sm:$0x3]
    %v137 = vld [vmem:[#allocation2 + $0x48] sm:$0x3]
    %v138 = vld [vmem:[#allocation7] sm:$0xff]
    %v139 = vld [vmem:[#allocation7 + $0x8] sm:$0xff]
    %v140 = vld [vmem:[#allocation7 + $0x10] sm:$0xff]
    %v141 = vld [vmem:[#allocation7 + $0x18] sm:$0xff]
    %v142 = vld [vmem:[#allocation7 + $0x20] sm:$0xff]
    %v143 = vld [vmem:[#allocation7 + $0x28] sm:$0xff]
    %v144 = vld [vmem:[#allocation7 + $0x30] sm:$0xff]
    %v145 = vld [vmem:[#allocation7 + $0x38] sm:$0xff]
    %v146 = vld [vmem:[#allocation7 + $0x40] sm:$0xff]
    %v147 = vld [vmem:[#allocation7 + $0x48] sm:$0xff]
    %v148 = vld [vmem:[#allocation7 + $0x50] sm:$0xff]
    %v149 = vld [vmem:[#allocation7 + $0x58] sm:$0xff]
    %v150 = vld [vmem:[#allocation7 + $0x60] sm:$0xff]
    %v151 = vld [vmem:[#allocation7 + $0x68] sm:$0xff]
    %v152 = vld [vmem:[#allocation7 + $0x70] sm:$0xff]
    %v153 = vld [vmem:[#allocation7 + $0x78] sm:$0xff]
    %v154 = vld [vmem:[#allocation7 + $0x80] sm:$0xff]
    %v155 = vld [vmem:[#allocation7 + $0x88] sm:$0xff]
    %v156 = vld [vmem:[#allocation7 + $0x90] sm:$0xff]
    %v157 = vld [vmem:[#allocation7 + $0x98] sm:$0xff]
    %v158 = vld [vmem:[#allocation7 + $0xa0] sm:$0xff]
    %v159 = vld [vmem:[#allocation7 + $0xa8] sm:$0xff]
    %v160 = vld [vmem:[#allocation7 + $0xb0] sm:$0xff]
    %v161 = vld [vmem:[#allocation7 + $0xb8] sm:$0xff]
    %v162 = vld [vmem:[#allocation7 + $0xc0] sm:$0xff]
    %v163 = vld [vmem:[#allocation7 + $0xc8] sm:$0xff]
    %v164 = vld [vmem:[#allocation7 + $0xd0] sm:$0xff]
    %v165 = vld [vmem:[#allocation7 + $0xd8] sm:$0xff]
    %v166 = vld [vmem:[#allocation7 + $0xe0] sm:$0xff]
    %v167 = vld [vmem:[#allocation7 + $0xe8] sm:$0xff]
    %v168 = vld [vmem:[#allocation7 + $0xf0] sm:$0xff]
    %v169 = vld [vmem:[#allocation7 + $0xf8] sm:$0xff]
    %v170 = vld [vmem:[#allocation7 + $0x100] sm:$0xff]
    %v171 = vld [vmem:[#allocation7 + $0x108] sm:$0xff]
    %v172 = vld [vmem:[#allocation7 + $0x110] sm:$0xff]
    %v173 = vld [vmem:[#allocation7 + $0x118] sm:$0xff]
    %v174 = vld [vmem:[#allocation7 + $0x120] sm:$0xff]
    %v175 = vld [vmem:[#allocation7 + $0x128] sm:$0xff]
    %v176 = vld [vmem:[#allocation7 + $0x130] sm:$0xff]
    %v177 = vld [vmem:[#allocation7 + $0x138] sm:$0xff]
    %v178 = vld [vmem:[#allocation7 + $0x140] sm:$0xff]
    %v179 = vld [vmem:[#allocation7 + $0x148] sm:$0xff]
    %v180 = vld [vmem:[#allocation7 + $0x150] sm:$0xff]
    %v181 = vld [vmem:[#allocation7 + $0x158] sm:$0xff]
    %v182 = vld [vmem:[#allocation7 + $0x160] sm:$0xff]
    %v183 = vld [vmem:[#allocation7 + $0x168] sm:$0xff]
    %v184 = vld [vmem:[#allocation7 + $0x170] sm:$0xff]
    %v185 = vld [vmem:[#allocation7 + $0x178] sm:$0xff]
    %v186 = vld [vmem:[#allocation7 + $0x180] sm:$0xff]
    %v187 = vld [vmem:[#allocation7 + $0x188] sm:$0xff]
    %v188 = vld [vmem:[#allocation7 + $0x190] sm:$0xff]
    %v189 = vld [vmem:[#allocation7 + $0x198] sm:$0xff]
    %v190 = vld [vmem:[#allocation7 + $0x1a0] sm:$0xff]
    %v191 = vld [vmem:[#allocation7 + $0x1a8] sm:$0xff]
    %v192 = vld [vmem:[#allocation7 + $0x1b0] sm:$0xff]
    %v193 = vld [vmem:[#allocation7 + $0x1b8] sm:$0xff]
    %v194 = vld [vmem:[#allocation7 + $0x1c0] sm:$0xff]
    %v195 = vld [vmem:[#allocation7 + $0x1c8] sm:$0xff]
    %v196 = vld [vmem:[#allocation7 + $0x1d0] sm:$0xff]
    %v197 = vld [vmem:[#allocation7 + $0x1d8] sm:$0xff]
    %v198 = vld [vmem:[#allocation7 + $0x1e0] sm:$0xff]
    %v199 = vld [vmem:[#allocation7 + $0x1e8] sm:$0xff]
    %v200 = vld [vmem:[#allocation7 + $0x1f0] sm:$0xff]
    %v201 = vld [vmem:[#allocation7 + $0x1f8] sm:$0xff]
    %v202 = vld [vmem:[#allocation2] sm:$0xfe]
    %v203 = vld [vmem:[#allocation2 + $0x8] sm:$0xfe]
    %v204 = vld [vmem:[#allocation2 + $0x40] sm:$0x7]
    %v205 = vld [vmem:[#allocation2 + $0x48] sm:$0x7]
    %s206 = scalar_lea.vmem [#allocation7], 512
    %v207 = vld [vmem:[%s206] sm:$0xff]
    %v208 = vld [vmem:[%s206 + $0x8] sm:$0xff]
    %v209 = vld [vmem:[%s206 + $0x10] sm:$0xff]
    %v210 = vld [vmem:[%s206 + $0x18] sm:$0xff]
    %v211 = vld [vmem:[%s206 + $0x20] sm:$0xff]
    %v212 = vld [vmem:[%s206 + $0x28] sm:$0xff]
    %v213 = vld [vmem:[%s206 + $0x30] sm:$0xff]
    %v214 = vld [vmem:[%s206 + $0x38] sm:$0xff]
    %v215 = vld [vmem:[%s206 + $0x40] sm:$0xff]
    %v216 = vld [vmem:[%s206 + $0x48] sm:$0xff]
    %v217 = vld [vmem:[%s206 + $0x50] sm:$0xff]
    %v218 = vld [vmem:[%s206 + $0x58] sm:$0xff]
    %v219 = vld [vmem:[%s206 + $0x60] sm:$0xff]
    %v220 = vld [vmem:[%s206 + $0x68] sm:$0xff]
    %v221 = vld [vmem:[%s206 + $0x70] sm:$0xff]
    %v222 = vld [vmem:[%s206 + $0x78] sm:$0xff]
    %v223 = vld [vmem:[%s206 + $0x80] sm:$0xff]
    %v224 = vld [vmem:[%s206 + $0x88] sm:$0xff]
    %v225 = vld [vmem:[%s206 + $0x90] sm:$0xff]
    %v226 = vld [vmem:[%s206 + $0x98] sm:$0xff]
    %v227 = vld [vmem:[%s206 + $0xa0] sm:$0xff]
    %v228 = vld [vmem:[%s206 + $0xa8] sm:$0xff]
    %v229 = vld [vmem:[%s206 + $0xb0] sm:$0xff]
    %v230 = vld [vmem:[%s206 + $0xb8] sm:$0xff]
    %v231 = vld [vmem:[%s206 + $0xc0] sm:$0xff]
    %v232 = vld [vmem:[%s206 + $0xc8] sm:$0xff]
    %v233 = vld [vmem:[%s206 + $0xd0] sm:$0xff]
    %v234 = vld [vmem:[%s206 + $0xd8] sm:$0xff]
    %v235 = vld [vmem:[%s206 + $0xe0] sm:$0xff]
    %v236 = vld [vmem:[%s206 + $0xe8] sm:$0xff]
    %v237 = vld [vmem:[%s206 + $0xf0] sm:$0xff]
    %v238 = vld [vmem:[%s206 + $0xf8] sm:$0xff]
    %v239 = vld [vmem:[%s206 + $0x100] sm:$0xff]
    %v240 = vld [vmem:[%s206 + $0x108] sm:$0xff]
    %v241 = vld [vmem:[%s206 + $0x110] sm:$0xff]
    %v242 = vld [vmem:[%s206 + $0x118] sm:$0xff]
    %v243 = vld [vmem:[%s206 + $0x120] sm:$0xff]
    %v244 = vld [vmem:[%s206 + $0x128] sm:$0xff]
    %v245 = vld [vmem:[%s206 + $0x130] sm:$0xff]
    %v246 = vld [vmem:[%s206 + $0x138] sm:$0xff]
    %v247 = vld [vmem:[%s206 + $0x140] sm:$0xff]
    %v248 = vld [vmem:[%s206 + $0x148] sm:$0xff]
    %v249 = vld [vmem:[%s206 + $0x150] sm:$0xff]
    %v250 = vld [vmem:[%s206 + $0x158] sm:$0xff]
    %v251 = vld [vmem:[%s206 + $0x160] sm:$0xff]
    %v252 = vld [vmem:[%s206 + $0x168] sm:$0xff]
    %v253 = vld [vmem:[%s206 + $0x170] sm:$0xff]
    %v254 = vld [vmem:[%s206 + $0x178] sm:$0xff]
    %v255 = vld [vmem:[%s206 + $0x180] sm:$0xff]
    %v256 = vld [vmem:[%s206 + $0x188] sm:$0xff]
    %v257 = vld [vmem:[%s206 + $0x190] sm:$0xff]
    %v258 = vld [vmem:[%s206 + $0x198] sm:$0xff]
    %v259 = vld [vmem:[%s206 + $0x1a0] sm:$0xff]
    %v260 = vld [vmem:[%s206 + $0x1a8] sm:$0xff]
    %v261 = vld [vmem:[%s206 + $0x1b0] sm:$0xff]
    %v262 = vld [vmem:[%s206 + $0x1b8] sm:$0xff]
    %v263 = vld [vmem:[%s206 + $0x1c0] sm:$0xff]
    %v264 = vld [vmem:[%s206 + $0x1c8] sm:$0xff]
    %v265 = vld [vmem:[%s206 + $0x1d0] sm:$0xff]
    %v266 = vld [vmem:[%s206 + $0x1d8] sm:$0xff]
    %v267 = vld [vmem:[%s206 + $0x1e0] sm:$0xff]
    %v268 = vld [vmem:[%s206 + $0x1e8] sm:$0xff]
    %v269 = vld [vmem:[%s206 + $0x1f0] sm:$0xff]
    %v270 = vld [vmem:[%s206 + $0x1f8] sm:$0xff]
    %vm281 = vcmask 1046528
    %v282 = vrot.slane %v202, 1
    %v283 = vrot.slane %v130, 1
    %v284 = vsel %vm281, %v282, %v283
    %v285 = vrot.slane %v203, 1
    %v286 = vrot.slane %v131, 1
    %v287 = vsel %vm281, %v285, %v286
    %v288 = vrot.slane %v132, 1
    %v289 = vsel %vm281, %v283, %v288
    %v290 = vrot.slane %v133, 1
    %v291 = vsel %vm281, %v286, %v290
    %v292 = vrot.slane %v134, 1
    %v293 = vsel %vm281, %v288, %v292
    %v294 = vrot.slane %v135, 1
    %v295 = vsel %vm281, %v290, %v294
    %v296 = vrot.slane %v204, 1
    %v297 = vsel %vm281, %v292, %v296
    %v298 = vrot.slane %v205, 1
    %v299 = vsel %vm281, %v294, %v298
    %310 = vmatprep.subr.mxu0 %v208
    %311 = vmatpush1.msra.mxu0 %v207
    %312 = vmatprep.subr.mxu0 %v210
    %313 = vmatpush1.msra.mxu0 %v209
    %314 = vmatprep.subr.mxu0 %v212
    %315 = vmatpush1.msra.mxu0 %v211
    %316 = vmatprep.subr.mxu0 %v214
    %317 = vmatpush1.msra.mxu0 %v213
    %318 = vmatprep.subr.mxu0 %v216
    %319 = vmatpush1.msra.mxu0 %v215
    %320 = vmatprep.subr.mxu0 %v218
    %321 = vmatpush1.msra.mxu0 %v217
    %322 = vmatprep.subr.mxu0 %v220
    %323 = vmatpush1.msra.mxu0 %v219
    %324 = vmatprep.subr.mxu0 %v222
    %325 = vmatpush1.msra.mxu0 %v221
    %326 = vmatprep.subr.mxu0 %v224
    %327 = vmatpush1.msra.mxu0 %v223
    %328 = vmatprep.subr.mxu0 %v226
    %329 = vmatpush1.msra.mxu0 %v225
    %330 = vmatprep.subr.mxu0 %v228
    %331 = vmatpush1.msra.mxu0 %v227
    %332 = vmatprep.subr.mxu0 %v230
    %333 = vmatpush1.msra.mxu0 %v229
    %334 = vmatprep.subr.mxu0 %v232
    %335 = vmatpush1.msra.mxu0 %v231
    %336 = vmatprep.subr.mxu0 %v234
    %337 = vmatpush1.msra.mxu0 %v233
    %338 = vmatprep.subr.mxu0 %v236
    %339 = vmatpush1.msra.mxu0 %v235
    %340 = vmatprep.subr.mxu0 %v238
    %341 = vmatpush1.msra.mxu0 %v237
    %342 = vmatprep.subr.mxu0 %v240
    %343 = vmatpush1.msra.mxu0 %v239
    %344 = vmatprep.subr.mxu0 %v242
    %345 = vmatpush1.msra.mxu0 %v241
    %346 = vmatprep.subr.mxu0 %v244
    %347 = vmatpush1.msra.mxu0 %v243
    %348 = vmatprep.subr.mxu0 %v246
    %349 = vmatpush1.msra.mxu0 %v245
    %350 = vmatprep.subr.mxu0 %v248
    %351 = vmatpush1.msra.mxu0 %v247
    %352 = vmatprep.subr.mxu0 %v250
    %353 = vmatpush1.msra.mxu0 %v249
    %354 = vmatprep.subr.mxu0 %v252
    %355 = vmatpush1.msra.mxu0 %v251
    %356 = vmatprep.subr.mxu0 %v254
    %357 = vmatpush1.msra.mxu0 %v253
    %358 = vmatprep.subr.mxu0 %v256
    %359 = vmatpush1.msra.mxu0 %v255
    %360 = vmatprep.subr.mxu0 %v258
    %361 = vmatpush1.msra.mxu0 %v257
    %362 = vmatprep.subr.mxu0 %v260
    %363 = vmatpush1.msra.mxu0 %v259
    %364 = vmatprep.subr.mxu0 %v262
    %365 = vmatpush1.msra.mxu0 %v261
    %366 = vmatprep.subr.mxu0 %v264
    %367 = vmatpush1.msra.mxu0 %v263
    %368 = vmatprep.subr.mxu0 %v266
    %369 = vmatpush1.msra.mxu0 %v265
    %370 = vmatprep.subr.mxu0 %v268
    %371 = vmatpush1.msra.mxu0 %v267
    %372 = vmatprep.subr.mxu0 %v270
    %373 = vmatpush1.msra.mxu0 %v269
    %374 = vmatprep.mubr.f32.mxu0 %v287
    %375 = vmatmul.mubr.f32.gmra.mrb[0].mxu0 %v284
    %v376 = vpop.f32.mrb[0].mxu0
    %v377 = vadd.f32 0.0, %v376
    %v378 = vpop.f32.mrb[0].mxu0
    %v379 = vadd.f32 0.0, %v378
    %380 = vmatprep.mubr.f32.mxu0 %v291
    %381 = vmatmul.mubr.f32.gmra.mrb[0].mxu0 %v289
    %v382 = vpop.f32.mrb[0].mxu0
    %v383 = vadd.f32 0.0, %v382
    %v384 = vpop.f32.mrb[0].mxu0
    %v385 = vadd.f32 0.0, %v384
    %386 = vmatprep.mubr.f32.mxu0 %v295
    %387 = vmatmul.mubr.f32.gmra.mrb[0].mxu0 %v293
    %v388 = vpop.f32.mrb[0].mxu0
    %v389 = vadd.f32 0.0, %v388
    %v390 = vpop.f32.mrb[0].mxu0
    %v391 = vadd.f32 0.0, %v390
    %392 = vmatprep.mubr.f32.mxu0 %v299
    %393 = vmatmul.mubr.f32.gmra.mrb[0].mxu0 %v297
    %v394 = vpop.f32.mrb[0].mxu0
    %v395 = vadd.f32 0.0, %v394
    %v396 = vpop.f32.mrb[0].mxu0
    %v397 = vadd.f32 0.0, %v396
    %398 = vmatprep.mubr.f32.mxu0 %v298
    %399 = vmatmul.mubr.f32.gmra.mrb[0].mxu0 %v296
    %v400 = vpop.f32.mrb[0].mxu0
    %v401 = vadd.f32 0.0, %v400
    %v402 = vpop.f32.mrb[0].mxu0
    %v403 = vadd.f32 0.0, %v402
    %404 = vdwg.mxu0
    %405 = vmatprep.subr.mxu0 %v139
    %406 = vmatpush1.msra.mxu0 %v138
    %407 = vmatprep.subr.mxu0 %v141
    %408 = vmatpush1.msra.mxu0 %v140
    %409 = vmatprep.subr.mxu0 %v143
    %410 = vmatpush1.msra.mxu0 %v142
    %411 = vmatprep.subr.mxu0 %v145
    %412 = vmatpush1.msra.mxu0 %v144
    %413 = vmatprep.subr.mxu0 %v147
    %414 = vmatpush1.msra.mxu0 %v146
    %415 = vmatprep.subr.mxu0 %v149
    %416 = vmatpush1.msra.mxu0 %v148
    %417 = vmatprep.subr.mxu0 %v151
    %418 = vmatpush1.msra.mxu0 %v150
    %419 = vmatprep.subr.mxu0 %v153
    %420 = vmatpush1.msra.mxu0 %v152
    %421 = vmatprep.subr.mxu0 %v155
    %422 = vmatpush1.msra.mxu0 %v154
    %423 = vmatprep.subr.mxu0 %v157
    %424 = vmatpush1.msra.mxu0 %v156
    %425 = vmatprep.subr.mxu0 %v159
    %426 = vmatpush1.msra.mxu0 %v158
    %427 = vmatprep.subr.mxu0 %v161
    %428 = vmatpush1.msra.mxu0 %v160
    %429 = vmatprep.subr.mxu0 %v163
    %430 = vmatpush1.msra.mxu0 %v162
    %431 = vmatprep.subr.mxu0 %v165
    %432 = vmatpush1.msra.mxu0 %v164
    %433 = vmatprep.subr.mxu0 %v167
    %434 = vmatpush1.msra.mxu0 %v166
    %435 = vmatprep.subr.mxu0 %v169
    %436 = vmatpush1.msra.mxu0 %v168
    %437 = vmatprep.subr.mxu0 %v171
    %438 = vmatpush1.msra.mxu0 %v170
    %439 = vmatprep.subr.mxu0 %v173
    %440 = vmatpush1.msra.mxu0 %v172
    %441 = vmatprep.subr.mxu0 %v175
    %442 = vmatpush1.msra.mxu0 %v174
    %443 = vmatprep.subr.mxu0 %v177
    %444 = vmatpush1.msra.mxu0 %v176
    %445 = vmatprep.subr.mxu0 %v179
    %446 = vmatpush1.msra.mxu0 %v178
    %447 = vmatprep.subr.mxu0 %v181
    %448 = vmatpush1.msra.mxu0 %v180
    %449 = vmatprep.subr.mxu0 %v183
    %450 = vmatpush1.msra.mxu0 %v182
    %451 = vmatprep.subr.mxu0 %v185
    %452 = vmatpush1.msra.mxu0 %v184
    %453 = vmatprep.subr.mxu0 %v187
    %454 = vmatpush1.msra.mxu0 %v186
    %455 = vmatprep.subr.mxu0 %v189
    %456 = vmatpush1.msra.mxu0 %v188
    %457 = vmatprep.subr.mxu0 %v191
    %458 = vmatpush1.msra.mxu0 %v190
    %459 = vmatprep.subr.mxu0 %v193
    %460 = vmatpush1.msra.mxu0 %v192
    %461 = vmatprep.subr.mxu0 %v195
    %462 = vmatpush1.msra.mxu0 %v194
    %463 = vmatprep.subr.mxu0 %v197
    %464 = vmatpush1.msra.mxu0 %v196
    %465 = vmatprep.subr.mxu0 %v199
    %466 = vmatpush1.msra.mxu0 %v198
    %467 = vmatprep.subr.mxu0 %v201
    %468 = vmatpush1.msra.mxu0 %v200
    %469 = vmatprep.mubr.f32.mxu0 %v129
    %470 = vmatmul.mubr.f32.gmra.mrb[0].mxu0 %v128
    %v471 = vpop.f32.mrb[0].mxu0
    %v472 = vadd.f32 %v377, %v471
    %v473 = vpop.f32.mrb[0].mxu0
    %v474 = vadd.f32 %v379, %v473
    %475 = vmatprep.mubr.f32.mxu0 %v131
    %476 = vmatmul.mubr.f32.gmra.mrb[0].mxu0 %v130
    %v477 = vpop.f32.mrb[0].mxu0
    %v478 = vadd.f32 %v383, %v477
    %v479 = vpop.f32.mrb[0].mxu0
    %v480 = vadd.f32 %v385, %v479
    %481 = vmatprep.mubr.f32.mxu0 %v133
    %482 = vmatmul.mubr.f32.gmra.mrb[0].mxu0 %v132
    %v483 = vpop.f32.mrb[0].mxu0
    %v484 = vadd.f32 %v389, %v483
    %v485 = vpop.f32.mrb[0].mxu0
    %v486 = vadd.f32 %v391, %v485
    %487 = vmatprep.mubr.f32.mxu0 %v135
    %488 = vmatmul.mubr.f32.gmra.mrb[0].mxu0 %v134
    %v489 = vpop.f32.mrb[0].mxu0
    %v490 = vadd.f32 %v395, %v489
    %v491 = vpop.f32.mrb[0].mxu0
    %v492 = vadd.f32 %v397, %v491
    %493 = vmatprep.mubr.f32.mxu0 %v137
    %494 = vmatmul.mubr.f32.gmra.mrb[0].mxu0 %v136
    %v495 = vpop.f32.mrb[0].mxu0
    %v496 = vadd.f32 %v401, %v495
    %v497 = vpop.f32.mrb[0].mxu0
    %v498 = vadd.f32 %v403, %v497
    %499 = vdwg.mxu0
    %v500 = vld [vmem:[#allocation2] sm:$0xfc]
    %v501 = vld [vmem:[#allocation2 + $0x8] sm:$0xfc]
    %v502 = vld [vmem:[#allocation2 + $0x40] sm:$0xf]
    %v503 = vld [vmem:[#allocation2 + $0x48] sm:$0xf]
    %s504 = scalar_lea.vmem [#allocation7], 1024
    %v505 = vld [vmem:[%s504] sm:$0xff]
    %v506 = vld [vmem:[%s504 + $0x8] sm:$0xff]
    %v507 = vld [vmem:[%s504 + $0x10] sm:$0xff]
    %v508 = vld [vmem:[%s504 + $0x18] sm:$0xff]
    %v509 = vld [vmem:[%s504 + $0x20] sm:$0xff]
    %v510 = vld [vmem:[%s504 + $0x28] sm:$0xff]
    %v511 = vld [vmem:[%s504 + $0x30] sm:$0xff]
    %v512 = vld [vmem:[%s504 + $0x38] sm:$0xff]
    %v513 = vld [vmem:[%s504 + $0x40] sm:$0xff]
    %v514 = vld [vmem:[%s504 + $0x48] sm:$0xff]
    %v515 = vld [vmem:[%s504 + $0x50] sm:$0xff]
    %v516 = vld [vmem:[%s504 + $0x58] sm:$0xff]
    %v517 = vld [vmem:[%s504 + $0x60] sm:$0xff]
    %v518 = vld [vmem:[%s504 + $0x68] sm:$0xff]
    %v519 = vld [vmem:[%s504 + $0x70] sm:$0xff]
    %v520 = vld [vmem:[%s504 + $0x78] sm:$0xff]
    %v521 = vld [vmem:[%s504 + $0x80] sm:$0xff]
    %v522 = vld [vmem:[%s504 + $0x88] sm:$0xff]
    %v523 = vld [vmem:[%s504 + $0x90] sm:$0xff]
    %v524 = vld [vmem:[%s504 + $0x98] sm:$0xff]
    %v525 = vld [vmem:[%s504 + $0xa0] sm:$0xff]
    %v526 = vld [vmem:[%s504 + $0xa8] sm:$0xff]
    %v527 = vld [vmem:[%s504 + $0xb0] sm:$0xff]
    %v528 = vld [vmem:[%s504 + $0xb8] sm:$0xff]
    %v529 = vld [vmem:[%s504 + $0xc0] sm:$0xff]
    %v530 = vld [vmem:[%s504 + $0xc8] sm:$0xff]
    %v531 = vld [vmem:[%s504 + $0xd0] sm:$0xff]
    %v532 = vld [vmem:[%s504 + $0xd8] sm:$0xff]
    %v533 = vld [vmem:[%s504 + $0xe0] sm:$0xff]
    %v534 = vld [vmem:[%s504 + $0xe8] sm:$0xff]
    %v535 = vld [vmem:[%s504 + $0xf0] sm:$0xff]
    %v536 = vld [vmem:[%s504 + $0xf8] sm:$0xff]
    %v537 = vld [vmem:[%s504 + $0x100] sm:$0xff]
    %v538 = vld [vmem:[%s504 + $0x108] sm:$0xff]
    %v539 = vld [vmem:[%s504 + $0x110] sm:$0xff]
    %v540 = vld [vmem:[%s504 + $0x118] sm:$0xff]
    %v541 = vld [vmem:[%s504 + $0x120] sm:$0xff]
    %v542 = vld [vmem:[%s504 + $0x128] sm:$0xff]
    %v543 = vld [vmem:[%s504 + $0x130] sm:$0xff]
    %v544 = vld [vmem:[%s504 + $0x138] sm:$0xff]
    %v545 = vld [vmem:[%s504 + $0x140] sm:$0xff]
    %v546 = vld [vmem:[%s504 + $0x148] sm:$0xff]
    %v547 = vld [vmem:[%s504 + $0x150] sm:$0xff]
    %v548 = vld [vmem:[%s504 + $0x158] sm:$0xff]
    %v549 = vld [vmem:[%s504 + $0x160] sm:$0xff]
    %v550 = vld [vmem:[%s504 + $0x168] sm:$0xff]
    %v551 = vld [vmem:[%s504 + $0x170] sm:$0xff]
    %v552 = vld [vmem:[%s504 + $0x178] sm:$0xff]
    %v553 = vld [vmem:[%s504 + $0x180] sm:$0xff]
    %v554 = vld [vmem:[%s504 + $0x188] sm:$0xff]
    %v555 = vld [vmem:[%s504 + $0x190] sm:$0xff]
    %v556 = vld [vmem:[%s504 + $0x198] sm:$0xff]
    %v557 = vld [vmem:[%s504 + $0x1a0] sm:$0xff]
    %v558 = vld [vmem:[%s504 + $0x1a8] sm:$0xff]
    %v559 = vld [vmem:[%s504 + $0x1b0] sm:$0xff]
    %v560 = vld [vmem:[%s504 + $0x1b8] sm:$0xff]
    %v561 = vld [vmem:[%s504 + $0x1c0] sm:$0xff]
    %v562 = vld [vmem:[%s504 + $0x1c8] sm:$0xff]
    %v563 = vld [vmem:[%s504 + $0x1d0] sm:$0xff]
    %v564 = vld [vmem:[%s504 + $0x1d8] sm:$0xff]
    %v565 = vld [vmem:[%s504 + $0x1e0] sm:$0xff]
    %v566 = vld [vmem:[%s504 + $0x1e8] sm:$0xff]
    %v567 = vld [vmem:[%s504 + $0x1f0] sm:$0xff]
    %v568 = vld [vmem:[%s504 + $0x1f8] sm:$0xff]
    %vm573 = vcmask 1045504
    %v574 = vrot.slane %v500, 2
    %v575 = vrot.slane %v130, 2
    %v576 = vsel %vm573, %v574, %v575
    %v577 = vrot.slane %v501, 2
    %v578 = vrot.slane %v131, 2
    %v579 = vsel %vm573, %v577, %v578
    %v580 = vrot.slane %v132, 2
    %v581 = vsel %vm573, %v575, %v580
    %v582 = vrot.slane %v133, 2
    %v583 = vsel %vm573, %v578, %v582
    %v584 = vrot.slane %v134, 2
    %v585 = vsel %vm573, %v580, %v584
    %v586 = vrot.slane %v135, 2
    %v587 = vsel %vm573, %v582, %v586
    %v588 = vrot.slane %v502, 2
    %v589 = vsel %vm573, %v584, %v588
    %v590 = vrot.slane %v503, 2
    %v591 = vsel %vm573, %v586, %v590
    %602 = vmatprep.subr.mxu0 %v506
    %603 = vmatpush1.msra.mxu0 %v505
    %604 = vmatprep.subr.mxu0 %v508
    %605 = vmatpush1.msra.mxu0 %v507
    %606 = vmatprep.subr.mxu0 %v510
    %607 = vmatpush1.msra.mxu0 %v509
    %608 = vmatprep.subr.mxu0 %v512
    %609 = vmatpush1.msra.mxu0 %v511
    %610 = vmatprep.subr.mxu0 %v514
    %611 = vmatpush1.msra.mxu0 %v513
    %612 = vmatprep.subr.mxu0 %v516
    %613 = vmatpush1.msra.mxu0 %v515
    %614 = vmatprep.subr.mxu0 %v518
    %615 = vmatpush1.msra.mxu0 %v517
    %616 = vmatprep.subr.mxu0 %v520
    %617 = vmatpush1.msra.mxu0 %v519
    %618 = vmatprep.subr.mxu0 %v522
    %619 = vmatpush1.msra.mxu0 %v521
    %620 = vmatprep.subr.mxu0 %v524
    %621 = vmatpush1.msra.mxu0 %v523
    %622 = vmatprep.subr.mxu0 %v526
    %623 = vmatpush1.msra.mxu0 %v525
    %624 = vmatprep.subr.mxu0 %v528
    %625 = vmatpush1.msra.mxu0 %v527
    %626 = vmatprep.subr.mxu0 %v530
    %627 = vmatpush1.msra.mxu0 %v529
    %628 = vmatprep.subr.mxu0 %v532
    %629 = vmatpush1.msra.mxu0 %v531
    %630 = vmatprep.subr.mxu0 %v534
    %631 = vmatpush1.msra.mxu0 %v533
    %632 = vmatprep.subr.mxu0 %v536
    %633 = vmatpush1.msra.mxu0 %v535
    %634 = vmatprep.subr.mxu0 %v538
    %635 = vmatpush1.msra.mxu0 %v537
    %636 = vmatprep.subr.mxu0 %v540
    %637 = vmatpush1.msra.mxu0 %v539
    %638 = vmatprep.subr.mxu0 %v542
    %639 = vmatpush1.msra.mxu0 %v541
    %640 = vmatprep.subr.mxu0 %v544
    %641 = vmatpush1.msra.mxu0 %v543
    %642 = vmatprep.subr.mxu0 %v546
    %643 = vmatpush1.msra.mxu0 %v545
    %644 = vmatprep.subr.mxu0 %v548
    %645 = vmatpush1.msra.mxu0 %v547
    %646 = vmatprep.subr.mxu0 %v550
    %647 = vmatpush1.msra.mxu0 %v549
    %648 = vmatprep.subr.mxu0 %v552
    %649 = vmatpush1.msra.mxu0 %v551
    %650 = vmatprep.subr.mxu0 %v554
    %651 = vmatpush1.msra.mxu0 %v553
    %652 = vmatprep.subr.mxu0 %v556
    %653 = vmatpush1.msra.mxu0 %v555
    %654 = vmatprep.subr.mxu0 %v558
    %655 = vmatpush1.msra.mxu0 %v557
    %656 = vmatprep.subr.mxu0 %v560
    %657 = vmatpush1.msra.mxu0 %v559
    %658 = vmatprep.subr.mxu0 %v562
    %659 = vmatpush1.msra.mxu0 %v561
    %660 = vmatprep.subr.mxu0 %v564
    %661 = vmatpush1.msra.mxu0 %v563
    %662 = vmatprep.subr.mxu0 %v566
    %663 = vmatpush1.msra.mxu0 %v565
    %664 = vmatprep.subr.mxu0 %v568
    %665 = vmatpush1.msra.mxu0 %v567
    %666 = vmatprep.mubr.f32.mxu0 %v579
    %667 = vmatmul.mubr.f32.gmra.mrb[0].mxu0 %v576
    %v668 = vpop.f32.mrb[0].mxu0
    %v669 = vadd.f32 0.0, %v668
    %v670 = vpop.f32.mrb[0].mxu0
    %v671 = vadd.f32 0.0, %v670
    %672 = vmatprep.mubr.f32.mxu0 %v583
    %673 = vmatmul.mubr.f32.gmra.mrb[0].mxu0 %v581
    %v674 = vpop.f32.mrb[0].mxu0
    %v675 = vadd.f32 0.0, %v674
    %v676 = vpop.f32.mrb[0].mxu0
    %v677 = vadd.f32 0.0, %v676
    %678 = vmatprep.mubr.f32.mxu0 %v587
    %679 = vmatmul.mubr.f32.gmra.mrb[0].mxu0 %v585
    %v680 = vpop.f32.mrb[0].mxu0
    %v681 = vadd.f32 0.0, %v680
    %v682 = vpop.f32.mrb[0].mxu0
    %v683 = vadd.f32 0.0, %v682
    %684 = vmatprep.mubr.f32.mxu0 %v591
    %685 = vmatmul.mubr.f32.gmra.mrb[0].mxu0 %v589
    %v686 = vpop.f32.mrb[0].mxu0
    %v687 = vadd.f32 0.0, %v686
    %v688 = vpop.f32.mrb[0].mxu0
    %v689 = vadd.f32 0.0, %v688
    %690 = vmatprep.mubr.f32.mxu0 %v590
    %691 = vmatmul.mubr.f32.gmra.mrb[0].mxu0 %v588
    %v692 = vpop.f32.mrb[0].mxu0
    %v693 = vadd.f32 0.0, %v692
    %v694 = vpop.f32.mrb[0].mxu0
    %v695 = vadd.f32 0.0, %v694
    %696 = vdwg.mxu0
    %v697 = vadd.f32 %v472, %v669
    %v698 = vadd.f32 %v474, %v671
    %v699 = vadd.f32 %v478, %v675
    %v700 = vadd.f32 %v480, %v677
    %v701 = vadd.f32 %v484, %v681
    %v702 = vadd.f32 %v486, %v683
    %v703 = vadd.f32 %v490, %v687
    %v704 = vadd.f32 %v492, %v689
    %v705 = vadd.f32 %v496, %v693
    %v706 = vadd.f32 %v498, %v695
    %v707 = vld [vmem:[%s2] sm:$0x3]
    %708 = vst.msk [vmem:[#allocation3] ss:$8 sm:$0x3] %vm65, 0.0
    %709 = vst.msk [vmem:[#allocation3] ss:$8 sm:$0x0] %vm65, 0.0
    %s710 = scalar_lea.vmem [#allocation3], 67
    %711 = vst.msk [vmem:[%s710] ss:$8 sm:$0x3] %vm65, 0.0
    %712 = vst.msk [vmem:[%s710] ss:$8 sm:$0x0] %vm65, 0.0
    %713 = vst [vmem:[#allocation3 + $0x20] sm:$0x6] 0.0
    %714 = vst [vmem:[#allocation3 + $0x28] sm:$0x6] 0.0
    %v716 = vlaneseq
    %v717 = vshrl.u32 %v716, 7
    %v718 = vsub.s32 0, %v717
    %v719 = vrot.slane %v707, %v718
    %v720 = vlaneseq
    %v721 = vshrl.u32 %v720, 7
    %v722 = vsub.s32 1, %v721
    %v723 = vrot.slane %v707, %v722
    %v726 = vadd.f32 %v697, %v719
    %v727 = vadd.f32 %v698, %v723
    %v728 = vadd.f32 %v699, %v719
    %v729 = vadd.f32 %v700, %v723
    %v730 = vmax.f32 %v726, 0.0
    %v731 = vmax.f32 %v727, 0.0
    %v732 = vmax.f32 %v728, 0.0
    %v733 = vmax.f32 %v729, 0.0
    %v738 = vrot.slane %v730, 7
    %v739 = vrot.slane %v731, 7
    %v740 = vrot.slane %v732, 7
    %v741 = vsel %vm81, %v738, %v740
    %v742 = vrot.slane %v733, 7
    %v743 = vsel %vm81, %v739, %v742
    %750 = vst [vmem:[#allocation3] sm:$0xfe] %v738
    %751 = vst [vmem:[#allocation3 + $0x8] sm:$0xfe] %v739
    %752 = vst [vmem:[#allocation3 + $0x10] sm:$0xff] %v741
    %753 = vst [vmem:[#allocation3 + $0x18] sm:$0xff] %v743
    %754 = vst [vmem:[#allocation3 + $0x20] sm:$0x1] %v740
    %755 = vst [vmem:[#allocation3 + $0x28] sm:$0x1] %v742
    %v756 = vadd.f32 %v701, %v719
    %v757 = vadd.f32 %v702, %v723
    %v758 = vadd.f32 %v703, %v719
    %v759 = vadd.f32 %v704, %v723
    %v760 = vadd.f32 %v705, %v719
    %v761 = vadd.f32 %v706, %v723
    %v762 = vmax.f32 %v756, 0.0
    %v763 = vmax.f32 %v757, 0.0
    %v764 = vmax.f32 %v758, 0.0
    %v765 = vmax.f32 %v759, 0.0
    %v766 = vmax.f32 %v760, 0.0
    %v767 = vmax.f32 %v761, 0.0
    %v774 = vrot.slane %v762, 7
    %v775 = vrot.slane %v763, 7
    %v776 = vrot.slane %v764, 7
    %v777 = vsel %vm81, %v774, %v776
    %v778 = vrot.slane %v765, 7
    %v779 = vsel %vm81, %v775, %v778
    %v780 = vrot.slane %v766, 7
    %v781 = vsel %vm81, %v776, %v780
    %v782 = vrot.slane %v767, 7
    %v783 = vsel %vm81, %v778, %v782
    %790 = vst [vmem:[#allocation3 + $0x20] sm:$0xf8] %v774
    %791 = vst [vmem:[#allocation3 + $0x28] sm:$0xf8] %v775
    %792 = vst [vmem:[#allocation3 + $0x30] sm:$0xff] %v777
    %793 = vst [vmem:[#allocation3 + $0x38] sm:$0xff] %v779
    %794 = vst [vmem:[#allocation3 + $0x40] sm:$0x7] %v781
    %795 = vst [vmem:[#allocation3 + $0x48] sm:$0x7] %v783
    %v796 = vld [vmem:[#allocation3] sm:$0xff]
    %v797 = vld [vmem:[#allocation3 + $0x8] sm:$0xff]
    %v798 = vld [vmem:[#allocation3 + $0x10] sm:$0xff]
    %v799 = vld [vmem:[#allocation3 + $0x18] sm:$0xff]
    %v800 = vld [vmem:[#allocation3 + $0x20] sm:$0xff]
    %v801 = vld [vmem:[#allocation3 + $0x28] sm:$0xff]
    %v802 = vld [vmem:[#allocation3 + $0x30] sm:$0xff]
    %v803 = vld [vmem:[#allocation3 + $0x38] sm:$0xff]
    %v804 = vld [vmem:[#allocation3 + $0x40] sm:$0x3]
    %v805 = vld [vmem:[#allocation3 + $0x48] sm:$0x3]
    %v806 = vld [vmem:[#allocation9] sm:$0xff]
    %v807 = vld [vmem:[#allocation9 + $0x8] sm:$0xff]
    %v808 = vld [vmem:[#allocation9 + $0x10] sm:$0xff]
    %v809 = vld [vmem:[#allocation9 + $0x18] sm:$0xff]
    %v810 = vld [vmem:[#allocation9 + $0x20] sm:$0xff]
    %v811 = vld [vmem:[#allocation9 + $0x28] sm:$0xff]
    %v812 = vld [vmem:[#allocation9 + $0x30] sm:$0xff]
    %v813 = vld [vmem:[#allocation9 + $0x38] sm:$0xff]
    %v814 = vld [vmem:[#allocation9 + $0x40] sm:$0xff]
    %v815 = vld [vmem:[#allocation9 + $0x48] sm:$0xff]
    %v816 = vld [vmem:[#allocation9 + $0x50] sm:$0xff]
    %v817 = vld [vmem:[#allocation9 + $0x58] sm:$0xff]
    %v818 = vld [vmem:[#allocation9 + $0x60] sm:$0xff]
    %v819 = vld [vmem:[#allocation9 + $0x68] sm:$0xff]
    %v820 = vld [vmem:[#allocation9 + $0x70] sm:$0xff]
    %v821 = vld [vmem:[#allocation9 + $0x78] sm:$0xff]
    %v822 = vld [vmem:[#allocation9 + $0x80] sm:$0xff]
    %v823 = vld [vmem:[#allocation9 + $0x88] sm:$0xff]
    %v824 = vld [vmem:[#allocation9 + $0x90] sm:$0xff]
    %v825 = vld [vmem:[#allocation9 + $0x98] sm:$0xff]
    %v826 = vld [vmem:[#allocation9 + $0xa0] sm:$0xff]
    %v827 = vld [vmem:[#allocation9 + $0xa8] sm:$0xff]
    %v828 = vld [vmem:[#allocation9 + $0xb0] sm:$0xff]
    %v829 = vld [vmem:[#allocation9 + $0xb8] sm:$0xff]
    %v830 = vld [vmem:[#allocation9 + $0xc0] sm:$0xff]
    %v831 = vld [vmem:[#allocation9 + $0xc8] sm:$0xff]
    %v832 = vld [vmem:[#allocation9 + $0xd0] sm:$0xff]
    %v833 = vld [vmem:[#allocation9 + $0xd8] sm:$0xff]
    %v834 = vld [vmem:[#allocation9 + $0xe0] sm:$0xff]
    %v835 = vld [vmem:[#allocation9 + $0xe8] sm:$0xff]
    %v836 = vld [vmem:[#allocation9 + $0xf0] sm:$0xff]
    %v837 = vld [vmem:[#allocation9 + $0xf8] sm:$0xff]
    %v838 = vld [vmem:[#allocation9 + $0x100] sm:$0xff]
    %v839 = vld [vmem:[#allocation9 + $0x108] sm:$0xff]
    %v840 = vld [vmem:[#allocation9 + $0x110] sm:$0xff]
    %v841 = vld [vmem:[#allocation9 + $0x118] sm:$0xff]
    %v842 = vld [vmem:[#allocation9 + $0x120] sm:$0xff]
    %v843 = vld [vmem:[#allocation9 + $0x128] sm:$0xff]
    %v844 = vld [vmem:[#allocation9 + $0x130] sm:$0xff]
    %v845 = vld [vmem:[#allocation9 + $0x138] sm:$0xff]
    %v846 = vld [vmem:[#allocation9 + $0x140] sm:$0xff]
    %v847 = vld [vmem:[#allocation9 + $0x148] sm:$0xff]
    %v848 = vld [vmem:[#allocation9 + $0x150] sm:$0xff]
    %v849 = vld [vmem:[#allocation9 + $0x158] sm:$0xff]
    %v850 = vld [vmem:[#allocation9 + $0x160] sm:$0xff]
    %v851 = vld [vmem:[#allocation9 + $0x168] sm:$0xff]
    %v852 = vld [vmem:[#allocation9 + $0x170] sm:$0xff]
    %v853 = vld [vmem:[#allocation9 + $0x178] sm:$0xff]
    %v854 = vld [vmem:[#allocation9 + $0x180] sm:$0xff]
    %v855 = vld [vmem:[#allocation9 + $0x188] sm:$0xff]
    %v856 = vld [vmem:[#allocation9 + $0x190] sm:$0xff]
    %v857 = vld [vmem:[#allocation9 + $0x198] sm:$0xff]
    %v858 = vld [vmem:[#allocation9 + $0x1a0] sm:$0xff]
    %v859 = vld [vmem:[#allocation9 + $0x1a8] sm:$0xff]
    %v860 = vld [vmem:[#allocation9 + $0x1b0] sm:$0xff]
    %v861 = vld [vmem:[#allocation9 + $0x1b8] sm:$0xff]
    %v862 = vld [vmem:[#allocation9 + $0x1c0] sm:$0xff]
    %v863 = vld [vmem:[#allocation9 + $0x1c8] sm:$0xff]
    %v864 = vld [vmem:[#allocation9 + $0x1d0] sm:$0xff]
    %v865 = vld [vmem:[#allocation9 + $0x1d8] sm:$0xff]
    %v866 = vld [vmem:[#allocation9 + $0x1e0] sm:$0xff]
    %v867 = vld [vmem:[#allocation9 + $0x1e8] sm:$0xff]
    %v868 = vld [vmem:[#allocation9 + $0x1f0] sm:$0xff]
    %v869 = vld [vmem:[#allocation9 + $0x1f8] sm:$0xff]
    %v870 = vld [vmem:[#allocation3] sm:$0xfe]
    %v871 = vld [vmem:[#allocation3 + $0x8] sm:$0xfe]
    %v872 = vld [vmem:[#allocation3 + $0x40] sm:$0x7]
    %v873 = vld [vmem:[#allocation3 + $0x48] sm:$0x7]
    %s874 = scalar_lea.vmem [#allocation9], 512
    %v875 = vld [vmem:[%s874] sm:$0xff]
    %v876 = vld [vmem:[%s874 + $0x8] sm:$0xff]
    %v877 = vld [vmem:[%s874 + $0x10] sm:$0xff]
    %v878 = vld [vmem:[%s874 + $0x18] sm:$0xff]
    %v879 = vld [vmem:[%s874 + $0x20] sm:$0xff]
    %v880 = vld [vmem:[%s874 + $0x28] sm:$0xff]
    %v881 = vld [vmem:[%s874 + $0x30] sm:$0xff]
    %v882 = vld [vmem:[%s874 + $0x38] sm:$0xff]
    %v883 = vld [vmem:[%s874 + $0x40] sm:$0xff]
    %v884 = vld [vmem:[%s874 + $0x48] sm:$0xff]
    %v885 = vld [vmem:[%s874 + $0x50] sm:$0xff]
    %v886 = vld [vmem:[%s874 + $0x58] sm:$0xff]
    %v887 = vld [vmem:[%s874 + $0x60] sm:$0xff]
    %v888 = vld [vmem:[%s874 + $0x68] sm:$0xff]
    %v889 = vld [vmem:[%s874 + $0x70] sm:$0xff]
    %v890 = vld [vmem:[%s874 + $0x78] sm:$0xff]
    %v891 = vld [vmem:[%s874 + $0x80] sm:$0xff]
    %v892 = vld [vmem:[%s874 + $0x88] sm:$0xff]
    %v893 = vld [vmem:[%s874 + $0x90] sm:$0xff]
    %v894 = vld [vmem:[%s874 + $0x98] sm:$0xff]
    %v895 = vld [vmem:[%s874 + $0xa0] sm:$0xff]
    %v896 = vld [vmem:[%s874 + $0xa8] sm:$0xff]
    %v897 = vld [vmem:[%s874 + $0xb0] sm:$0xff]
    %v898 = vld [vmem:[%s874 + $0xb8] sm:$0xff]
    %v899 = vld [vmem:[%s874 + $0xc0] sm:$0xff]
    %v900 = vld [vmem:[%s874 + $0xc8] sm:$0xff]
    %v901 = vld [vmem:[%s874 + $0xd0] sm:$0xff]
    %v902 = vld [vmem:[%s874 + $0xd8] sm:$0xff]
    %v903 = vld [vmem:[%s874 + $0xe0] sm:$0xff]
    %v904 = vld [vmem:[%s874 + $0xe8] sm:$0xff]
    %v905 = vld [vmem:[%s874 + $0xf0] sm:$0xff]
    %v906 = vld [vmem:[%s874 + $0xf8] sm:$0xff]
    %v907 = vld [vmem:[%s874 + $0x100] sm:$0xff]
    %v908 = vld [vmem:[%s874 + $0x108] sm:$0xff]
    %v909 = vld [vmem:[%s874 + $0x110] sm:$0xff]
    %v910 = vld [vmem:[%s874 + $0x118] sm:$0xff]
    %v911 = vld [vmem:[%s874 + $0x120] sm:$0xff]
    %v912 = vld [vmem:[%s874 + $0x128] sm:$0xff]
    %v913 = vld [vmem:[%s874 + $0x130] sm:$0xff]
    %v914 = vld [vmem:[%s874 + $0x138] sm:$0xff]
    %v915 = vld [vmem:[%s874 + $0x140] sm:$0xff]
    %v916 = vld [vmem:[%s874 + $0x148] sm:$0xff]
    %v917 = vld [vmem:[%s874 + $0x150] sm:$0xff]
    %v918 = vld [vmem:[%s874 + $0x158] sm:$0xff]
    %v919 = vld [vmem:[%s874 + $0x160] sm:$0xff]
    %v920 = vld [vmem:[%s874 + $0x168] sm:$0xff]
    %v921 = vld [vmem:[%s874 + $0x170] sm:$0xff]
    %v922 = vld [vmem:[%s874 + $0x178] sm:$0xff]
    %v923 = vld [vmem:[%s874 + $0x180] sm:$0xff]
    %v924 = vld [vmem:[%s874 + $0x188] sm:$0xff]
    %v925 = vld [vmem:[%s874 + $0x190] sm:$0xff]
    %v926 = vld [vmem:[%s874 + $0x198] sm:$0xff]
    %v927 = vld [vmem:[%s874 + $0x1a0] sm:$0xff]
    %v928 = vld [vmem:[%s874 + $0x1a8] sm:$0xff]
    %v929 = vld [vmem:[%s874 + $0x1b0] sm:$0xff]
    %v930 = vld [vmem:[%s874 + $0x1b8] sm:$0xff]
    %v931 = vld [vmem:[%s874 + $0x1c0] sm:$0xff]
    %v932 = vld [vmem:[%s874 + $0x1c8] sm:$0xff]
    %v933 = vld [vmem:[%s874 + $0x1d0] sm:$0xff]
    %v934 = vld [vmem:[%s874 + $0x1d8] sm:$0xff]
    %v935 = vld [vmem:[%s874 + $0x1e0] sm:$0xff]
    %v936 = vld [vmem:[%s874 + $0x1e8] sm:$0xff]
    %v937 = vld [vmem:[%s874 + $0x1f0] sm:$0xff]
    %v938 = vld [vmem:[%s874 + $0x1f8] sm:$0xff]
    %v949 = vrot.slane %v870, 1
    %v950 = vrot.slane %v798, 1
    %v951 = vsel %vm281, %v949, %v950
    %v952 = vrot.slane %v871, 1
    %v953 = vrot.slane %v799, 1
    %v954 = vsel %vm281, %v952, %v953
    %v955 = vrot.slane %v800, 1
    %v956 = vsel %vm281, %v950, %v955
    %v957 = vrot.slane %v801, 1
    %v958 = vsel %vm281, %v953, %v957
    %v959 = vrot.slane %v802, 1
    %v960 = vsel %vm281, %v955, %v959
    %v961 = vrot.slane %v803, 1
    %v962 = vsel %vm281, %v957, %v961
    %v963 = vrot.slane %v872, 1
    %v964 = vsel %vm281, %v959, %v963
    %v965 = vrot.slane %v873, 1
    %v966 = vsel %vm281, %v961, %v965
    %977 = vmatprep.subr.mxu0 %v876
    %978 = vmatpush1.msra.mxu0 %v875
    %979 = vmatprep.subr.mxu0 %v878
    %980 = vmatpush1.msra.mxu0 %v877
    %981 = vmatprep.subr.mxu0 %v880
    %982 = vmatpush1.msra.mxu0 %v879
    %983 = vmatprep.subr.mxu0 %v882
    %984 = vmatpush1.msra.mxu0 %v881
    %985 = vmatprep.subr.mxu0 %v884
    %986 = vmatpush1.msra.mxu0 %v883
    %987 = vmatprep.subr.mxu0 %v886
    %988 = vmatpush1.msra.mxu0 %v885
    %989 = vmatprep.subr.mxu0 %v888
    %990 = vmatpush1.msra.mxu0 %v887
    %991 = vmatprep.subr.mxu0 %v890
    %992 = vmatpush1.msra.mxu0 %v889
    %993 = vmatprep.subr.mxu0 %v892
    %994 = vmatpush1.msra.mxu0 %v891
    %995 = vmatprep.subr.mxu0 %v894
    %996 = vmatpush1.msra.mxu0 %v893
    %997 = vmatprep.subr.mxu0 %v896
    %998 = vmatpush1.msra.mxu0 %v895
    %999 = vmatprep.subr.mxu0 %v898
    %1000 = vmatpush1.msra.mxu0 %v897
    %1001 = vmatprep.subr.mxu0 %v900
    %1002 = vmatpush1.msra.mxu0 %v899
    %1003 = vmatprep.subr.mxu0 %v902
    %1004 = vmatpush1.msra.mxu0 %v901
    %1005 = vmatprep.subr.mxu0 %v904
    %1006 = vmatpush1.msra.mxu0 %v903
    %1007 = vmatprep.subr.mxu0 %v906
    %1008 = vmatpush1.msra.mxu0 %v905
    %1009 = vmatprep.subr.mxu0 %v908
    %1010 = vmatpush1.msra.mxu0 %v907
    %1011 = vmatprep.subr.mxu0 %v910
    %1012 = vmatpush1.msra.mxu0 %v909
    %1013 = vmatprep.subr.mxu0 %v912
    %1014 = vmatpush1.msra.mxu0 %v911
    %1015 = vmatprep.subr.mxu0 %v914
    %1016 = vmatpush1.msra.mxu0 %v913
    %1017 = vmatprep.subr.mxu0 %v916
    %1018 = vmatpush1.msra.mxu0 %v915
    %1019 = vmatprep.subr.mxu0 %v918
    %1020 = vmatpush1.msra.mxu0 %v917
    %1021 = vmatprep.subr.mxu0 %v920
    %1022 = vmatpush1.msra.mxu0 %v919
    %1023 = vmatprep.subr.mxu0 %v922
    %1024 = vmatpush1.msra.mxu0 %v921
    %1025 = vmatprep.subr.mxu0 %v924
    %1026 = vmatpush1.msra.mxu0 %v923
    %1027 = vmatprep.subr.mxu0 %v926
    %1028 = vmatpush1.msra.mxu0 %v925
    %1029 = vmatprep.subr.mxu0 %v928
    %1030 = vmatpush1.msra.mxu0 %v927
    %1031 = vmatprep.subr.mxu0 %v930
    %1032 = vmatpush1.msra.mxu0 %v929
    %1033 = vmatprep.subr.mxu0 %v932
    %1034 = vmatpush1.msra.mxu0 %v931
    %1035 = vmatprep.subr.mxu0 %v934
    %1036 = vmatpush1.msra.mxu0 %v933
    %1037 = vmatprep.subr.mxu0 %v936
    %1038 = vmatpush1.msra.mxu0 %v935
    %1039 = vmatprep.subr.mxu0 %v938
    %1040 = vmatpush1.msra.mxu0 %v937
    %1041 = vmatprep.mubr.f32.mxu0 %v954
    %1042 = vmatmul.mubr.f32.gmra.mrb[0].mxu0 %v951
    %v1043 = vpop.f32.mrb[0].mxu0
    %v1044 = vadd.f32 0.0, %v1043
    %v1045 = vpop.f32.mrb[0].mxu0
    %v1046 = vadd.f32 0.0, %v1045
    %1047 = vmatprep.mubr.f32.mxu0 %v958
    %1048 = vmatmul.mubr.f32.gmra.mrb[0].mxu0 %v956
    %v1049 = vpop.f32.mrb[0].mxu0
    %v1050 = vadd.f32 0.0, %v1049
    %v1051 = vpop.f32.mrb[0].mxu0
    %v1052 = vadd.f32 0.0, %v1051
    %1053 = vmatprep.mubr.f32.mxu0 %v962
    %1054 = vmatmul.mubr.f32.gmra.mrb[0].mxu0 %v960
    %v1055 = vpop.f32.mrb[0].mxu0
    %v1056 = vadd.f32 0.0, %v1055
    %v1057 = vpop.f32.mrb[0].mxu0
    %v1058 = vadd.f32 0.0, %v1057
    %1059 = vmatprep.mubr.f32.mxu0 %v966
    %1060 = vmatmul.mubr.f32.gmra.mrb[0].mxu0 %v964
    %v1061 = vpop.f32.mrb[0].mxu0
    %v1062 = vadd.f32 0.0, %v1061
    %v1063 = vpop.f32.mrb[0].mxu0
    %v1064 = vadd.f32 0.0, %v1063
    %1065 = vmatprep.mubr.f32.mxu0 %v965
    %1066 = vmatmul.mubr.f32.gmra.mrb[0].mxu0 %v963
    %v1067 = vpop.f32.mrb[0].mxu0
    %v1068 = vadd.f32 0.0, %v1067
    %v1069 = vpop.f32.mrb[0].mxu0
    %v1070 = vadd.f32 0.0, %v1069
    %1071 = vdwg.mxu0
    %1072 = vmatprep.subr.mxu0 %v807
    %1073 = vmatpush1.msra.mxu0 %v806
    %1074 = vmatprep.subr.mxu0 %v809
    %1075 = vmatpush1.msra.mxu0 %v808
    %1076 = vmatprep.subr.mxu0 %v811
    %1077 = vmatpush1.msra.mxu0 %v810
    %1078 = vmatprep.subr.mxu0 %v813
    %1079 = vmatpush1.msra.mxu0 %v812
    %1080 = vmatprep.subr.mxu0 %v815
    %1081 = vmatpush1.msra.mxu0 %v814
    %1082 = vmatprep.subr.mxu0 %v817
    %1083 = vmatpush1.msra.mxu0 %v816
    %1084 = vmatprep.subr.mxu0 %v819
    %1085 = vmatpush1.msra.mxu0 %v818
    %1086 = vmatprep.subr.mxu0 %v821
    %1087 = vmatpush1.msra.mxu0 %v820
    %1088 = vmatprep.subr.mxu0 %v823
    %1089 = vmatpush1.msra.mxu0 %v822
    %1090 = vmatprep.subr.mxu0 %v825
    %1091 = vmatpush1.msra.mxu0 %v824
    %1092 = vmatprep.subr.mxu0 %v827
    %1093 = vmatpush1.msra.mxu0 %v826
    %1094 = vmatprep.subr.mxu0 %v829
    %1095 = vmatpush1.msra.mxu0 %v828
    %1096 = vmatprep.subr.mxu0 %v831
    %1097 = vmatpush1.msra.mxu0 %v830
    %1098 = vmatprep.subr.mxu0 %v833
    %1099 = vmatpush1.msra.mxu0 %v832
    %1100 = vmatprep.subr.mxu0 %v835
    %1101 = vmatpush1.msra.mxu0 %v834
    %1102 = vmatprep.subr.mxu0 %v837
    %1103 = vmatpush1.msra.mxu0 %v836
    %1104 = vmatprep.subr.mxu0 %v839
    %1105 = vmatpush1.msra.mxu0 %v838
    %1106 = vmatprep.subr.mxu0 %v841
    %1107 = vmatpush1.msra.mxu0 %v840
    %1108 = vmatprep.subr.mxu0 %v843
    %1109 = vmatpush1.msra.mxu0 %v842
    %1110 = vmatprep.subr.mxu0 %v845
    %1111 = vmatpush1.msra.mxu0 %v844
    %1112 = vmatprep.subr.mxu0 %v847
    %1113 = vmatpush1.msra.mxu0 %v846
    %1114 = vmatprep.subr.mxu0 %v849
    %1115 = vmatpush1.msra.mxu0 %v848
    %1116 = vmatprep.subr.mxu0 %v851
    %1117 = vmatpush1.msra.mxu0 %v850
    %1118 = vmatprep.subr.mxu0 %v853
    %1119 = vmatpush1.msra.mxu0 %v852
    %1120 = vmatprep.subr.mxu0 %v855
    %1121 = vmatpush1.msra.mxu0 %v854
    %1122 = vmatprep.subr.mxu0 %v857
    %1123 = vmatpush1.msra.mxu0 %v856
    %1124 = vmatprep.subr.mxu0 %v859
    %1125 = vmatpush1.msra.mxu0 %v858
    %1126 = vmatprep.subr.mxu0 %v861
    %1127 = vmatpush1.msra.mxu0 %v860
    %1128 = vmatprep.subr.mxu0 %v863
    %1129 = vmatpush1.msra.mxu0 %v862
    %1130 = vmatprep.subr.mxu0 %v865
    %1131 = vmatpush1.msra.mxu0 %v864
    %1132 = vmatprep.subr.mxu0 %v867
    %1133 = vmatpush1.msra.mxu0 %v866
    %1134 = vmatprep.subr.mxu0 %v869
    %1135 = vmatpush1.msra.mxu0 %v868
    %1136 = vmatprep.mubr.f32.mxu0 %v797
    %1137 = vmatmul.mubr.f32.gmra.mrb[0].mxu0 %v796
    %v1138 = vpop.f32.mrb[0].mxu0
    %v1139 = vadd.f32 %v1044, %v1138
    %v1140 = vpop.f32.mrb[0].mxu0
    %v1141 = vadd.f32 %v1046, %v1140
    %1142 = vmatprep.mubr.f32.mxu0 %v799
    %1143 = vmatmul.mubr.f32.gmra.mrb[0].mxu0 %v798
    %v1144 = vpop.f32.mrb[0].mxu0
    %v1145 = vadd.f32 %v1050, %v1144
    %v1146 = vpop.f32.mrb[0].mxu0
    %v1147 = vadd.f32 %v1052, %v1146
    %1148 = vmatprep.mubr.f32.mxu0 %v801
    %1149 = vmatmul.mubr.f32.gmra.mrb[0].mxu0 %v800
    %v1150 = vpop.f32.mrb[0].mxu0
    %v1151 = vadd.f32 %v1056, %v1150
    %v1152 = vpop.f32.mrb[0].mxu0
    %v1153 = vadd.f32 %v1058, %v1152
    %1154 = vmatprep.mubr.f32.mxu0 %v803
    %1155 = vmatmul.mubr.f32.gmra.mrb[0].mxu0 %v802
    %v1156 = vpop.f32.mrb[0].mxu0
    %v1157 = vadd.f32 %v1062, %v1156
    %v1158 = vpop.f32.mrb[0].mxu0
    %v1159 = vadd.f32 %v1064, %v1158
    %1160 = vmatprep.mubr.f32.mxu0 %v805
    %1161 = vmatmul.mubr.f32.gmra.mrb[0].mxu0 %v804
    %v1162 = vpop.f32.mrb[0].mxu0
    %v1163 = vadd.f32 %v1068, %v1162
    %v1164 = vpop.f32.mrb[0].mxu0
    %v1165 = vadd.f32 %v1070, %v1164
    %1166 = vdwg.mxu0
    %v1167 = vld [vmem:[#allocation3] sm:$0xfc]
    %v1168 = vld [vmem:[#allocation3 + $0x8] sm:$0xfc]
    %v1169 = vld [vmem:[#allocation3 + $0x40] sm:$0xf]
    %v1170 = vld [vmem:[#allocation3 + $0x48] sm:$0xf]
    %s1171 = scalar_lea.vmem [#allocation9], 1024
    %v1172 = vld [vmem:[%s1171] sm:$0xff]
    %v1173 = vld [vmem:[%s1171 + $0x8] sm:$0xff]
    %v1174 = vld [vmem:[%s1171 + $0x10] sm:$0xff]
    %v1175 = vld [vmem:[%s1171 + $0x18] sm:$0xff]
    %v1176 = vld [vmem:[%s1171 + $0x20] sm:$0xff]
    %v1177 = vld [vmem:[%s1171 + $0x28] sm:$0xff]
    %v1178 = vld [vmem:[%s1171 + $0x30] sm:$0xff]
    %v1179 = vld [vmem:[%s1171 + $0x38] sm:$0xff]
    %v1180 = vld [vmem:[%s1171 + $0x40] sm:$0xff]
    %v1181 = vld [vmem:[%s1171 + $0x48] sm:$0xff]
    %v1182 = vld [vmem:[%s1171 + $0x50] sm:$0xff]
    %v1183 = vld [vmem:[%s1171 + $0x58] sm:$0xff]
    %v1184 = vld [vmem:[%s1171 + $0x60] sm:$0xff]
    %v1185 = vld [vmem:[%s1171 + $0x68] sm:$0xff]
    %v1186 = vld [vmem:[%s1171 + $0x70] sm:$0xff]
    %v1187 = vld [vmem:[%s1171 + $0x78] sm:$0xff]
    %v1188 = vld [vmem:[%s1171 + $0x80] sm:$0xff]
    %v1189 = vld [vmem:[%s1171 + $0x88] sm:$0xff]
    %v1190 = vld [vmem:[%s1171 + $0x90] sm:$0xff]
    %v1191 = vld [vmem:[%s1171 + $0x98] sm:$0xff]
    %v1192 = vld [vmem:[%s1171 + $0xa0] sm:$0xff]
    %v1193 = vld [vmem:[%s1171 + $0xa8] sm:$0xff]
    %v1194 = vld [vmem:[%s1171 + $0xb0] sm:$0xff]
    %v1195 = vld [vmem:[%s1171 + $0xb8] sm:$0xff]
    %v1196 = vld [vmem:[%s1171 + $0xc0] sm:$0xff]
    %v1197 = vld [vmem:[%s1171 + $0xc8] sm:$0xff]
    %v1198 = vld [vmem:[%s1171 + $0xd0] sm:$0xff]
    %v1199 = vld [vmem:[%s1171 + $0xd8] sm:$0xff]
    %v1200 = vld [vmem:[%s1171 + $0xe0] sm:$0xff]
    %v1201 = vld [vmem:[%s1171 + $0xe8] sm:$0xff]
    %v1202 = vld [vmem:[%s1171 + $0xf0] sm:$0xff]
    %v1203 = vld [vmem:[%s1171 + $0xf8] sm:$0xff]
    %v1204 = vld [vmem:[%s1171 + $0x100] sm:$0xff]
    %v1205 = vld [vmem:[%s1171 + $0x108] sm:$0xff]
    %v1206 = vld [vmem:[%s1171 + $0x110] sm:$0xff]
    %v1207 = vld [vmem:[%s1171 + $0x118] sm:$0xff]
    %v1208 = vld [vmem:[%s1171 + $0x120] sm:$0xff]
    %v1209 = vld [vmem:[%s1171 + $0x128] sm:$0xff]
    %v1210 = vld [vmem:[%s1171 + $0x130] sm:$0xff]
    %v1211 = vld [vmem:[%s1171 + $0x138] sm:$0xff]
    %v1212 = vld [vmem:[%s1171 + $0x140] sm:$0xff]
    %v1213 = vld [vmem:[%s1171 + $0x148] sm:$0xff]
    %v1214 = vld [vmem:[%s1171 + $0x150] sm:$0xff]
    %v1215 = vld [vmem:[%s1171 + $0x158] sm:$0xff]
    %v1216 = vld [vmem:[%s1171 + $0x160] sm:$0xff]
    %v1217 = vld [vmem:[%s1171 + $0x168] sm:$0xff]
    %v1218 = vld [vmem:[%s1171 + $0x170] sm:$0xff]
    %v1219 = vld [vmem:[%s1171 + $0x178] sm:$0xff]
    %v1220 = vld [vmem:[%s1171 + $0x180] sm:$0xff]
    %v1221 = vld [vmem:[%s1171 + $0x188] sm:$0xff]
    %v1222 = vld [vmem:[%s1171 + $0x190] sm:$0xff]
    %v1223 = vld [vmem:[%s1171 + $0x198] sm:$0xff]
    %v1224 = vld [vmem:[%s1171 + $0x1a0] sm:$0xff]
    %v1225 = vld [vmem:[%s1171 + $0x1a8] sm:$0xff]
    %v1226 = vld [vmem:[%s1171 + $0x1b0] sm:$0xff]
    %v1227 = vld [vmem:[%s1171 + $0x1b8] sm:$0xff]
    %v1228 = vld [vmem:[%s1171 + $0x1c0] sm:$0xff]
    %v1229 = vld [vmem:[%s1171 + $0x1c8] sm:$0xff]
    %v1230 = vld [vmem:[%s1171 + $0x1d0] sm:$0xff]
    %v1231 = vld [vmem:[%s1171 + $0x1d8] sm:$0xff]
    %v1232 = vld [vmem:[%s1171 + $0x1e0] sm:$0xff]
    %v1233 = vld [vmem:[%s1171 + $0x1e8] sm:$0xff]
    %v1234 = vld [vmem:[%s1171 + $0x1f0] sm:$0xff]
    %v1235 = vld [vmem:[%s1171 + $0x1f8] sm:$0xff]
    %v1240 = vrot.slane %v1167, 2
    %v1241 = vrot.slane %v798, 2
    %v1242 = vsel %vm573, %v1240, %v1241
    %v1243 = vrot.slane %v1168, 2
    %v1244 = vrot.slane %v799, 2
    %v1245 = vsel %vm573, %v1243, %v1244
    %v1246 = vrot.slane %v800, 2
    %v1247 = vsel %vm573, %v1241, %v1246
    %v1248 = vrot.slane %v801, 2
    %v1249 = vsel %vm573, %v1244, %v1248
    %v1250 = vrot.slane %v802, 2
    %v1251 = vsel %vm573, %v1246, %v1250
    %v1252 = vrot.slane %v803, 2
    %v1253 = vsel %vm573, %v1248, %v1252
    %v1254 = vrot.slane %v1169, 2
    %v1255 = vsel %vm573, %v1250, %v1254
    %v1256 = vrot.slane %v1170, 2
    %v1257 = vsel %vm573, %v1252, %v1256
    %1268 = vmatprep.subr.mxu0 %v1173
    %1269 = vmatpush1.msra.mxu0 %v1172
    %1270 = vmatprep.subr.mxu0 %v1175
    %1271 = vmatpush1.msra.mxu0 %v1174
    %1272 = vmatprep.subr.mxu0 %v1177
    %1273 = vmatpush1.msra.mxu0 %v1176
    %1274 = vmatprep.subr.mxu0 %v1179
    %1275 = vmatpush1.msra.mxu0 %v1178
    %1276 = vmatprep.subr.mxu0 %v1181
    %1277 = vmatpush1.msra.mxu0 %v1180
    %1278 = vmatprep.subr.mxu0 %v1183
    %1279 = vmatpush1.msra.mxu0 %v1182
    %1280 = vmatprep.subr.mxu0 %v1185
    %1281 = vmatpush1.msra.mxu0 %v1184
    %1282 = vmatprep.subr.mxu0 %v1187
    %1283 = vmatpush1.msra.mxu0 %v1186
    %1284 = vmatprep.subr.mxu0 %v1189
    %1285 = vmatpush1.msra.mxu0 %v1188
    %1286 = vmatprep.subr.mxu0 %v1191
    %1287 = vmatpush1.msra.mxu0 %v1190
    %1288 = vmatprep.subr.mxu0 %v1193
    %1289 = vmatpush1.msra.mxu0 %v1192
    %1290 = vmatprep.subr.mxu0 %v1195
    %1291 = vmatpush1.msra.mxu0 %v1194
    %1292 = vmatprep.subr.mxu0 %v1197
    %1293 = vmatpush1.msra.mxu0 %v1196
    %1294 = vmatprep.subr.mxu0 %v1199
    %1295 = vmatpush1.msra.mxu0 %v1198
    %1296 = vmatprep.subr.mxu0 %v1201
    %1297 = vmatpush1.msra.mxu0 %v1200
    %1298 = vmatprep.subr.mxu0 %v1203
    %1299 = vmatpush1.msra.mxu0 %v1202
    %1300 = vmatprep.subr.mxu0 %v1205
    %1301 = vmatpush1.msra.mxu0 %v1204
    %1302 = vmatprep.subr.mxu0 %v1207
    %1303 = vmatpush1.msra.mxu0 %v1206
    %1304 = vmatprep.subr.mxu0 %v1209
    %1305 = vmatpush1.msra.mxu0 %v1208
    %1306 = vmatprep.subr.mxu0 %v1211
    %1307 = vmatpush1.msra.mxu0 %v1210
    %1308 = vmatprep.subr.mxu0 %v1213
    %1309 = vmatpush1.msra.mxu0 %v1212
    %1310 = vmatprep.subr.mxu0 %v1215
    %1311 = vmatpush1.msra.mxu0 %v1214
    %1312 = vmatprep.subr.mxu0 %v1217
    %1313 = vmatpush1.msra.mxu0 %v1216
    %1314 = vmatprep.subr.mxu0 %v1219
    %1315 = vmatpush1.msra.mxu0 %v1218
    %1316 = vmatprep.subr.mxu0 %v1221
    %1317 = vmatpush1.msra.mxu0 %v1220
    %1318 = vmatprep.subr.mxu0 %v1223
    %1319 = vmatpush1.msra.mxu0 %v1222
    %1320 = vmatprep.subr.mxu0 %v1225
    %1321 = vmatpush1.msra.mxu0 %v1224
    %1322 = vmatprep.subr.mxu0 %v1227
    %1323 = vmatpush1.msra.mxu0 %v1226
    %1324 = vmatprep.subr.mxu0 %v1229
    %1325 = vmatpush1.msra.mxu0 %v1228
    %1326 = vmatprep.subr.mxu0 %v1231
    %1327 = vmatpush1.msra.mxu0 %v1230
    %1328 = vmatprep.subr.mxu0 %v1233
    %1329 = vmatpush1.msra.mxu0 %v1232
    %1330 = vmatprep.subr.mxu0 %v1235
    %1331 = vmatpush1.msra.mxu0 %v1234
    %1332 = vmatprep.mubr.f32.mxu0 %v1245
    %1333 = vmatmul.mubr.f32.gmra.mrb[0].mxu0 %v1242
    %v1334 = vpop.f32.mrb[0].mxu0
    %v1335 = vadd.f32 0.0, %v1334
    %v1336 = vpop.f32.mrb[0].mxu0
    %v1337 = vadd.f32 0.0, %v1336
    %1338 = vmatprep.mubr.f32.mxu0 %v1249
    %1339 = vmatmul.mubr.f32.gmra.mrb[0].mxu0 %v1247
    %v1340 = vpop.f32.mrb[0].mxu0
    %v1341 = vadd.f32 0.0, %v1340
    %v1342 = vpop.f32.mrb[0].mxu0
    %v1343 = vadd.f32 0.0, %v1342
    %1344 = vmatprep.mubr.f32.mxu0 %v1253
    %1345 = vmatmul.mubr.f32.gmra.mrb[0].mxu0 %v1251
    %v1346 = vpop.f32.mrb[0].mxu0
    %v1347 = vadd.f32 0.0, %v1346
    %v1348 = vpop.f32.mrb[0].mxu0
    %v1349 = vadd.f32 0.0, %v1348
    %1350 = vmatprep.mubr.f32.mxu0 %v1257
    %1351 = vmatmul.mubr.f32.gmra.mrb[0].mxu0 %v1255
    %v1352 = vpop.f32.mrb[0].mxu0
    %v1353 = vadd.f32 0.0, %v1352
    %v1354 = vpop.f32.mrb[0].mxu0
    %v1355 = vadd.f32 0.0, %v1354
    %1356 = vmatprep.mubr.f32.mxu0 %v1256
    %1357 = vmatmul.mubr.f32.gmra.mrb[0].mxu0 %v1254
    %v1358 = vpop.f32.mrb[0].mxu0
    %v1359 = vadd.f32 0.0, %v1358
    %v1360 = vpop.f32.mrb[0].mxu0
    %v1361 = vadd.f32 0.0, %v1360
    %1362 = vdwg.mxu0
    %v1363 = vadd.f32 %v1139, %v1335
    %v1364 = vadd.f32 %v1141, %v1337
    %v1365 = vadd.f32 %v1145, %v1341
    %v1366 = vadd.f32 %v1147, %v1343
    %v1367 = vadd.f32 %v1151, %v1347
    %v1368 = vadd.f32 %v1153, %v1349
    %v1369 = vadd.f32 %v1157, %v1353
    %v1370 = vadd.f32 %v1159, %v1355
    %v1371 = vadd.f32 %v1163, %v1359
    %v1372 = vadd.f32 %v1165, %v1361
    %v1373 = vld [vmem:[%s4] sm:$0x3]
    %v1375 = vlaneseq
    %v1376 = vshrl.u32 %v1375, 7
    %v1377 = vsub.s32 0, %v1376
    %v1378 = vrot.slane %v1373, %v1377
    %v1379 = vlaneseq
    %v1380 = vshrl.u32 %v1379, 7
    %v1381 = vsub.s32 1, %v1380
    %v1382 = vrot.slane %v1373, %v1381
    %v1385 = vadd.f32 %v1363, %v1378
    %v1386 = vadd.f32 %v1364, %v1382
    %v1387 = vadd.f32 %v1365, %v1378
    %v1388 = vadd.f32 %v1366, %v1382
    %v1389 = vld [vmem:[#allocation4] sm:$0xff]
    %v1390 = vld [vmem:[#allocation4 + $0x8] sm:$0xff]
    %v1391 = vld [vmem:[#allocation4 + $0x10] sm:$0xff]
    %v1392 = vld [vmem:[#allocation4 + $0x18] sm:$0xff]
    %v1393 = vadd.f32 %v1385, %v1389
    %v1394 = vadd.f32 %v1386, %v1390
    %v1395 = vadd.f32 %v1387, %v1391
    %v1396 = vadd.f32 %v1388, %v1392
    %1397 = vst [vmem:[#allocation10] sm:$0xff] %v1393
    %1398 = vst [vmem:[#allocation10 + $0x8] sm:$0xff] %v1394
    %1399 = vst [vmem:[#allocation10 + $0x10] sm:$0xff] %v1395
    %1400 = vst [vmem:[#allocation10 + $0x18] sm:$0xff] %v1396
    %v1401 = vadd.f32 %v1367, %v1378
    %v1402 = vadd.f32 %v1368, %v1382
    %v1403 = vadd.f32 %v1369, %v1378
    %v1404 = vadd.f32 %v1370, %v1382
    %v1405 = vadd.f32 %v1371, %v1378
    %v1406 = vadd.f32 %v1372, %v1382
    %v1407 = vld [vmem:[%s100] sm:$0xff]
    %v1408 = vld [vmem:[%s100 + $0x8] sm:$0xff]
    %v1409 = vld [vmem:[%s100 + $0x10] sm:$0xff]
    %v1410 = vld [vmem:[%s100 + $0x18] sm:$0xff]
    %vm1415 = vcmask 1041408
    %v1416 = vrot.slane %v1407, 6
    %v1417 = vrot.slane %v1408, 6
    %v1418 = vrot.slane %v1409, 6
    %v1419 = vsel %vm1415, %v1416, %v1418
    %v1420 = vrot.slane %v1410, 6
    %v1421 = vsel %vm1415, %v1417, %v1420
    %v1428 = vadd.f32 %v1401, %v1416
    %v1429 = vadd.f32 %v1402, %v1417
    %v1430 = vadd.f32 %v1403, %v1419
    %v1431 = vadd.f32 %v1404, %v1421
    %v1432 = vadd.f32 %v1405, %v1418
    %v1433 = vadd.f32 %v1406, %v1420
    %v1440 = vrot.slane %v1428, 2
    %v1441 = vrot.slane %v1430, 2
    %v1442 = vsel %vm573, %v1440, %v1441
    %v1443 = vrot.slane %v1429, 2
    %v1444 = vrot.slane %v1431, 2
    %v1445 = vsel %vm573, %v1443, %v1444
    %v1446 = vrot.slane %v1432, 2
    %v1447 = vsel %vm573, %v1441, %v1446
    %v1448 = vrot.slane %v1433, 2
    %v1449 = vsel %vm573, %v1444, %v1448
    %s1454 = scalar_lea.vmem [#allocation10], 32
    %1455 = vst [vmem:[%s1454] sm:$0xff] %v1442
    %1456 = vst [vmem:[%s1454 + $0x8] sm:$0xff] %v1445
    %1457 = vst [vmem:[%s1454 + $0x10] sm:$0xff] %v1447
    %1458 = vst [vmem:[%s1454 + $0x18] sm:$0xff] %v1449
    // Predicated region
    $region34: #{tpu_custom_call.1} parent=1 // pred_check
      _
    $region35: #{tpu_custom_call.1} parent=1 // pred_check_branch
      %1460 = sbr.rel (0) target = $region37
    $region36: #{tpu_custom_call.1} parent=1 // pred_region
      %s1462 = ssub.s32 1024, 1024
      %1463 = vsyncadd [#allocation6], %s1462
      %s1464 = sshll.u32 [#allocation10], 4
      %s1465 = int_to_ptr.vmem [resolvable:$true] %s1464
      %1470 = dma.vmem_to_hbm [thread:$0]  %s1465, 1024, %s5, [#allocation6], 256, 256, 16
    $region37: #{tpu_custom_call.1} parent=1 // pred_fallthru
      _
    // Predicated region
    $region38: #{tpu_custom_call.1} parent=1 // pred_check
      _
    $region39: #{tpu_custom_call.1} parent=1 // pred_check_branch
      %1472 = sbr.rel (0) target = $region41
    $region40: #{tpu_custom_call.1} parent=1 // pred_region
      %1473 = dma.done [#allocation6], 1024
    $region41: #{tpu_custom_call.1} parent=1 // pred_fallthru
      _
    %1474 = vsyncpa [#allocation5], 1
    %1475 = vsyncpa [#allocation8], 1
    %1476 = vsyncpa [#allocation6], 1

// kernel: tpu_custom_call.1
$region0: #{tpu_custom_call.1}
  #allocation0 [shape = 'u32[]', space=smem, size = 0x4, offset = 0x4, fixed_abs, tag = 'smem constant byte address 0x4 - core index']
  #allocation1 [shape = 'u32[144,128]{1,0:T(1,128)}', space=vmem, size = 0x12000, scoped, tag = 'internal scratch']
  #allocation2 [shape = 'f32[36,256]{1,0:T(8,128)}', space=vmem, size = 0xa000, scoped, tag = 'scratch operand']
  #allocation3 [shape = 'f32[36,256]{1,0:T(8,128)}', space=vmem, size = 0xa000, scoped, tag = 'scratch operand']
  %s0 = inlined_call_operand.hbm [shape: f32[2,16,256], index: 0, kind: input, shape index: {}]
  %s1 = inlined_call_operand.hbm [shape: f32[3,256,256], index: 1, kind: input, shape index: {}]
  %s2 = inlined_call_operand.vmem [shape: f32[1,256], index: 2, kind: input, shape index: {}]
  %s3 = inlined_call_operand.hbm [shape: f32[3,256,256], index: 3, kind: input, shape index: {}]
  %s4 = inlined_call_operand.vmem [shape: f32[1,256], index: 4, kind: input, shape index: {}]
  %s5 = inlined_call_operand.hbm [shape: f32[2,16,256], index: 5, kind: output, shape index: {}]
  %s6 = sld [smem:[#allocation0]]
  $region42: #{tpu_custom_call.1} parent=0
    _
  %s8 = ssub.s32 1, %s6
  %s9 = scalar_select 0, %s8, %s6
  $region1: #{tpu_custom_call.1} parent=0
    #allocation4 [shape = 'u8[32768]{0}', space=vmem, size = 0x8000, scoped, tag = 'input window, operand 0, single buffered']
    #allocation5 [shape = 's32[1]{0}', space=sflag, size = 0x4, scoped, tag = 'scoped memory for tpu_custom_call.1']
    #allocation6 [shape = 's32[1]{0}', space=sflag, size = 0x4, scoped, tag = 'scoped memory for tpu_custom_call.1']
    #allocation7 [shape = 'u8[786432]{0}', space=vmem, size = 0xc0000, scoped, tag = 'input window, operand 1, single buffered']
    #allocation8 [shape = 's32[1]{0}', space=sflag, size = 0x4, scoped, tag = 'scoped memory for tpu_custom_call.1']
    #allocation9 [shape = 'u8[786432]{0}', space=vmem, size = 0xc0000, scoped, tag = 'input window, operand 3, single buffered']
    #allocation10 [shape = 'u8[32768]{0}', space=vmem, size = 0x8000, scoped, tag = 'output window, operand 0, single buffered']
    %10 = vsyncpa [#allocation5], 0
    %11 = vsyncpa [#allocation8], 0
    %12 = vsyncpa [#allocation6], 0
    // Predicated region
    $region2: #{tpu_custom_call.1} parent=1 // pred_check
      _
    $region3: #{tpu_custom_call.1} parent=1 // pred_check_branch
      %14 = sbr.rel (0) target = $region5
    $region4: #{tpu_custom_call.1} parent=1 // pred_region
      %s16 = ssub.s32 1024, 1024
      %17 = vsyncadd [#allocation5], %s16
      %s18 = sshll.u32 [#allocation4], 4
      %s19 = int_to_ptr.vmem [resolvable:$true] %s18
      %24 = dma.hbm_to_vmem [thread:$0]  %s0, 1024, %s19, [#allocation5], 256, 256, 16
    $region5: #{tpu_custom_call.1} parent=1 // pred_fallthru
      _
    // Predicated region
    $region6: #{tpu_custom_call.1} parent=1 // pred_check
      _
    $region7: #{tpu_custom_call.1} parent=1 // pred_check_branch
      %26 = sbr.rel (0) target = $region9
    $region8: #{tpu_custom_call.1} parent=1 // pred_region
      %s28 = ssub.s32 24576, 24576
      %29 = vsyncadd [#allocation8], %s28
      %s30 = sshll.u32 [#allocation7], 4
      %s31 = int_to_ptr.vmem [resolvable:$true] %s30
      %36 = dma.hbm_to_vmem [thread:$0]  %s1, 24576, %s31, [#allocation8], 256, 256, 16
    $region9: #{tpu_custom_call.1} parent=1 // pred_fallthru
      _
    // Predicated region
    $region10: #{tpu_custom_call.1} parent=1 // pred_check
      _
    $region11: #{tpu_custom_call.1} parent=1 // pred_check_branch
      %38 = sbr.rel (0) target = $region13
    $region12: #{tpu_custom_call.1} parent=1 // pred_region
      _
    $region13: #{tpu_custom_call.1} parent=1 // pred_fallthru
      _
    // Predicated region
    $region14: #{tpu_custom_call.1} parent=1 // pred_check
      _
    $region15: #{tpu_custom_call.1} parent=1 // pred_check_branch
      %40 = sbr.rel (0) target = $region17
    $region16: #{tpu_custom_call.1} parent=1 // pred_region
      %s42 = ssub.s32 24576, 24576
      %43 = vsyncadd [#allocation8], %s42
      %s44 = sshll.u32 [#allocation9], 4
      %s45 = int_to_ptr.vmem [resolvable:$true] %s44
      %50 = dma.hbm_to_vmem [thread:$0]  %s3, 24576, %s45, [#allocation8], 256, 256, 16
    $region17: #{tpu_custom_call.1} parent=1 // pred_fallthru
      _
    // Predicated region
    $region18: #{tpu_custom_call.1} parent=1 // pred_check
      _
    $region19: #{tpu_custom_call.1} parent=1 // pred_check_branch
      %52 = sbr.rel (0) target = $region21
    $region20: #{tpu_custom_call.1} parent=1 // pred_region
      _
    $region21: #{tpu_custom_call.1} parent=1 // pred_fallthru
      _
    // Predicated region
    $region22: #{tpu_custom_call.1} parent=1 // pred_check
      _
    $region23: #{tpu_custom_call.1} parent=1 // pred_check_branch
      %54 = sbr.rel (0) target = $region25
    $region24: #{tpu_custom_call.1} parent=1 // pred_region
      %55 = dma.done [#allocation5], 1024
    $region25: #{tpu_custom_call.1} parent=1 // pred_fallthru
      _
    // Predicated region
    $region26: #{tpu_custom_call.1} parent=1 // pred_check
      _
    $region27: #{tpu_custom_call.1} parent=1 // pred_check_branch
      %57 = sbr.rel (0) target = $region29
    $region28: #{tpu_custom_call.1} parent=1 // pred_region
      %58 = dma.done [#allocation8], 24576
    $region29: #{tpu_custom_call.1} parent=1 // pred_fallthru
      _
    // Predicated region
    $region30: #{tpu_custom_call.1} parent=1 // pred_check
      _
    $region31: #{tpu_custom_call.1} parent=1 // pred_check_branch
      %60 = sbr.rel (0) target = $region33
    $region32: #{tpu_custom_call.1} parent=1 // pred_region
      %61 = dma.done [#allocation8], 24576
    $region33: #{tpu_custom_call.1} parent=1 // pred_fallthru
      _
    %v62 = vlaneseq
    %vm63 = vcmp.ge.s32.totalorder %v62, 0
    %vm64 = vcmp.lt.s32.totalorder %v62, 256
    %vm65 = vmand %vm63, %vm64
    %66 = vst.msk [vmem:[#allocation2] ss:$8 sm:$0x3] %vm65, 0.0
    %67 = vst.msk [vmem:[#allocation2] ss:$8 sm:$0x0] %vm65, 0.0
    %s68 = scalar_lea.vmem [#allocation2], 67
    %69 = vst.msk [vmem:[%s68] ss:$8 sm:$0x3] %vm65, 0.0
    %70 = vst.msk [vmem:[%s68] ss:$8 sm:$0x0] %vm65, 0.0
    %71 = vst [vmem:[#allocation2 + $0x20] sm:$0x6] 0.0
    %72 = vst [vmem:[#allocation2 + $0x28] sm:$0x6] 0.0
    %v73 = vld [vmem:[#allocation4] sm:$0xff]
    %v74 = vld [vmem:[#allocation4 + $0x8] sm:$0xff]
    %v75 = vld [vmem:[#allocation4 + $0x10] sm:$0xff]
    %v76 = vld [vmem:[#allocation4 + $0x18] sm:$0xff]
    %vm81 = vcmask 1040384
    %v82 = vrot.slane %v73, 7
    %v83 = vrot.slane %v74, 7
    %v84 = vrot.slane %v75, 7
    %v85 = vsel %vm81, %v82, %v84
    %v86 = vrot.slane %v76, 7
    %v87 = vsel %vm81, %v83, %v86
    %94 = vst [vmem:[#allocation2] sm:$0xfe] %v82
    %95 = vst [vmem:[#allocation2 + $0x8] sm:$0xfe] %v83
    %96 = vst [vmem:[#allocation2 + $0x10] sm:$0xff] %v85
    %97 = vst [vmem:[#allocation2 + $0x18] sm:$0xff] %v87
    %98 = vst [vmem:[#allocation2 + $0x20] sm:$0x1] %v84
    %99 = vst [vmem:[#allocation2 + $0x28] sm:$0x1] %v86
    %s100 = scalar_lea.vmem [#allocation4], 32
    %v101 = vld [vmem:[%s100] sm:$0xff]
    %v102 = vld [vmem:[%s100 + $0x8] sm:$0xff]
    %v103 = vld [vmem:[%s100 + $0x10] sm:$0xff]
    %v104 = vld [vmem:[%s100 + $0x18] sm:$0xff]
    %vm109 = vcmask 1042432
    %v110 = vrot.slane %v101, 5
    %v111 = vrot.slane %v102, 5
    %v112 = vrot.slane %v103, 5
    %v113 = vsel %vm109, %v110, %v112
    %v114 = vrot.slane %v104, 5
    %v115 = vsel %vm109, %v111, %v114
    %122 = vst [vmem:[#allocation2 + $0x20] sm:$0xf8] %v110
    %123 = vst [vmem:[#allocation2 + $0x28] sm:$0xf8] %v111
    %124 = vst [vmem:[#allocation2 + $0x30] sm:$0xff] %v113
    %125 = vst [vmem:[#allocation2 + $0x38] sm:$0xff] %v115
    %126 = vst [vmem:[#allocation2 + $0x40] sm:$0x7] %v112
    %127 = vst [vmem:[#allocation2 + $0x48] sm:$0x7] %v114
    %v128 = vld [vmem:[#allocation2] sm:$0xff]
    %v129 = vld [vmem:[#allocation2 + $0x8] sm:$0xff]
    %v130 = vld [vmem:[#allocation2 + $0x10] sm:$0xff]
    %v131 = vld [vmem:[#allocation2 + $0x18] sm:$0xff]
    %v132 = vld [vmem:[#allocation2 + $0x20] sm:$0xff]
    %v133 = vld [vmem:[#allocation2 + $0x28] sm:$0xff]
    %v134 = vld [vmem:[#allocation2 + $0x30] sm:$0xff]
    %v135 = vld [vmem:[#allocation2 + $0x38] sm:$0xff]
    %v136 = vld [vmem:[#allocation2 + $0x40] sm:$0x3]
    %v137 = vld [vmem:[#allocation2 + $0x48] sm:$0x3]
    %v138 = vld [vmem:[#allocation7] sm:$0xff]
    %v139 = vld [vmem:[#allocation7 + $0x8] sm:$0xff]
    %v140 = vld [vmem:[#allocation7 + $0x10] sm:$0xff]
    %v141 = vld [vmem:[#allocation7 + $0x18] sm:$0xff]
    %v142 = vld [vmem:[#allocation7 + $0x20] sm:$0xff]
    %v143 = vld [vmem:[#allocation7 + $0x28] sm:$0xff]
    %v144 = vld [vmem:[#allocation7 + $0x30] sm:$0xff]
    %v145 = vld [vmem:[#allocation7 + $0x38] sm:$0xff]
    %v146 = vld [vmem:[#allocation7 + $0x40] sm:$0xff]
    %v147 = vld [vmem:[#allocation7 + $0x48] sm:$0xff]
    %v148 = vld [vmem:[#allocation7 + $0x50] sm:$0xff]
    %v149 = vld [vmem:[#allocation7 + $0x58] sm:$0xff]
    %v150 = vld [vmem:[#allocation7 + $0x60] sm:$0xff]
    %v151 = vld [vmem:[#allocation7 + $0x68] sm:$0xff]
    %v152 = vld [vmem:[#allocation7 + $0x70] sm:$0xff]
    %v153 = vld [vmem:[#allocation7 + $0x78] sm:$0xff]
    %v154 = vld [vmem:[#allocation7 + $0x80] sm:$0xff]
    %v155 = vld [vmem:[#allocation7 + $0x88] sm:$0xff]
    %v156 = vld [vmem:[#allocation7 + $0x90] sm:$0xff]
    %v157 = vld [vmem:[#allocation7 + $0x98] sm:$0xff]
    %v158 = vld [vmem:[#allocation7 + $0xa0] sm:$0xff]
    %v159 = vld [vmem:[#allocation7 + $0xa8] sm:$0xff]
    %v160 = vld [vmem:[#allocation7 + $0xb0] sm:$0xff]
    %v161 = vld [vmem:[#allocation7 + $0xb8] sm:$0xff]
    %v162 = vld [vmem:[#allocation7 + $0xc0] sm:$0xff]
    %v163 = vld [vmem:[#allocation7 + $0xc8] sm:$0xff]
    %v164 = vld [vmem:[#allocation7 + $0xd0] sm:$0xff]
    %v165 = vld [vmem:[#allocation7 + $0xd8] sm:$0xff]
    %v166 = vld [vmem:[#allocation7 + $0xe0] sm:$0xff]
    %v167 = vld [vmem:[#allocation7 + $0xe8] sm:$0xff]
    %v168 = vld [vmem:[#allocation7 + $0xf0] sm:$0xff]
    %v169 = vld [vmem:[#allocation7 + $0xf8] sm:$0xff]
    %v170 = vld [vmem:[#allocation7 + $0x100] sm:$0xff]
    %v171 = vld [vmem:[#allocation7 + $0x108] sm:$0xff]
    %v172 = vld [vmem:[#allocation7 + $0x110] sm:$0xff]
    %v173 = vld [vmem:[#allocation7 + $0x118] sm:$0xff]
    %v174 = vld [vmem:[#allocation7 + $0x120] sm:$0xff]
    %v175 = vld [vmem:[#allocation7 + $0x128] sm:$0xff]
    %v176 = vld [vmem:[#allocation7 + $0x130] sm:$0xff]
    %v177 = vld [vmem:[#allocation7 + $0x138] sm:$0xff]
    %v178 = vld [vmem:[#allocation7 + $0x140] sm:$0xff]
    %v179 = vld [vmem:[#allocation7 + $0x148] sm:$0xff]
    %v180 = vld [vmem:[#allocation7 + $0x150] sm:$0xff]
    %v181 = vld [vmem:[#allocation7 + $0x158] sm:$0xff]
    %v182 = vld [vmem:[#allocation7 + $0x160] sm:$0xff]
    %v183 = vld [vmem:[#allocation7 + $0x168] sm:$0xff]
    %v184 = vld [vmem:[#allocation7 + $0x170] sm:$0xff]
    %v185 = vld [vmem:[#allocation7 + $0x178] sm:$0xff]
    %v186 = vld [vmem:[#allocation7 + $0x180] sm:$0xff]
    %v187 = vld [vmem:[#allocation7 + $0x188] sm:$0xff]
    %v188 = vld [vmem:[#allocation7 + $0x190] sm:$0xff]
    %v189 = vld [vmem:[#allocation7 + $0x198] sm:$0xff]
    %v190 = vld [vmem:[#allocation7 + $0x1a0] sm:$0xff]
    %v191 = vld [vmem:[#allocation7 + $0x1a8] sm:$0xff]
    %v192 = vld [vmem:[#allocation7 + $0x1b0] sm:$0xff]
    %v193 = vld [vmem:[#allocation7 + $0x1b8] sm:$0xff]
    %v194 = vld [vmem:[#allocation7 + $0x1c0] sm:$0xff]
    %v195 = vld [vmem:[#allocation7 + $0x1c8] sm:$0xff]
    %v196 = vld [vmem:[#allocation7 + $0x1d0] sm:$0xff]
    %v197 = vld [vmem:[#allocation7 + $0x1d8] sm:$0xff]
    %v198 = vld [vmem:[#allocation7 + $0x1e0] sm:$0xff]
    %v199 = vld [vmem:[#allocation7 + $0x1e8] sm:$0xff]
    %v200 = vld [vmem:[#allocation7 + $0x1f0] sm:$0xff]
    %v201 = vld [vmem:[#allocation7 + $0x1f8] sm:$0xff]
    %v202 = vld [vmem:[#allocation2] sm:$0xfe]
    %v203 = vld [vmem:[#allocation2 + $0x8] sm:$0xfe]
    %v204 = vld [vmem:[#allocation2 + $0x40] sm:$0x7]
    %v205 = vld [vmem:[#allocation2 + $0x48] sm:$0x7]
    %s206 = scalar_lea.vmem [#allocation7], 512
    %v207 = vld [vmem:[%s206] sm:$0xff]
    %v208 = vld [vmem:[%s206 + $0x8] sm:$0xff]
    %v209 = vld [vmem:[%s206 + $0x10] sm:$0xff]
    %v210 = vld [vmem:[%s206 + $0x18] sm:$0xff]
    %v211 = vld [vmem:[%s206 + $0x20] sm:$0xff]
    %v212 = vld [vmem:[%s206 + $0x28] sm:$0xff]
    %v213 = vld [vmem:[%s206 + $0x30] sm:$0xff]
    %v214 = vld [vmem:[%s206 + $0x38] sm:$0xff]
    %v215 = vld [vmem:[%s206 + $0x40] sm:$0xff]
    %v216 = vld [vmem:[%s206 + $0x48] sm:$0xff]
    %v217 = vld [vmem:[%s206 + $0x50] sm:$0xff]
    %v218 = vld [vmem:[%s206 + $0x58] sm:$0xff]
    %v219 = vld [vmem:[%s206 + $0x60] sm:$0xff]
    %v220 = vld [vmem:[%s206 + $0x68] sm:$0xff]
    %v221 = vld [vmem:[%s206 + $0x70] sm:$0xff]
    %v222 = vld [vmem:[%s206 + $0x78] sm:$0xff]
    %v223 = vld [vmem:[%s206 + $0x80] sm:$0xff]
    %v224 = vld [vmem:[%s206 + $0x88] sm:$0xff]
    %v225 = vld [vmem:[%s206 + $0x90] sm:$0xff]
    %v226 = vld [vmem:[%s206 + $0x98] sm:$0xff]
    %v227 = vld [vmem:[%s206 + $0xa0] sm:$0xff]
    %v228 = vld [vmem:[%s206 + $0xa8] sm:$0xff]
    %v229 = vld [vmem:[%s206 + $0xb0] sm:$0xff]
    %v230 = vld [vmem:[%s206 + $0xb8] sm:$0xff]
    %v231 = vld [vmem:[%s206 + $0xc0] sm:$0xff]
    %v232 = vld [vmem:[%s206 + $0xc8] sm:$0xff]
    %v233 = vld [vmem:[%s206 + $0xd0] sm:$0xff]
    %v234 = vld [vmem:[%s206 + $0xd8] sm:$0xff]
    %v235 = vld [vmem:[%s206 + $0xe0] sm:$0xff]
    %v236 = vld [vmem:[%s206 + $0xe8] sm:$0xff]
    %v237 = vld [vmem:[%s206 + $0xf0] sm:$0xff]
    %v238 = vld [vmem:[%s206 + $0xf8] sm:$0xff]
    %v239 = vld [vmem:[%s206 + $0x100] sm:$0xff]
    %v240 = vld [vmem:[%s206 + $0x108] sm:$0xff]
    %v241 = vld [vmem:[%s206 + $0x110] sm:$0xff]
    %v242 = vld [vmem:[%s206 + $0x118] sm:$0xff]
    %v243 = vld [vmem:[%s206 + $0x120] sm:$0xff]
    %v244 = vld [vmem:[%s206 + $0x128] sm:$0xff]
    %v245 = vld [vmem:[%s206 + $0x130] sm:$0xff]
    %v246 = vld [vmem:[%s206 + $0x138] sm:$0xff]
    %v247 = vld [vmem:[%s206 + $0x140] sm:$0xff]
    %v248 = vld [vmem:[%s206 + $0x148] sm:$0xff]
    %v249 = vld [vmem:[%s206 + $0x150] sm:$0xff]
    %v250 = vld [vmem:[%s206 + $0x158] sm:$0xff]
    %v251 = vld [vmem:[%s206 + $0x160] sm:$0xff]
    %v252 = vld [vmem:[%s206 + $0x168] sm:$0xff]
    %v253 = vld [vmem:[%s206 + $0x170] sm:$0xff]
    %v254 = vld [vmem:[%s206 + $0x178] sm:$0xff]
    %v255 = vld [vmem:[%s206 + $0x180] sm:$0xff]
    %v256 = vld [vmem:[%s206 + $0x188] sm:$0xff]
    %v257 = vld [vmem:[%s206 + $0x190] sm:$0xff]
    %v258 = vld [vmem:[%s206 + $0x198] sm:$0xff]
    %v259 = vld [vmem:[%s206 + $0x1a0] sm:$0xff]
    %v260 = vld [vmem:[%s206 + $0x1a8] sm:$0xff]
    %v261 = vld [vmem:[%s206 + $0x1b0] sm:$0xff]
    %v262 = vld [vmem:[%s206 + $0x1b8] sm:$0xff]
    %v263 = vld [vmem:[%s206 + $0x1c0] sm:$0xff]
    %v264 = vld [vmem:[%s206 + $0x1c8] sm:$0xff]
    %v265 = vld [vmem:[%s206 + $0x1d0] sm:$0xff]
    %v266 = vld [vmem:[%s206 + $0x1d8] sm:$0xff]
    %v267 = vld [vmem:[%s206 + $0x1e0] sm:$0xff]
    %v268 = vld [vmem:[%s206 + $0x1e8] sm:$0xff]
    %v269 = vld [vmem:[%s206 + $0x1f0] sm:$0xff]
    %v270 = vld [vmem:[%s206 + $0x1f8] sm:$0xff]
    %vm281 = vcmask 1046528
    %v282 = vrot.slane %v202, 1
    %v283 = vrot.slane %v130, 1
    %v284 = vsel %vm281, %v282, %v283
    %v285 = vrot.slane %v203, 1
    %v286 = vrot.slane %v131, 1
    %v287 = vsel %vm281, %v285, %v286
    %v288 = vrot.slane %v132, 1
    %v289 = vsel %vm281, %v283, %v288
    %v290 = vrot.slane %v133, 1
    %v291 = vsel %vm281, %v286, %v290
    %v292 = vrot.slane %v134, 1
    %v293 = vsel %vm281, %v288, %v292
    %v294 = vrot.slane %v135, 1
    %v295 = vsel %vm281, %v290, %v294
    %v296 = vrot.slane %v204, 1
    %v297 = vsel %vm281, %v292, %v296
    %v298 = vrot.slane %v205, 1
    %v299 = vsel %vm281, %v294, %v298
    %310 = vmatprep.subr.mxu0 %v208
    %311 = vmatpush1.msra.mxu0 %v207
    %312 = vmatprep.subr.mxu0 %v210
    %313 = vmatpush1.msra.mxu0 %v209
    %314 = vmatprep.subr.mxu0 %v212
    %315 = vmatpush1.msra.mxu0 %v211
    %316 = vmatprep.subr.mxu0 %v214
    %317 = vmatpush1.msra.mxu0 %v213
    %318 = vmatprep.subr.mxu0 %v216
    %319 = vmatpush1.msra.mxu0 %v215
    %320 = vmatprep.subr.mxu0 %v218
    %321 = vmatpush1.msra.mxu0 %v217
    %322 = vmatprep.subr.mxu0 %v220
    %323 = vmatpush1.msra.mxu0 %v219
    %324 = vmatprep.subr.mxu0 %v222
    %325 = vmatpush1.msra.mxu0 %v221
    %326 = vmatprep.subr.mxu0 %v224
    %327 = vmatpush1.msra.mxu0 %v223
    %328 = vmatprep.subr.mxu0 %v226
    %329 = vmatpush1.msra.mxu0 %v225
    %330 = vmatprep.subr.mxu0 %v228
    %331 = vmatpush1.msra.mxu0 %v227
    %332 = vmatprep.subr.mxu0 %v230
    %333 = vmatpush1.msra.mxu0 %v229
    %334 = vmatprep.subr.mxu0 %v232
    %335 = vmatpush1.msra.mxu0 %v231
    %336 = vmatprep.subr.mxu0 %v234
    %337 = vmatpush1.msra.mxu0 %v233
    %338 = vmatprep.subr.mxu0 %v236
    %339 = vmatpush1.msra.mxu0 %v235
    %340 = vmatprep.subr.mxu0 %v238
    %341 = vmatpush1.msra.mxu0 %v237
    %342 = vmatprep.subr.mxu0 %v240
    %343 = vmatpush1.msra.mxu0 %v239
    %344 = vmatprep.subr.mxu0 %v242
    %345 = vmatpush1.msra.mxu0 %v241
    %346 = vmatprep.subr.mxu0 %v244
    %347 = vmatpush1.msra.mxu0 %v243
    %348 = vmatprep.subr.mxu0 %v246
    %349 = vmatpush1.msra.mxu0 %v245
    %350 = vmatprep.subr.mxu0 %v248
    %351 = vmatpush1.msra.mxu0 %v247
    %352 = vmatprep.subr.mxu0 %v250
    %353 = vmatpush1.msra.mxu0 %v249
    %354 = vmatprep.subr.mxu0 %v252
    %355 = vmatpush1.msra.mxu0 %v251
    %356 = vmatprep.subr.mxu0 %v254
    %357 = vmatpush1.msra.mxu0 %v253
    %358 = vmatprep.subr.mxu0 %v256
    %359 = vmatpush1.msra.mxu0 %v255
    %360 = vmatprep.subr.mxu0 %v258
    %361 = vmatpush1.msra.mxu0 %v257
    %362 = vmatprep.subr.mxu0 %v260
    %363 = vmatpush1.msra.mxu0 %v259
    %364 = vmatprep.subr.mxu0 %v262
    %365 = vmatpush1.msra.mxu0 %v261
    %366 = vmatprep.subr.mxu0 %v264
    %367 = vmatpush1.msra.mxu0 %v263
    %368 = vmatprep.subr.mxu0 %v266
    %369 = vmatpush1.msra.mxu0 %v265
    %370 = vmatprep.subr.mxu0 %v268
    %371 = vmatpush1.msra.mxu0 %v267
    %372 = vmatprep.subr.mxu0 %v270
    %373 = vmatpush1.msra.mxu0 %v269
    %374 = vmatprep.mubr.f32.mxu0 %v287
    %375 = vmatmul.mubr.f32.gmra.mrb[0].mxu0 %v284
    %v376 = vpop.f32.mrb[0].mxu0
    %v377 = vadd.f32 0.0, %v376
    %v378 = vpop.f32.mrb[0].mxu0
    %v379 = vadd.f32 0.0, %v378
    %380 = vmatprep.mubr.f32.mxu0 %v291
    %381 = vmatmul.mubr.f32.gmra.mrb[0].mxu0 %v289
    %v382 = vpop.f32.mrb[0].mxu0
    %v383 = vadd.f32 0.0, %v382
    %v384 = vpop.f32.mrb[0].mxu0
    %v385 = vadd.f32 0.0, %v384
    %386 = vmatprep.mubr.f32.mxu0 %v295
    %387 = vmatmul.mubr.f32.gmra.mrb[0].mxu0 %v293
    %v388 = vpop.f32.mrb[0].mxu0
    %v389 = vadd.f32 0.0, %v388
    %v390 = vpop.f32.mrb[0].mxu0
    %v391 = vadd.f32 0.0, %v390
    %392 = vmatprep.mubr.f32.mxu0 %v299
    %393 = vmatmul.mubr.f32.gmra.mrb[0].mxu0 %v297
    %v394 = vpop.f32.mrb[0].mxu0
    %v395 = vadd.f32 0.0, %v394
    %v396 = vpop.f32.mrb[0].mxu0
    %v397 = vadd.f32 0.0, %v396
    %398 = vmatprep.mubr.f32.mxu0 %v298
    %399 = vmatmul.mubr.f32.gmra.mrb[0].mxu0 %v296
    %v400 = vpop.f32.mrb[0].mxu0
    %v401 = vadd.f32 0.0, %v400
    %v402 = vpop.f32.mrb[0].mxu0
    %v403 = vadd.f32 0.0, %v402
    %404 = vdwg.mxu0
    %405 = vmatprep.subr.mxu0 %v139
    %406 = vmatpush1.msra.mxu0 %v138
    %407 = vmatprep.subr.mxu0 %v141
    %408 = vmatpush1.msra.mxu0 %v140
    %409 = vmatprep.subr.mxu0 %v143
    %410 = vmatpush1.msra.mxu0 %v142
    %411 = vmatprep.subr.mxu0 %v145
    %412 = vmatpush1.msra.mxu0 %v144
    %413 = vmatprep.subr.mxu0 %v147
    %414 = vmatpush1.msra.mxu0 %v146
    %415 = vmatprep.subr.mxu0 %v149
    %416 = vmatpush1.msra.mxu0 %v148
    %417 = vmatprep.subr.mxu0 %v151
    %418 = vmatpush1.msra.mxu0 %v150
    %419 = vmatprep.subr.mxu0 %v153
    %420 = vmatpush1.msra.mxu0 %v152
    %421 = vmatprep.subr.mxu0 %v155
    %422 = vmatpush1.msra.mxu0 %v154
    %423 = vmatprep.subr.mxu0 %v157
    %424 = vmatpush1.msra.mxu0 %v156
    %425 = vmatprep.subr.mxu0 %v159
    %426 = vmatpush1.msra.mxu0 %v158
    %427 = vmatprep.subr.mxu0 %v161
    %428 = vmatpush1.msra.mxu0 %v160
    %429 = vmatprep.subr.mxu0 %v163
    %430 = vmatpush1.msra.mxu0 %v162
    %431 = vmatprep.subr.mxu0 %v165
    %432 = vmatpush1.msra.mxu0 %v164
    %433 = vmatprep.subr.mxu0 %v167
    %434 = vmatpush1.msra.mxu0 %v166
    %435 = vmatprep.subr.mxu0 %v169
    %436 = vmatpush1.msra.mxu0 %v168
    %437 = vmatprep.subr.mxu0 %v171
    %438 = vmatpush1.msra.mxu0 %v170
    %439 = vmatprep.subr.mxu0 %v173
    %440 = vmatpush1.msra.mxu0 %v172
    %441 = vmatprep.subr.mxu0 %v175
    %442 = vmatpush1.msra.mxu0 %v174
    %443 = vmatprep.subr.mxu0 %v177
    %444 = vmatpush1.msra.mxu0 %v176
    %445 = vmatprep.subr.mxu0 %v179
    %446 = vmatpush1.msra.mxu0 %v178
    %447 = vmatprep.subr.mxu0 %v181
    %448 = vmatpush1.msra.mxu0 %v180
    %449 = vmatprep.subr.mxu0 %v183
    %450 = vmatpush1.msra.mxu0 %v182
    %451 = vmatprep.subr.mxu0 %v185
    %452 = vmatpush1.msra.mxu0 %v184
    %453 = vmatprep.subr.mxu0 %v187
    %454 = vmatpush1.msra.mxu0 %v186
    %455 = vmatprep.subr.mxu0 %v189
    %456 = vmatpush1.msra.mxu0 %v188
    %457 = vmatprep.subr.mxu0 %v191
    %458 = vmatpush1.msra.mxu0 %v190
    %459 = vmatprep.subr.mxu0 %v193
    %460 = vmatpush1.msra.mxu0 %v192
    %461 = vmatprep.subr.mxu0 %v195
    %462 = vmatpush1.msra.mxu0 %v194
    %463 = vmatprep.subr.mxu0 %v197
    %464 = vmatpush1.msra.mxu0 %v196
    %465 = vmatprep.subr.mxu0 %v199
    %466 = vmatpush1.msra.mxu0 %v198
    %467 = vmatprep.subr.mxu0 %v201
    %468 = vmatpush1.msra.mxu0 %v200
    %469 = vmatprep.mubr.f32.mxu0 %v129
    %470 = vmatmul.mubr.f32.gmra.mrb[0].mxu0 %v128
    %v471 = vpop.f32.mrb[0].mxu0
    %v472 = vadd.f32 %v377, %v471
    %v473 = vpop.f32.mrb[0].mxu0
    %v474 = vadd.f32 %v379, %v473
    %475 = vmatprep.mubr.f32.mxu0 %v131
    %476 = vmatmul.mubr.f32.gmra.mrb[0].mxu0 %v130
    %v477 = vpop.f32.mrb[0].mxu0
    %v478 = vadd.f32 %v383, %v477
    %v479 = vpop.f32.mrb[0].mxu0
    %v480 = vadd.f32 %v385, %v479
    %481 = vmatprep.mubr.f32.mxu0 %v133
    %482 = vmatmul.mubr.f32.gmra.mrb[0].mxu0 %v132
    %v483 = vpop.f32.mrb[0].mxu0
    %v484 = vadd.f32 %v389, %v483
    %v485 = vpop.f32.mrb[0].mxu0
    %v486 = vadd.f32 %v391, %v485
    %487 = vmatprep.mubr.f32.mxu0 %v135
    %488 = vmatmul.mubr.f32.gmra.mrb[0].mxu0 %v134
    %v489 = vpop.f32.mrb[0].mxu0
    %v490 = vadd.f32 %v395, %v489
    %v491 = vpop.f32.mrb[0].mxu0
    %v492 = vadd.f32 %v397, %v491
    %493 = vmatprep.mubr.f32.mxu0 %v137
    %494 = vmatmul.mubr.f32.gmra.mrb[0].mxu0 %v136
    %v495 = vpop.f32.mrb[0].mxu0
    %v496 = vadd.f32 %v401, %v495
    %v497 = vpop.f32.mrb[0].mxu0
    %v498 = vadd.f32 %v403, %v497
    %499 = vdwg.mxu0
    %v500 = vld [vmem:[#allocation2] sm:$0xfc]
    %v501 = vld [vmem:[#allocation2 + $0x8] sm:$0xfc]
    %v502 = vld [vmem:[#allocation2 + $0x40] sm:$0xf]
    %v503 = vld [vmem:[#allocation2 + $0x48] sm:$0xf]
    %s504 = scalar_lea.vmem [#allocation7], 1024
    %v505 = vld [vmem:[%s504] sm:$0xff]
    %v506 = vld [vmem:[%s504 + $0x8] sm:$0xff]
    %v507 = vld [vmem:[%s504 + $0x10] sm:$0xff]
    %v508 = vld [vmem:[%s504 + $0x18] sm:$0xff]
    %v509 = vld [vmem:[%s504 + $0x20] sm:$0xff]
    %v510 = vld [vmem:[%s504 + $0x28] sm:$0xff]
    %v511 = vld [vmem:[%s504 + $0x30] sm:$0xff]
    %v512 = vld [vmem:[%s504 + $0x38] sm:$0xff]
    %v513 = vld [vmem:[%s504 + $0x40] sm:$0xff]
    %v514 = vld [vmem:[%s504 + $0x48] sm:$0xff]
    %v515 = vld [vmem:[%s504 + $0x50] sm:$0xff]
    %v516 = vld [vmem:[%s504 + $0x58] sm:$0xff]
    %v517 = vld [vmem:[%s504 + $0x60] sm:$0xff]
    %v518 = vld [vmem:[%s504 + $0x68] sm:$0xff]
    %v519 = vld [vmem:[%s504 + $0x70] sm:$0xff]
    %v520 = vld [vmem:[%s504 + $0x78] sm:$0xff]
    %v521 = vld [vmem:[%s504 + $0x80] sm:$0xff]
    %v522 = vld [vmem:[%s504 + $0x88] sm:$0xff]
    %v523 = vld [vmem:[%s504 + $0x90] sm:$0xff]
    %v524 = vld [vmem:[%s504 + $0x98] sm:$0xff]
    %v525 = vld [vmem:[%s504 + $0xa0] sm:$0xff]
    %v526 = vld [vmem:[%s504 + $0xa8] sm:$0xff]
    %v527 = vld [vmem:[%s504 + $0xb0] sm:$0xff]
    %v528 = vld [vmem:[%s504 + $0xb8] sm:$0xff]
    %v529 = vld [vmem:[%s504 + $0xc0] sm:$0xff]
    %v530 = vld [vmem:[%s504 + $0xc8] sm:$0xff]
    %v531 = vld [vmem:[%s504 + $0xd0] sm:$0xff]
    %v532 = vld [vmem:[%s504 + $0xd8] sm:$0xff]
    %v533 = vld [vmem:[%s504 + $0xe0] sm:$0xff]
    %v534 = vld [vmem:[%s504 + $0xe8] sm:$0xff]
    %v535 = vld [vmem:[%s504 + $0xf0] sm:$0xff]
    %v536 = vld [vmem:[%s504 + $0xf8] sm:$0xff]
    %v537 = vld [vmem:[%s504 + $0x100] sm:$0xff]
    %v538 = vld [vmem:[%s504 + $0x108] sm:$0xff]
    %v539 = vld [vmem:[%s504 + $0x110] sm:$0xff]
    %v540 = vld [vmem:[%s504 + $0x118] sm:$0xff]
    %v541 = vld [vmem:[%s504 + $0x120] sm:$0xff]
    %v542 = vld [vmem:[%s504 + $0x128] sm:$0xff]
    %v543 = vld [vmem:[%s504 + $0x130] sm:$0xff]
    %v544 = vld [vmem:[%s504 + $0x138] sm:$0xff]
    %v545 = vld [vmem:[%s504 + $0x140] sm:$0xff]
    %v546 = vld [vmem:[%s504 + $0x148] sm:$0xff]
    %v547 = vld [vmem:[%s504 + $0x150] sm:$0xff]
    %v548 = vld [vmem:[%s504 + $0x158] sm:$0xff]
    %v549 = vld [vmem:[%s504 + $0x160] sm:$0xff]
    %v550 = vld [vmem:[%s504 + $0x168] sm:$0xff]
    %v551 = vld [vmem:[%s504 + $0x170] sm:$0xff]
    %v552 = vld [vmem:[%s504 + $0x178] sm:$0xff]
    %v553 = vld [vmem:[%s504 + $0x180] sm:$0xff]
    %v554 = vld [vmem:[%s504 + $0x188] sm:$0xff]
    %v555 = vld [vmem:[%s504 + $0x190] sm:$0xff]
    %v556 = vld [vmem:[%s504 + $0x198] sm:$0xff]
    %v557 = vld [vmem:[%s504 + $0x1a0] sm:$0xff]
    %v558 = vld [vmem:[%s504 + $0x1a8] sm:$0xff]
    %v559 = vld [vmem:[%s504 + $0x1b0] sm:$0xff]
    %v560 = vld [vmem:[%s504 + $0x1b8] sm:$0xff]
    %v561 = vld [vmem:[%s504 + $0x1c0] sm:$0xff]
    %v562 = vld [vmem:[%s504 + $0x1c8] sm:$0xff]
    %v563 = vld [vmem:[%s504 + $0x1d0] sm:$0xff]
    %v564 = vld [vmem:[%s504 + $0x1d8] sm:$0xff]
    %v565 = vld [vmem:[%s504 + $0x1e0] sm:$0xff]
    %v566 = vld [vmem:[%s504 + $0x1e8] sm:$0xff]
    %v567 = vld [vmem:[%s504 + $0x1f0] sm:$0xff]
    %v568 = vld [vmem:[%s504 + $0x1f8] sm:$0xff]
    %vm573 = vcmask 1045504
    %v574 = vrot.slane %v500, 2
    %v575 = vrot.slane %v130, 2
    %v576 = vsel %vm573, %v574, %v575
    %v577 = vrot.slane %v501, 2
    %v578 = vrot.slane %v131, 2
    %v579 = vsel %vm573, %v577, %v578
    %v580 = vrot.slane %v132, 2
    %v581 = vsel %vm573, %v575, %v580
    %v582 = vrot.slane %v133, 2
    %v583 = vsel %vm573, %v578, %v582
    %v584 = vrot.slane %v134, 2
    %v585 = vsel %vm573, %v580, %v584
    %v586 = vrot.slane %v135, 2
    %v587 = vsel %vm573, %v582, %v586
    %v588 = vrot.slane %v502, 2
    %v589 = vsel %vm573, %v584, %v588
    %v590 = vrot.slane %v503, 2
    %v591 = vsel %vm573, %v586, %v590
    %602 = vmatprep.subr.mxu0 %v506
    %603 = vmatpush1.msra.mxu0 %v505
    %604 = vmatprep.subr.mxu0 %v508
    %605 = vmatpush1.msra.mxu0 %v507
    %606 = vmatprep.subr.mxu0 %v510
    %607 = vmatpush1.msra.mxu0 %v509
    %608 = vmatprep.subr.mxu0 %v512
    %609 = vmatpush1.msra.mxu0 %v511
    %610 = vmatprep.subr.mxu0 %v514
    %611 = vmatpush1.msra.mxu0 %v513
    %612 = vmatprep.subr.mxu0 %v516
    %613 = vmatpush1.msra.mxu0 %v515
    %614 = vmatprep.subr.mxu0 %v518
    %615 = vmatpush1.msra.mxu0 %v517
    %616 = vmatprep.subr.mxu0 %v520
    %617 = vmatpush1.msra.mxu0 %v519
    %618 = vmatprep.subr.mxu0 %v522
    %619 = vmatpush1.msra.mxu0 %v521
    %620 = vmatprep.subr.mxu0 %v524
    %621 = vmatpush1.msra.mxu0 %v523
    %622 = vmatprep.subr.mxu0 %v526
    %623 = vmatpush1.msra.mxu0 %v525
    %624 = vmatprep.subr.mxu0 %v528
    %625 = vmatpush1.msra.mxu0 %v527
    %626 = vmatprep.subr.mxu0 %v530
    %627 = vmatpush1.msra.mxu0 %v529
    %628 = vmatprep.subr.mxu0 %v532
    %629 = vmatpush1.msra.mxu0 %v531
    %630 = vmatprep.subr.mxu0 %v534
    %631 = vmatpush1.msra.mxu0 %v533
    %632 = vmatprep.subr.mxu0 %v536
    %633 = vmatpush1.msra.mxu0 %v535
    %634 = vmatprep.subr.mxu0 %v538
    %635 = vmatpush1.msra.mxu0 %v537
    %636 = vmatprep.subr.mxu0 %v540
    %637 = vmatpush1.msra.mxu0 %v539
    %638 = vmatprep.subr.mxu0 %v542
    %639 = vmatpush1.msra.mxu0 %v541
    %640 = vmatprep.subr.mxu0 %v544
    %641 = vmatpush1.msra.mxu0 %v543
    %642 = vmatprep.subr.mxu0 %v546
    %643 = vmatpush1.msra.mxu0 %v545
    %644 = vmatprep.subr.mxu0 %v548
    %645 = vmatpush1.msra.mxu0 %v547
    %646 = vmatprep.subr.mxu0 %v550
    %647 = vmatpush1.msra.mxu0 %v549
    %648 = vmatprep.subr.mxu0 %v552
    %649 = vmatpush1.msra.mxu0 %v551
    %650 = vmatprep.subr.mxu0 %v554
    %651 = vmatpush1.msra.mxu0 %v553
    %652 = vmatprep.subr.mxu0 %v556
    %653 = vmatpush1.msra.mxu0 %v555
    %654 = vmatprep.subr.mxu0 %v558
    %655 = vmatpush1.msra.mxu0 %v557
    %656 = vmatprep.subr.mxu0 %v560
    %657 = vmatpush1.msra.mxu0 %v559
    %658 = vmatprep.subr.mxu0 %v562
    %659 = vmatpush1.msra.mxu0 %v561
    %660 = vmatprep.subr.mxu0 %v564
    %661 = vmatpush1.msra.mxu0 %v563
    %662 = vmatprep.subr.mxu0 %v566
    %663 = vmatpush1.msra.mxu0 %v565
    %664 = vmatprep.subr.mxu0 %v568
    %665 = vmatpush1.msra.mxu0 %v567
    %666 = vmatprep.mubr.f32.mxu0 %v579
    %667 = vmatmul.mubr.f32.gmra.mrb[0].mxu0 %v576
    %v668 = vpop.f32.mrb[0].mxu0
    %v669 = vadd.f32 0.0, %v668
    %v670 = vpop.f32.mrb[0].mxu0
    %v671 = vadd.f32 0.0, %v670
    %672 = vmatprep.mubr.f32.mxu0 %v583
    %673 = vmatmul.mubr.f32.gmra.mrb[0].mxu0 %v581
    %v674 = vpop.f32.mrb[0].mxu0
    %v675 = vadd.f32 0.0, %v674
    %v676 = vpop.f32.mrb[0].mxu0
    %v677 = vadd.f32 0.0, %v676
    %678 = vmatprep.mubr.f32.mxu0 %v587
    %679 = vmatmul.mubr.f32.gmra.mrb[0].mxu0 %v585
    %v680 = vpop.f32.mrb[0].mxu0
    %v681 = vadd.f32 0.0, %v680
    %v682 = vpop.f32.mrb[0].mxu0
    %v683 = vadd.f32 0.0, %v682
    %684 = vmatprep.mubr.f32.mxu0 %v591
    %685 = vmatmul.mubr.f32.gmra.mrb[0].mxu0 %v589
    %v686 = vpop.f32.mrb[0].mxu0
    %v687 = vadd.f32 0.0, %v686
    %v688 = vpop.f32.mrb[0].mxu0
    %v689 = vadd.f32 0.0, %v688
    %690 = vmatprep.mubr.f32.mxu0 %v590
    %691 = vmatmul.mubr.f32.gmra.mrb[0].mxu0 %v588
    %v692 = vpop.f32.mrb[0].mxu0
    %v693 = vadd.f32 0.0, %v692
    %v694 = vpop.f32.mrb[0].mxu0
    %v695 = vadd.f32 0.0, %v694
    %696 = vdwg.mxu0
    %v697 = vadd.f32 %v472, %v669
    %v698 = vadd.f32 %v474, %v671
    %v699 = vadd.f32 %v478, %v675
    %v700 = vadd.f32 %v480, %v677
    %v701 = vadd.f32 %v484, %v681
    %v702 = vadd.f32 %v486, %v683
    %v703 = vadd.f32 %v490, %v687
    %v704 = vadd.f32 %v492, %v689
    %v705 = vadd.f32 %v496, %v693
    %v706 = vadd.f32 %v498, %v695
    %v707 = vld [vmem:[%s2] sm:$0x3]
    %708 = vst.msk [vmem:[#allocation3] ss:$8 sm:$0x3] %vm65, 0.0
    %709 = vst.msk [vmem:[#allocation3] ss:$8 sm:$0x0] %vm65, 0.0
    %s710 = scalar_lea.vmem [#allocation3], 67
    %711 = vst.msk [vmem:[%s710] ss:$8 sm:$0x3] %vm65, 0.0
    %712 = vst.msk [vmem:[%s710] ss:$8 sm:$0x0] %vm65, 0.0
    %713 = vst [vmem:[#allocation3 + $0x20] sm:$0x6] 0.0
    %714 = vst [vmem:[#allocation3 + $0x28] sm:$0x6] 0.0
    %v716 = vlaneseq
    %v717 = vshrl.u32 %v716, 7
    %v718 = vsub.s32 0, %v717
    %v719 = vrot.slane %v707, %v718
    %v720 = vlaneseq
    %v721 = vshrl.u32 %v720, 7
    %v722 = vsub.s32 1, %v721
    %v723 = vrot.slane %v707, %v722
    %v726 = vadd.f32 %v697, %v719
    %v727 = vadd.f32 %v698, %v723
    %v728 = vadd.f32 %v699, %v719
    %v729 = vadd.f32 %v700, %v723
    %v730 = vmax.f32 %v726, 0.0
    %v731 = vmax.f32 %v727, 0.0
    %v732 = vmax.f32 %v728, 0.0
    %v733 = vmax.f32 %v729, 0.0
    %v738 = vrot.slane %v730, 7
    %v739 = vrot.slane %v731, 7
    %v740 = vrot.slane %v732, 7
    %v741 = vsel %vm81, %v738, %v740
    %v742 = vrot.slane %v733, 7
    %v743 = vsel %vm81, %v739, %v742
    %750 = vst [vmem:[#allocation3] sm:$0xfe] %v738
    %751 = vst [vmem:[#allocation3 + $0x8] sm:$0xfe] %v739
    %752 = vst [vmem:[#allocation3 + $0x10] sm:$0xff] %v741
    %753 = vst [vmem:[#allocation3 + $0x18] sm:$0xff] %v743
    %754 = vst [vmem:[#allocation3 + $0x20] sm:$0x1] %v740
    %755 = vst [vmem:[#allocation3 + $0x28] sm:$0x1] %v742
    %v756 = vadd.f32 %v701, %v719
    %v757 = vadd.f32 %v702, %v723
    %v758 = vadd.f32 %v703, %v719
    %v759 = vadd.f32 %v704, %v723
    %v760 = vadd.f32 %v705, %v719
    %v761 = vadd.f32 %v706, %v723
    %v762 = vmax.f32 %v756, 0.0
    %v763 = vmax.f32 %v757, 0.0
    %v764 = vmax.f32 %v758, 0.0
    %v765 = vmax.f32 %v759, 0.0
    %v766 = vmax.f32 %v760, 0.0
    %v767 = vmax.f32 %v761, 0.0
    %v774 = vrot.slane %v762, 7
    %v775 = vrot.slane %v763, 7
    %v776 = vrot.slane %v764, 7
    %v777 = vsel %vm81, %v774, %v776
    %v778 = vrot.slane %v765, 7
    %v779 = vsel %vm81, %v775, %v778
    %v780 = vrot.slane %v766, 7
    %v781 = vsel %vm81, %v776, %v780
    %v782 = vrot.slane %v767, 7
    %v783 = vsel %vm81, %v778, %v782
    %790 = vst [vmem:[#allocation3 + $0x20] sm:$0xf8] %v774
    %791 = vst [vmem:[#allocation3 + $0x28] sm:$0xf8] %v775
    %792 = vst [vmem:[#allocation3 + $0x30] sm:$0xff] %v777
    %793 = vst [vmem:[#allocation3 + $0x38] sm:$0xff] %v779
    %794 = vst [vmem:[#allocation3 + $0x40] sm:$0x7] %v781
    %795 = vst [vmem:[#allocation3 + $0x48] sm:$0x7] %v783
    %v796 = vld [vmem:[#allocation3] sm:$0xff]
    %v797 = vld [vmem:[#allocation3 + $0x8] sm:$0xff]
    %v798 = vld [vmem:[#allocation3 + $0x10] sm:$0xff]
    %v799 = vld [vmem:[#allocation3 + $0x18] sm:$0xff]
    %v800 = vld [vmem:[#allocation3 + $0x20] sm:$0xff]
    %v801 = vld [vmem:[#allocation3 + $0x28] sm:$0xff]
    %v802 = vld [vmem:[#allocation3 + $0x30] sm:$0xff]
    %v803 = vld [vmem:[#allocation3 + $0x38] sm:$0xff]
    %v804 = vld [vmem:[#allocation3 + $0x40] sm:$0x3]
    %v805 = vld [vmem:[#allocation3 + $0x48] sm:$0x3]
    %v806 = vld [vmem:[#allocation9] sm:$0xff]
    %v807 = vld [vmem:[#allocation9 + $0x8] sm:$0xff]
    %v808 = vld [vmem:[#allocation9 + $0x10] sm:$0xff]
    %v809 = vld [vmem:[#allocation9 + $0x18] sm:$0xff]
    %v810 = vld [vmem:[#allocation9 + $0x20] sm:$0xff]
    %v811 = vld [vmem:[#allocation9 + $0x28] sm:$0xff]
    %v812 = vld [vmem:[#allocation9 + $0x30] sm:$0xff]
    %v813 = vld [vmem:[#allocation9 + $0x38] sm:$0xff]
    %v814 = vld [vmem:[#allocation9 + $0x40] sm:$0xff]
    %v815 = vld [vmem:[#allocation9 + $0x48] sm:$0xff]
    %v816 = vld [vmem:[#allocation9 + $0x50] sm:$0xff]
    %v817 = vld [vmem:[#allocation9 + $0x58] sm:$0xff]
    %v818 = vld [vmem:[#allocation9 + $0x60] sm:$0xff]
    %v819 = vld [vmem:[#allocation9 + $0x68] sm:$0xff]
    %v820 = vld [vmem:[#allocation9 + $0x70] sm:$0xff]
    %v821 = vld [vmem:[#allocation9 + $0x78] sm:$0xff]
    %v822 = vld [vmem:[#allocation9 + $0x80] sm:$0xff]
    %v823 = vld [vmem:[#allocation9 + $0x88] sm:$0xff]
    %v824 = vld [vmem:[#allocation9 + $0x90] sm:$0xff]
    %v825 = vld [vmem:[#allocation9 + $0x98] sm:$0xff]
    %v826 = vld [vmem:[#allocation9 + $0xa0] sm:$0xff]
    %v827 = vld [vmem:[#allocation9 + $0xa8] sm:$0xff]
    %v828 = vld [vmem:[#allocation9 + $0xb0] sm:$0xff]
    %v829 = vld [vmem:[#allocation9 + $0xb8] sm:$0xff]
    %v830 = vld [vmem:[#allocation9 + $0xc0] sm:$0xff]
    %v831 = vld [vmem:[#allocation9 + $0xc8] sm:$0xff]
    %v832 = vld [vmem:[#allocation9 + $0xd0] sm:$0xff]
    %v833 = vld [vmem:[#allocation9 + $0xd8] sm:$0xff]
    %v834 = vld [vmem:[#allocation9 + $0xe0] sm:$0xff]
    %v835 = vld [vmem:[#allocation9 + $0xe8] sm:$0xff]
    %v836 = vld [vmem:[#allocation9 + $0xf0] sm:$0xff]
    %v837 = vld [vmem:[#allocation9 + $0xf8] sm:$0xff]
    %v838 = vld [vmem:[#allocation9 + $0x100] sm:$0xff]
    %v839 = vld [vmem:[#allocation9 + $0x108] sm:$0xff]
    %v840 = vld [vmem:[#allocation9 + $0x110] sm:$0xff]
    %v841 = vld [vmem:[#allocation9 + $0x118] sm:$0xff]
    %v842 = vld [vmem:[#allocation9 + $0x120] sm:$0xff]
    %v843 = vld [vmem:[#allocation9 + $0x128] sm:$0xff]
    %v844 = vld [vmem:[#allocation9 + $0x130] sm:$0xff]
    %v845 = vld [vmem:[#allocation9 + $0x138] sm:$0xff]
    %v846 = vld [vmem:[#allocation9 + $0x140] sm:$0xff]
    %v847 = vld [vmem:[#allocation9 + $0x148] sm:$0xff]
    %v848 = vld [vmem:[#allocation9 + $0x150] sm:$0xff]
    %v849 = vld [vmem:[#allocation9 + $0x158] sm:$0xff]
    %v850 = vld [vmem:[#allocation9 + $0x160] sm:$0xff]
    %v851 = vld [vmem:[#allocation9 + $0x168] sm:$0xff]
    %v852 = vld [vmem:[#allocation9 + $0x170] sm:$0xff]
    %v853 = vld [vmem:[#allocation9 + $0x178] sm:$0xff]
    %v854 = vld [vmem:[#allocation9 + $0x180] sm:$0xff]
    %v855 = vld [vmem:[#allocation9 + $0x188] sm:$0xff]
    %v856 = vld [vmem:[#allocation9 + $0x190] sm:$0xff]
    %v857 = vld [vmem:[#allocation9 + $0x198] sm:$0xff]
    %v858 = vld [vmem:[#allocation9 + $0x1a0] sm:$0xff]
    %v859 = vld [vmem:[#allocation9 + $0x1a8] sm:$0xff]
    %v860 = vld [vmem:[#allocation9 + $0x1b0] sm:$0xff]
    %v861 = vld [vmem:[#allocation9 + $0x1b8] sm:$0xff]
    %v862 = vld [vmem:[#allocation9 + $0x1c0] sm:$0xff]
    %v863 = vld [vmem:[#allocation9 + $0x1c8] sm:$0xff]
    %v864 = vld [vmem:[#allocation9 + $0x1d0] sm:$0xff]
    %v865 = vld [vmem:[#allocation9 + $0x1d8] sm:$0xff]
    %v866 = vld [vmem:[#allocation9 + $0x1e0] sm:$0xff]
    %v867 = vld [vmem:[#allocation9 + $0x1e8] sm:$0xff]
    %v868 = vld [vmem:[#allocation9 + $0x1f0] sm:$0xff]
    %v869 = vld [vmem:[#allocation9 + $0x1f8] sm:$0xff]
    %v870 = vld [vmem:[#allocation3] sm:$0xfe]
    %v871 = vld [vmem:[#allocation3 + $0x8] sm:$0xfe]
    %v872 = vld [vmem:[#allocation3 + $0x40] sm:$0x7]
    %v873 = vld [vmem:[#allocation3 + $0x48] sm:$0x7]
    %s874 = scalar_lea.vmem [#allocation9], 512
    %v875 = vld [vmem:[%s874] sm:$0xff]
    %v876 = vld [vmem:[%s874 + $0x8] sm:$0xff]
    %v877 = vld [vmem:[%s874 + $0x10] sm:$0xff]
    %v878 = vld [vmem:[%s874 + $0x18] sm:$0xff]
    %v879 = vld [vmem:[%s874 + $0x20] sm:$0xff]
    %v880 = vld [vmem:[%s874 + $0x28] sm:$0xff]
    %v881 = vld [vmem:[%s874 + $0x30] sm:$0xff]
    %v882 = vld [vmem:[%s874 + $0x38] sm:$0xff]
    %v883 = vld [vmem:[%s874 + $0x40] sm:$0xff]
    %v884 = vld [vmem:[%s874 + $0x48] sm:$0xff]
    %v885 = vld [vmem:[%s874 + $0x50] sm:$0xff]
    %v886 = vld [vmem:[%s874 + $0x58] sm:$0xff]
    %v887 = vld [vmem:[%s874 + $0x60] sm:$0xff]
    %v888 = vld [vmem:[%s874 + $0x68] sm:$0xff]
    %v889 = vld [vmem:[%s874 + $0x70] sm:$0xff]
    %v890 = vld [vmem:[%s874 + $0x78] sm:$0xff]
    %v891 = vld [vmem:[%s874 + $0x80] sm:$0xff]
    %v892 = vld [vmem:[%s874 + $0x88] sm:$0xff]
    %v893 = vld [vmem:[%s874 + $0x90] sm:$0xff]
    %v894 = vld [vmem:[%s874 + $0x98] sm:$0xff]
    %v895 = vld [vmem:[%s874 + $0xa0] sm:$0xff]
    %v896 = vld [vmem:[%s874 + $0xa8] sm:$0xff]
    %v897 = vld [vmem:[%s874 + $0xb0] sm:$0xff]
    %v898 = vld [vmem:[%s874 + $0xb8] sm:$0xff]
    %v899 = vld [vmem:[%s874 + $0xc0] sm:$0xff]
    %v900 = vld [vmem:[%s874 + $0xc8] sm:$0xff]
    %v901 = vld [vmem:[%s874 + $0xd0] sm:$0xff]
    %v902 = vld [vmem:[%s874 + $0xd8] sm:$0xff]
    %v903 = vld [vmem:[%s874 + $0xe0] sm:$0xff]
    %v904 = vld [vmem:[%s874 + $0xe8] sm:$0xff]
    %v905 = vld [vmem:[%s874 + $0xf0] sm:$0xff]
    %v906 = vld [vmem:[%s874 + $0xf8] sm:$0xff]
    %v907 = vld [vmem:[%s874 + $0x100] sm:$0xff]
    %v908 = vld [vmem:[%s874 + $0x108] sm:$0xff]
    %v909 = vld [vmem:[%s874 + $0x110] sm:$0xff]
    %v910 = vld [vmem:[%s874 + $0x118] sm:$0xff]
    %v911 = vld [vmem:[%s874 + $0x120] sm:$0xff]
    %v912 = vld [vmem:[%s874 + $0x128] sm:$0xff]
    %v913 = vld [vmem:[%s874 + $0x130] sm:$0xff]
    %v914 = vld [vmem:[%s874 + $0x138] sm:$0xff]
    %v915 = vld [vmem:[%s874 + $0x140] sm:$0xff]
    %v916 = vld [vmem:[%s874 + $0x148] sm:$0xff]
    %v917 = vld [vmem:[%s874 + $0x150] sm:$0xff]
    %v918 = vld [vmem:[%s874 + $0x158] sm:$0xff]
    %v919 = vld [vmem:[%s874 + $0x160] sm:$0xff]
    %v920 = vld [vmem:[%s874 + $0x168] sm:$0xff]
    %v921 = vld [vmem:[%s874 + $0x170] sm:$0xff]
    %v922 = vld [vmem:[%s874 + $0x178] sm:$0xff]
    %v923 = vld [vmem:[%s874 + $0x180] sm:$0xff]
    %v924 = vld [vmem:[%s874 + $0x188] sm:$0xff]
    %v925 = vld [vmem:[%s874 + $0x190] sm:$0xff]
    %v926 = vld [vmem:[%s874 + $0x198] sm:$0xff]
    %v927 = vld [vmem:[%s874 + $0x1a0] sm:$0xff]
    %v928 = vld [vmem:[%s874 + $0x1a8] sm:$0xff]
    %v929 = vld [vmem:[%s874 + $0x1b0] sm:$0xff]
    %v930 = vld [vmem:[%s874 + $0x1b8] sm:$0xff]
    %v931 = vld [vmem:[%s874 + $0x1c0] sm:$0xff]
    %v932 = vld [vmem:[%s874 + $0x1c8] sm:$0xff]
    %v933 = vld [vmem:[%s874 + $0x1d0] sm:$0xff]
    %v934 = vld [vmem:[%s874 + $0x1d8] sm:$0xff]
    %v935 = vld [vmem:[%s874 + $0x1e0] sm:$0xff]
    %v936 = vld [vmem:[%s874 + $0x1e8] sm:$0xff]
    %v937 = vld [vmem:[%s874 + $0x1f0] sm:$0xff]
    %v938 = vld [vmem:[%s874 + $0x1f8] sm:$0xff]
    %v949 = vrot.slane %v870, 1
    %v950 = vrot.slane %v798, 1
    %v951 = vsel %vm281, %v949, %v950
    %v952 = vrot.slane %v871, 1
    %v953 = vrot.slane %v799, 1
    %v954 = vsel %vm281, %v952, %v953
    %v955 = vrot.slane %v800, 1
    %v956 = vsel %vm281, %v950, %v955
    %v957 = vrot.slane %v801, 1
    %v958 = vsel %vm281, %v953, %v957
    %v959 = vrot.slane %v802, 1
    %v960 = vsel %vm281, %v955, %v959
    %v961 = vrot.slane %v803, 1
    %v962 = vsel %vm281, %v957, %v961
    %v963 = vrot.slane %v872, 1
    %v964 = vsel %vm281, %v959, %v963
    %v965 = vrot.slane %v873, 1
    %v966 = vsel %vm281, %v961, %v965
    %977 = vmatprep.subr.mxu0 %v876
    %978 = vmatpush1.msra.mxu0 %v875
    %979 = vmatprep.subr.mxu0 %v878
    %980 = vmatpush1.msra.mxu0 %v877
    %981 = vmatprep.subr.mxu0 %v880
    %982 = vmatpush1.msra.mxu0 %v879
    %983 = vmatprep.subr.mxu0 %v882
    %984 = vmatpush1.msra.mxu0 %v881
    %985 = vmatprep.subr.mxu0 %v884
    %986 = vmatpush1.msra.mxu0 %v883
    %987 = vmatprep.subr.mxu0 %v886
    %988 = vmatpush1.msra.mxu0 %v885
    %989 = vmatprep.subr.mxu0 %v888
    %990 = vmatpush1.msra.mxu0 %v887
    %991 = vmatprep.subr.mxu0 %v890
    %992 = vmatpush1.msra.mxu0 %v889
    %993 = vmatprep.subr.mxu0 %v892
    %994 = vmatpush1.msra.mxu0 %v891
    %995 = vmatprep.subr.mxu0 %v894
    %996 = vmatpush1.msra.mxu0 %v893
    %997 = vmatprep.subr.mxu0 %v896
    %998 = vmatpush1.msra.mxu0 %v895
    %999 = vmatprep.subr.mxu0 %v898
    %1000 = vmatpush1.msra.mxu0 %v897
    %1001 = vmatprep.subr.mxu0 %v900
    %1002 = vmatpush1.msra.mxu0 %v899
    %1003 = vmatprep.subr.mxu0 %v902
    %1004 = vmatpush1.msra.mxu0 %v901
    %1005 = vmatprep.subr.mxu0 %v904
    %1006 = vmatpush1.msra.mxu0 %v903
    %1007 = vmatprep.subr.mxu0 %v906
    %1008 = vmatpush1.msra.mxu0 %v905
    %1009 = vmatprep.subr.mxu0 %v908
    %1010 = vmatpush1.msra.mxu0 %v907
    %1011 = vmatprep.subr.mxu0 %v910
    %1012 = vmatpush1.msra.mxu0 %v909
    %1013 = vmatprep.subr.mxu0 %v912
    %1014 = vmatpush1.msra.mxu0 %v911
    %1015 = vmatprep.subr.mxu0 %v914
    %1016 = vmatpush1.msra.mxu0 %v913
    %1017 = vmatprep.subr.mxu0 %v916
    %1018 = vmatpush1.msra.mxu0 %v915
    %1019 = vmatprep.subr.mxu0 %v918
    %1020 = vmatpush1.msra.mxu0 %v917
    %1021 = vmatprep.subr.mxu0 %v920
    %1022 = vmatpush1.msra.mxu0 %v919
    %1023 = vmatprep.subr.mxu0 %v922
    %1024 = vmatpush1.msra.mxu0 %v921
    %1025 = vmatprep.subr.mxu0 %v924
    %1026 = vmatpush1.msra.mxu0 %v923
    %1027 = vmatprep.subr.mxu0 %v926
    %1028 = vmatpush1.msra.mxu0 %v925
    %1029 = vmatprep.subr.mxu0 %v928
    %1030 = vmatpush1.msra.mxu0 %v927
    %1031 = vmatprep.subr.mxu0 %v930
    %1032 = vmatpush1.msra.mxu0 %v929
    %1033 = vmatprep.subr.mxu0 %v932
    %1034 = vmatpush1.msra.mxu0 %v931
    %1035 = vmatprep.subr.mxu0 %v934
    %1036 = vmatpush1.msra.mxu0 %v933
    %1037 = vmatprep.subr.mxu0 %v936
    %1038 = vmatpush1.msra.mxu0 %v935
    %1039 = vmatprep.subr.mxu0 %v938
    %1040 = vmatpush1.msra.mxu0 %v937
    %1041 = vmatprep.mubr.f32.mxu0 %v954
    %1042 = vmatmul.mubr.f32.gmra.mrb[0].mxu0 %v951
    %v1043 = vpop.f32.mrb[0].mxu0
    %v1044 = vadd.f32 0.0, %v1043
    %v1045 = vpop.f32.mrb[0].mxu0
    %v1046 = vadd.f32 0.0, %v1045
    %1047 = vmatprep.mubr.f32.mxu0 %v958
    %1048 = vmatmul.mubr.f32.gmra.mrb[0].mxu0 %v956
    %v1049 = vpop.f32.mrb[0].mxu0
    %v1050 = vadd.f32 0.0, %v1049
    %v1051 = vpop.f32.mrb[0].mxu0
    %v1052 = vadd.f32 0.0, %v1051
    %1053 = vmatprep.mubr.f32.mxu0 %v962
    %1054 = vmatmul.mubr.f32.gmra.mrb[0].mxu0 %v960
    %v1055 = vpop.f32.mrb[0].mxu0
    %v1056 = vadd.f32 0.0, %v1055
    %v1057 = vpop.f32.mrb[0].mxu0
    %v1058 = vadd.f32 0.0, %v1057
    %1059 = vmatprep.mubr.f32.mxu0 %v966
    %1060 = vmatmul.mubr.f32.gmra.mrb[0].mxu0 %v964
    %v1061 = vpop.f32.mrb[0].mxu0
    %v1062 = vadd.f32 0.0, %v1061
    %v1063 = vpop.f32.mrb[0].mxu0
    %v1064 = vadd.f32 0.0, %v1063
    %1065 = vmatprep.mubr.f32.mxu0 %v965
    %1066 = vmatmul.mubr.f32.gmra.mrb[0].mxu0 %v963
    %v1067 = vpop.f32.mrb[0].mxu0
    %v1068 = vadd.f32 0.0, %v1067
    %v1069 = vpop.f32.mrb[0].mxu0
    %v1070 = vadd.f32 0.0, %v1069
    %1071 = vdwg.mxu0
    %1072 = vmatprep.subr.mxu0 %v807
    %1073 = vmatpush1.msra.mxu0 %v806
    %1074 = vmatprep.subr.mxu0 %v809
    %1075 = vmatpush1.msra.mxu0 %v808
    %1076 = vmatprep.subr.mxu0 %v811
    %1077 = vmatpush1.msra.mxu0 %v810
    %1078 = vmatprep.subr.mxu0 %v813
    %1079 = vmatpush1.msra.mxu0 %v812
    %1080 = vmatprep.subr.mxu0 %v815
    %1081 = vmatpush1.msra.mxu0 %v814
    %1082 = vmatprep.subr.mxu0 %v817
    %1083 = vmatpush1.msra.mxu0 %v816
    %1084 = vmatprep.subr.mxu0 %v819
    %1085 = vmatpush1.msra.mxu0 %v818
    %1086 = vmatprep.subr.mxu0 %v821
    %1087 = vmatpush1.msra.mxu0 %v820
    %1088 = vmatprep.subr.mxu0 %v823
    %1089 = vmatpush1.msra.mxu0 %v822
    %1090 = vmatprep.subr.mxu0 %v825
    %1091 = vmatpush1.msra.mxu0 %v824
    %1092 = vmatprep.subr.mxu0 %v827
    %1093 = vmatpush1.msra.mxu0 %v826
    %1094 = vmatprep.subr.mxu0 %v829
    %1095 = vmatpush1.msra.mxu0 %v828
    %1096 = vmatprep.subr.mxu0 %v831
    %1097 = vmatpush1.msra.mxu0 %v830
    %1098 = vmatprep.subr.mxu0 %v833
    %1099 = vmatpush1.msra.mxu0 %v832
    %1100 = vmatprep.subr.mxu0 %v835
    %1101 = vmatpush1.msra.mxu0 %v834
    %1102 = vmatprep.subr.mxu0 %v837
    %1103 = vmatpush1.msra.mxu0 %v836
    %1104 = vmatprep.subr.mxu0 %v839
    %1105 = vmatpush1.msra.mxu0 %v838
    %1106 = vmatprep.subr.mxu0 %v841
    %1107 = vmatpush1.msra.mxu0 %v840
    %1108 = vmatprep.subr.mxu0 %v843
    %1109 = vmatpush1.msra.mxu0 %v842
    %1110 = vmatprep.subr.mxu0 %v845
    %1111 = vmatpush1.msra.mxu0 %v844
    %1112 = vmatprep.subr.mxu0 %v847
    %1113 = vmatpush1.msra.mxu0 %v846
    %1114 = vmatprep.subr.mxu0 %v849
    %1115 = vmatpush1.msra.mxu0 %v848
    %1116 = vmatprep.subr.mxu0 %v851
    %1117 = vmatpush1.msra.mxu0 %v850
    %1118 = vmatprep.subr.mxu0 %v853
    %1119 = vmatpush1.msra.mxu0 %v852
    %1120 = vmatprep.subr.mxu0 %v855
    %1121 = vmatpush1.msra.mxu0 %v854
    %1122 = vmatprep.subr.mxu0 %v857
    %1123 = vmatpush1.msra.mxu0 %v856
    %1124 = vmatprep.subr.mxu0 %v859
    %1125 = vmatpush1.msra.mxu0 %v858
    %1126 = vmatprep.subr.mxu0 %v861
    %1127 = vmatpush1.msra.mxu0 %v860
    %1128 = vmatprep.subr.mxu0 %v863
    %1129 = vmatpush1.msra.mxu0 %v862
    %1130 = vmatprep.subr.mxu0 %v865
    %1131 = vmatpush1.msra.mxu0 %v864
    %1132 = vmatprep.subr.mxu0 %v867
    %1133 = vmatpush1.msra.mxu0 %v866
    %1134 = vmatprep.subr.mxu0 %v869
    %1135 = vmatpush1.msra.mxu0 %v868
    %1136 = vmatprep.mubr.f32.mxu0 %v797
    %1137 = vmatmul.mubr.f32.gmra.mrb[0].mxu0 %v796
    %v1138 = vpop.f32.mrb[0].mxu0
    %v1139 = vadd.f32 %v1044, %v1138
    %v1140 = vpop.f32.mrb[0].mxu0
    %v1141 = vadd.f32 %v1046, %v1140
    %1142 = vmatprep.mubr.f32.mxu0 %v799
    %1143 = vmatmul.mubr.f32.gmra.mrb[0].mxu0 %v798
    %v1144 = vpop.f32.mrb[0].mxu0
    %v1145 = vadd.f32 %v1050, %v1144
    %v1146 = vpop.f32.mrb[0].mxu0
    %v1147 = vadd.f32 %v1052, %v1146
    %1148 = vmatprep.mubr.f32.mxu0 %v801
    %1149 = vmatmul.mubr.f32.gmra.mrb[0].mxu0 %v800
    %v1150 = vpop.f32.mrb[0].mxu0
    %v1151 = vadd.f32 %v1056, %v1150
    %v1152 = vpop.f32.mrb[0].mxu0
    %v1153 = vadd.f32 %v1058, %v1152
    %1154 = vmatprep.mubr.f32.mxu0 %v803
    %1155 = vmatmul.mubr.f32.gmra.mrb[0].mxu0 %v802
    %v1156 = vpop.f32.mrb[0].mxu0
    %v1157 = vadd.f32 %v1062, %v1156
    %v1158 = vpop.f32.mrb[0].mxu0
    %v1159 = vadd.f32 %v1064, %v1158
    %1160 = vmatprep.mubr.f32.mxu0 %v805
    %1161 = vmatmul.mubr.f32.gmra.mrb[0].mxu0 %v804
    %v1162 = vpop.f32.mrb[0].mxu0
    %v1163 = vadd.f32 %v1068, %v1162
    %v1164 = vpop.f32.mrb[0].mxu0
    %v1165 = vadd.f32 %v1070, %v1164
    %1166 = vdwg.mxu0
    %v1167 = vld [vmem:[#allocation3] sm:$0xfc]
    %v1168 = vld [vmem:[#allocation3 + $0x8] sm:$0xfc]
    %v1169 = vld [vmem:[#allocation3 + $0x40] sm:$0xf]
    %v1170 = vld [vmem:[#allocation3 + $0x48] sm:$0xf]
    %s1171 = scalar_lea.vmem [#allocation9], 1024
    %v1172 = vld [vmem:[%s1171] sm:$0xff]
    %v1173 = vld [vmem:[%s1171 + $0x8] sm:$0xff]
    %v1174 = vld [vmem:[%s1171 + $0x10] sm:$0xff]
    %v1175 = vld [vmem:[%s1171 + $0x18] sm:$0xff]
    %v1176 = vld [vmem:[%s1171 + $0x20] sm:$0xff]
    %v1177 = vld [vmem:[%s1171 + $0x28] sm:$0xff]
    %v1178 = vld [vmem:[%s1171 + $0x30] sm:$0xff]
    %v1179 = vld [vmem:[%s1171 + $0x38] sm:$0xff]
    %v1180 = vld [vmem:[%s1171 + $0x40] sm:$0xff]
    %v1181 = vld [vmem:[%s1171 + $0x48] sm:$0xff]
    %v1182 = vld [vmem:[%s1171 + $0x50] sm:$0xff]
    %v1183 = vld [vmem:[%s1171 + $0x58] sm:$0xff]
    %v1184 = vld [vmem:[%s1171 + $0x60] sm:$0xff]
    %v1185 = vld [vmem:[%s1171 + $0x68] sm:$0xff]
    %v1186 = vld [vmem:[%s1171 + $0x70] sm:$0xff]
    %v1187 = vld [vmem:[%s1171 + $0x78] sm:$0xff]
    %v1188 = vld [vmem:[%s1171 + $0x80] sm:$0xff]
    %v1189 = vld [vmem:[%s1171 + $0x88] sm:$0xff]
    %v1190 = vld [vmem:[%s1171 + $0x90] sm:$0xff]
    %v1191 = vld [vmem:[%s1171 + $0x98] sm:$0xff]
    %v1192 = vld [vmem:[%s1171 + $0xa0] sm:$0xff]
    %v1193 = vld [vmem:[%s1171 + $0xa8] sm:$0xff]
    %v1194 = vld [vmem:[%s1171 + $0xb0] sm:$0xff]
    %v1195 = vld [vmem:[%s1171 + $0xb8] sm:$0xff]
    %v1196 = vld [vmem:[%s1171 + $0xc0] sm:$0xff]
    %v1197 = vld [vmem:[%s1171 + $0xc8] sm:$0xff]
    %v1198 = vld [vmem:[%s1171 + $0xd0] sm:$0xff]
    %v1199 = vld [vmem:[%s1171 + $0xd8] sm:$0xff]
    %v1200 = vld [vmem:[%s1171 + $0xe0] sm:$0xff]
    %v1201 = vld [vmem:[%s1171 + $0xe8] sm:$0xff]
    %v1202 = vld [vmem:[%s1171 + $0xf0] sm:$0xff]
    %v1203 = vld [vmem:[%s1171 + $0xf8] sm:$0xff]
    %v1204 = vld [vmem:[%s1171 + $0x100] sm:$0xff]
    %v1205 = vld [vmem:[%s1171 + $0x108] sm:$0xff]
    %v1206 = vld [vmem:[%s1171 + $0x110] sm:$0xff]
    %v1207 = vld [vmem:[%s1171 + $0x118] sm:$0xff]
    %v1208 = vld [vmem:[%s1171 + $0x120] sm:$0xff]
    %v1209 = vld [vmem:[%s1171 + $0x128] sm:$0xff]
    %v1210 = vld [vmem:[%s1171 + $0x130] sm:$0xff]
    %v1211 = vld [vmem:[%s1171 + $0x138] sm:$0xff]
    %v1212 = vld [vmem:[%s1171 + $0x140] sm:$0xff]
    %v1213 = vld [vmem:[%s1171 + $0x148] sm:$0xff]
    %v1214 = vld [vmem:[%s1171 + $0x150] sm:$0xff]
    %v1215 = vld [vmem:[%s1171 + $0x158] sm:$0xff]
    %v1216 = vld [vmem:[%s1171 + $0x160] sm:$0xff]
    %v1217 = vld [vmem:[%s1171 + $0x168] sm:$0xff]
    %v1218 = vld [vmem:[%s1171 + $0x170] sm:$0xff]
    %v1219 = vld [vmem:[%s1171 + $0x178] sm:$0xff]
    %v1220 = vld [vmem:[%s1171 + $0x180] sm:$0xff]
    %v1221 = vld [vmem:[%s1171 + $0x188] sm:$0xff]
    %v1222 = vld [vmem:[%s1171 + $0x190] sm:$0xff]
    %v1223 = vld [vmem:[%s1171 + $0x198] sm:$0xff]
    %v1224 = vld [vmem:[%s1171 + $0x1a0] sm:$0xff]
    %v1225 = vld [vmem:[%s1171 + $0x1a8] sm:$0xff]
    %v1226 = vld [vmem:[%s1171 + $0x1b0] sm:$0xff]
    %v1227 = vld [vmem:[%s1171 + $0x1b8] sm:$0xff]
    %v1228 = vld [vmem:[%s1171 + $0x1c0] sm:$0xff]
    %v1229 = vld [vmem:[%s1171 + $0x1c8] sm:$0xff]
    %v1230 = vld [vmem:[%s1171 + $0x1d0] sm:$0xff]
    %v1231 = vld [vmem:[%s1171 + $0x1d8] sm:$0xff]
    %v1232 = vld [vmem:[%s1171 + $0x1e0] sm:$0xff]
    %v1233 = vld [vmem:[%s1171 + $0x1e8] sm:$0xff]
    %v1234 = vld [vmem:[%s1171 + $0x1f0] sm:$0xff]
    %v1235 = vld [vmem:[%s1171 + $0x1f8] sm:$0xff]
    %v1240 = vrot.slane %v1167, 2
    %v1241 = vrot.slane %v798, 2
    %v1242 = vsel %vm573, %v1240, %v1241
    %v1243 = vrot.slane %v1168, 2
    %v1244 = vrot.slane %v799, 2
    %v1245 = vsel %vm573, %v1243, %v1244
    %v1246 = vrot.slane %v800, 2
    %v1247 = vsel %vm573, %v1241, %v1246
    %v1248 = vrot.slane %v801, 2
    %v1249 = vsel %vm573, %v1244, %v1248
    %v1250 = vrot.slane %v802, 2
    %v1251 = vsel %vm573, %v1246, %v1250
    %v1252 = vrot.slane %v803, 2
    %v1253 = vsel %vm573, %v1248, %v1252
    %v1254 = vrot.slane %v1169, 2
    %v1255 = vsel %vm573, %v1250, %v1254
    %v1256 = vrot.slane %v1170, 2
    %v1257 = vsel %vm573, %v1252, %v1256
    %1268 = vmatprep.subr.mxu0 %v1173
    %1269 = vmatpush1.msra.mxu0 %v1172
    %1270 = vmatprep.subr.mxu0 %v1175
    %1271 = vmatpush1.msra.mxu0 %v1174
    %1272 = vmatprep.subr.mxu0 %v1177
    %1273 = vmatpush1.msra.mxu0 %v1176
    %1274 = vmatprep.subr.mxu0 %v1179
    %1275 = vmatpush1.msra.mxu0 %v1178
    %1276 = vmatprep.subr.mxu0 %v1181
    %1277 = vmatpush1.msra.mxu0 %v1180
    %1278 = vmatprep.subr.mxu0 %v1183
    %1279 = vmatpush1.msra.mxu0 %v1182
    %1280 = vmatprep.subr.mxu0 %v1185
    %1281 = vmatpush1.msra.mxu0 %v1184
    %1282 = vmatprep.subr.mxu0 %v1187
    %1283 = vmatpush1.msra.mxu0 %v1186
    %1284 = vmatprep.subr.mxu0 %v1189
    %1285 = vmatpush1.msra.mxu0 %v1188
    %1286 = vmatprep.subr.mxu0 %v1191
    %1287 = vmatpush1.msra.mxu0 %v1190
    %1288 = vmatprep.subr.mxu0 %v1193
    %1289 = vmatpush1.msra.mxu0 %v1192
    %1290 = vmatprep.subr.mxu0 %v1195
    %1291 = vmatpush1.msra.mxu0 %v1194
    %1292 = vmatprep.subr.mxu0 %v1197
    %1293 = vmatpush1.msra.mxu0 %v1196
    %1294 = vmatprep.subr.mxu0 %v1199
    %1295 = vmatpush1.msra.mxu0 %v1198
    %1296 = vmatprep.subr.mxu0 %v1201
    %1297 = vmatpush1.msra.mxu0 %v1200
    %1298 = vmatprep.subr.mxu0 %v1203
    %1299 = vmatpush1.msra.mxu0 %v1202
    %1300 = vmatprep.subr.mxu0 %v1205
    %1301 = vmatpush1.msra.mxu0 %v1204
    %1302 = vmatprep.subr.mxu0 %v1207
    %1303 = vmatpush1.msra.mxu0 %v1206
    %1304 = vmatprep.subr.mxu0 %v1209
    %1305 = vmatpush1.msra.mxu0 %v1208
    %1306 = vmatprep.subr.mxu0 %v1211
    %1307 = vmatpush1.msra.mxu0 %v1210
    %1308 = vmatprep.subr.mxu0 %v1213
    %1309 = vmatpush1.msra.mxu0 %v1212
    %1310 = vmatprep.subr.mxu0 %v1215
    %1311 = vmatpush1.msra.mxu0 %v1214
    %1312 = vmatprep.subr.mxu0 %v1217
    %1313 = vmatpush1.msra.mxu0 %v1216
    %1314 = vmatprep.subr.mxu0 %v1219
    %1315 = vmatpush1.msra.mxu0 %v1218
    %1316 = vmatprep.subr.mxu0 %v1221
    %1317 = vmatpush1.msra.mxu0 %v1220
    %1318 = vmatprep.subr.mxu0 %v1223
    %1319 = vmatpush1.msra.mxu0 %v1222
    %1320 = vmatprep.subr.mxu0 %v1225
    %1321 = vmatpush1.msra.mxu0 %v1224
    %1322 = vmatprep.subr.mxu0 %v1227
    %1323 = vmatpush1.msra.mxu0 %v1226
    %1324 = vmatprep.subr.mxu0 %v1229
    %1325 = vmatpush1.msra.mxu0 %v1228
    %1326 = vmatprep.subr.mxu0 %v1231
    %1327 = vmatpush1.msra.mxu0 %v1230
    %1328 = vmatprep.subr.mxu0 %v1233
    %1329 = vmatpush1.msra.mxu0 %v1232
    %1330 = vmatprep.subr.mxu0 %v1235
    %1331 = vmatpush1.msra.mxu0 %v1234
    %1332 = vmatprep.mubr.f32.mxu0 %v1245
    %1333 = vmatmul.mubr.f32.gmra.mrb[0].mxu0 %v1242
    %v1334 = vpop.f32.mrb[0].mxu0
    %v1335 = vadd.f32 0.0, %v1334
    %v1336 = vpop.f32.mrb[0].mxu0
    %v1337 = vadd.f32 0.0, %v1336
    %1338 = vmatprep.mubr.f32.mxu0 %v1249
    %1339 = vmatmul.mubr.f32.gmra.mrb[0].mxu0 %v1247
    %v1340 = vpop.f32.mrb[0].mxu0
    %v1341 = vadd.f32 0.0, %v1340
    %v1342 = vpop.f32.mrb[0].mxu0
    %v1343 = vadd.f32 0.0, %v1342
    %1344 = vmatprep.mubr.f32.mxu0 %v1253
    %1345 = vmatmul.mubr.f32.gmra.mrb[0].mxu0 %v1251
    %v1346 = vpop.f32.mrb[0].mxu0
    %v1347 = vadd.f32 0.0, %v1346
    %v1348 = vpop.f32.mrb[0].mxu0
    %v1349 = vadd.f32 0.0, %v1348
    %1350 = vmatprep.mubr.f32.mxu0 %v1257
    %1351 = vmatmul.mubr.f32.gmra.mrb[0].mxu0 %v1255
    %v1352 = vpop.f32.mrb[0].mxu0
    %v1353 = vadd.f32 0.0, %v1352
    %v1354 = vpop.f32.mrb[0].mxu0
    %v1355 = vadd.f32 0.0, %v1354
    %1356 = vmatprep.mubr.f32.mxu0 %v1256
    %1357 = vmatmul.mubr.f32.gmra.mrb[0].mxu0 %v1254
    %v1358 = vpop.f32.mrb[0].mxu0
    %v1359 = vadd.f32 0.0, %v1358
    %v1360 = vpop.f32.mrb[0].mxu0
    %v1361 = vadd.f32 0.0, %v1360
    %1362 = vdwg.mxu0
    %v1363 = vadd.f32 %v1139, %v1335
    %v1364 = vadd.f32 %v1141, %v1337
    %v1365 = vadd.f32 %v1145, %v1341
    %v1366 = vadd.f32 %v1147, %v1343
    %v1367 = vadd.f32 %v1151, %v1347
    %v1368 = vadd.f32 %v1153, %v1349
    %v1369 = vadd.f32 %v1157, %v1353
    %v1370 = vadd.f32 %v1159, %v1355
    %v1371 = vadd.f32 %v1163, %v1359
    %v1372 = vadd.f32 %v1165, %v1361
    %v1373 = vld [vmem:[%s4] sm:$0x3]
    %v1375 = vlaneseq
    %v1376 = vshrl.u32 %v1375, 7
    %v1377 = vsub.s32 0, %v1376
    %v1378 = vrot.slane %v1373, %v1377
    %v1379 = vlaneseq
    %v1380 = vshrl.u32 %v1379, 7
    %v1381 = vsub.s32 1, %v1380
    %v1382 = vrot.slane %v1373, %v1381
    %v1385 = vadd.f32 %v1363, %v1378
    %v1386 = vadd.f32 %v1364, %v1382
    %v1387 = vadd.f32 %v1365, %v1378
    %v1388 = vadd.f32 %v1366, %v1382
    %v1389 = vld [vmem:[#allocation4] sm:$0xff]
    %v1390 = vld [vmem:[#allocation4 + $0x8] sm:$0xff]
    %v1391 = vld [vmem:[#allocation4 + $0x10] sm:$0xff]
    %v1392 = vld [vmem:[#allocation4 + $0x18] sm:$0xff]
    %v1393 = vadd.f32 %v1385, %v1389
    %v1394 = vadd.f32 %v1386, %v1390
    %v1395 = vadd.f32 %v1387, %v1391
    %v1396 = vadd.f32 %v1388, %v1392
    %1397 = vst [vmem:[#allocation10] sm:$0xff] %v1393
    %1398 = vst [vmem:[#allocation10 + $0x8] sm:$0xff] %v1394
    %1399 = vst [vmem:[#allocation10 + $0x10] sm:$0xff] %v1395
    %1400 = vst [vmem:[#allocation10 + $0x18] sm:$0xff] %v1396
    %v1401 = vadd.f32 %v1367, %v1378
    %v1402 = vadd.f32 %v1368, %v1382
    %v1403 = vadd.f32 %v1369, %v1378
    %v1404 = vadd.f32 %v1370, %v1382
    %v1405 = vadd.f32 %v1371, %v1378
    %v1406 = vadd.f32 %v1372, %v1382
    %v1407 = vld [vmem:[%s100] sm:$0xff]
    %v1408 = vld [vmem:[%s100 + $0x8] sm:$0xff]
    %v1409 = vld [vmem:[%s100 + $0x10] sm:$0xff]
    %v1410 = vld [vmem:[%s100 + $0x18] sm:$0xff]
    %vm1415 = vcmask 1041408
    %v1416 = vrot.slane %v1407, 6
    %v1417 = vrot.slane %v1408, 6
    %v1418 = vrot.slane %v1409, 6
    %v1419 = vsel %vm1415, %v1416, %v1418
    %v1420 = vrot.slane %v1410, 6
    %v1421 = vsel %vm1415, %v1417, %v1420
    %v1428 = vadd.f32 %v1401, %v1416
    %v1429 = vadd.f32 %v1402, %v1417
    %v1430 = vadd.f32 %v1403, %v1419
    %v1431 = vadd.f32 %v1404, %v1421
    %v1432 = vadd.f32 %v1405, %v1418
    %v1433 = vadd.f32 %v1406, %v1420
    %v1440 = vrot.slane %v1428, 2
    %v1441 = vrot.slane %v1430, 2
    %v1442 = vsel %vm573, %v1440, %v1441
    %v1443 = vrot.slane %v1429, 2
    %v1444 = vrot.slane %v1431, 2
    %v1445 = vsel %vm573, %v1443, %v1444
    %v1446 = vrot.slane %v1432, 2
    %v1447 = vsel %vm573, %v1441, %v1446
    %v1448 = vrot.slane %v1433, 2
    %v1449 = vsel %vm573, %v1444, %v1448
    %s1454 = scalar_lea.vmem [#allocation10], 32
    %1455 = vst [vmem:[%s1454] sm:$0xff] %v1442
    %1456 = vst [vmem:[%s1454 + $0x8] sm:$0xff] %v1445
    %1457 = vst [vmem:[%s1454 + $0x10] sm:$0xff] %v1447
    %1458 = vst [vmem:[%s1454 + $0x18] sm:$0xff] %v1449
    // Predicated region
    $region34: #{tpu_custom_call.1} parent=1 // pred_check
      _
    $region35: #{tpu_custom_call.1} parent=1 // pred_check_branch
      %1460 = sbr.rel (0) target = $region37
    $region36: #{tpu_custom_call.1} parent=1 // pred_region
      %s1462 = ssub.s32 1024, 1024
      %1463 = vsyncadd [#allocation6], %s1462
      %s1464 = sshll.u32 [#allocation10], 4
      %s1465 = int_to_ptr.vmem [resolvable:$true] %s1464
      %1470 = dma.vmem_to_hbm [thread:$0]  %s1465, 1024, %s5, [#allocation6], 256, 256, 16
    $region37: #{tpu_custom_call.1} parent=1 // pred_fallthru
      _
    // Predicated region
    $region38: #{tpu_custom_call.1} parent=1 // pred_check
      _
    $region39: #{tpu_custom_call.1} parent=1 // pred_check_branch
      %1472 = sbr.rel (0) target = $region41
    $region40: #{tpu_custom_call.1} parent=1 // pred_region
      %1473 = dma.done [#allocation6], 1024
    $region41: #{tpu_custom_call.1} parent=1 // pred_fallthru
      _
    %1474 = vsyncpa [#allocation5], 1
    %1475 = vsyncpa [#allocation8], 1
    %1476 = vsyncpa [#allocation6], 1

</llo_original>
